<compile_context>
chip_gen: v5e
topology: v5e:2x2
jax: 0.10.0
libtpu: 0.0.40
codegen_flags: <defaults>
</compile_context>

<pallas_src>
import functools
import math
from collections import namedtuple

import jax
import jax.numpy as jnp
from jax import lax
from jax.experimental import pallas as pl
from jax.experimental.pallas import tpu as pltpu

# ----------------------------------------------------------------------------- constants
_LANE = 128
_SUBLANE = 16                     # safe sublane multiple for bf16 / f32 row tiles
_EPS = 1e-5                       # torch.nn.LayerNorm default
COMPUTE_DTYPE = jnp.bfloat16      # MXU-native operand dtype; accumulation stays f32 in-kernel

_WEIGHT_BUFFERING = {"mode": None}   # "single" | "double"; resolved by _resolve_weight_buffering


# ----------------------------------------------------------------------------- small helpers
def _round_up(x, m):
    return ((x + m - 1) // m) * m


def _gelu(x):
    # exact erf formulation == torch.nn.GELU() default
    return 0.5 * x * (1.0 + lax.erf(x * (1.0 / math.sqrt(2.0))))


@functools.lru_cache(maxsize=None)
def _budgets():
    """(vmem_limit_bytes, row_tile_cap) per TPU generation.
    v5e/v6e: 128 MiB VMEM -> large row tiles, ~100 MiB scoped limit.
    v7x: 64 MiB VMEM/TC -> <=56 MiB limit (headroom for DMA staging), tiles <=256."""
    vmem_cap = 64 * 1024 * 1024
    try:
        info = pltpu.get_tpu_info()
        vmem_cap = int(getattr(info, "vmem_capacity_bytes", vmem_cap))
    except Exception:
        pass
    vmem_limit = min((vmem_cap * 7) // 8, 100 * 1024 * 1024)
    tm_cap = 512 if vmem_cap >= 100 * 1024 * 1024 else 256
    return int(vmem_limit), int(tm_cap)


def _pick_tm(M):
    """Row tile: as large as the generation budget allows, but sized so the grid has >=2
    'parallel' steps whenever M permits (v7x has 2 TensorCores; a (1,)-grid idles one)."""
    _, tm_cap = _budgets()
    half = _round_up(max(1, (M + 1) // 2), _SUBLANE)
    tm = max(_SUBLANE, min(tm_cap, half))
    Mp = _round_up(M, tm)
    return tm, Mp


def _resolve_weight_buffering():
    """Probe whether this Pallas build accepts pl.Buffered(1) for resident (constant-index)
    weight blocks -- halves weight VMEM.  Falls back to default double buffering otherwise."""
    if _WEIGHT_BUFFERING["mode"] is not None:
        return
    try:
        def _probe_kernel(x_ref, w_ref, o_ref):
            o_ref[...] = jnp.dot(x_ref[...], w_ref[...], preferred_element_type=jnp.float32)

        kx, kw = jax.random.split(jax.random.PRNGKey(1))
        x = jax.random.normal(kx, (32, 128), jnp.float32).astype(jnp.bfloat16)
        w = jax.random.normal(kw, (128, 128), jnp.float32).astype(jnp.bfloat16)
        y = pl.pallas_call(
            _probe_kernel,
            out_shape=jax.ShapeDtypeStruct((32, 128), jnp.float32),
            grid_spec=pltpu.PrefetchScalarGridSpec(
                num_scalar_prefetch=0,
                grid=(2,),
                in_specs=[
                    pl.BlockSpec((16, 128), lambda i: (i, 0)),
                    pl.BlockSpec((128, 128), lambda i: (0, 0), pipeline_mode=pl.Buffered(1)),
                ],
                out_specs=pl.BlockSpec((16, 128), lambda i: (i, 0)),
            ),
            compiler_params=pltpu.CompilerParams(dimension_semantics=("parallel",)),
        )(x, w)
        ref = jnp.dot(x, w, preferred_element_type=jnp.float32)
        ok = bool(jnp.allclose(y, ref, atol=1e-2, rtol=1e-2))
        _WEIGHT_BUFFERING["mode"] = "single" if ok else "double"
    except Exception:
        _WEIGHT_BUFFERING["mode"] = "double"


def _single():
    return _WEIGHT_BUFFERING["mode"] == "single"


def _resident_spec(shape, single_buffer):
    """BlockSpec for an operand whose block never changes across grid steps (weights/biases)."""
    zeros = (0,) * len(shape)
    index_map = lambda i: zeros
    if single_buffer:
        return pl.BlockSpec(shape, index_map, pipeline_mode=pl.Buffered(1))
    return pl.BlockSpec(shape, index_map)


# ----------------------------------------------------------------------------- kernels
def _ln_f32(xf, g_ref, b_ref, eps):
    mu = jnp.mean(xf, axis=-1, keepdims=True)
    xc = xf - mu
    var = jnp.mean(xc * xc, axis=-1, keepdims=True)
    y = xc * lax.rsqrt(var + eps)
    return y * g_ref[...].astype(jnp.float32) + b_ref[...].astype(jnp.float32)


def _linear_kernel(x_ref, w_ref, b_ref, o_ref):
    acc = jnp.dot(x_ref[...], w_ref[...], preferred_element_type=jnp.float32)
    acc = acc + b_ref[...].astype(jnp.float32)
    o_ref[...] = acc.astype(o_ref.dtype)


def _ln_linear_kernel(x_ref, g_ref, bn_ref, w_ref, b_ref, o_ref, *, eps):
    xf = x_ref[...].astype(jnp.float32)
    ln = _ln_f32(xf, g_ref, bn_ref, eps).astype(x_ref.dtype)
    acc = jnp.dot(ln, w_ref[...], preferred_element_type=jnp.float32)
    o_ref[...] = (acc + b_ref[...].astype(jnp.float32)).astype(o_ref.dtype)


def _ln_mlp_res_kernel(x_ref, g_ref, bn_ref, w1_ref, b1_ref, w2_ref, b2_ref, o_ref, *, eps):
    # LayerNorm -> linear1 -> GELU -> linear2 -> + residual (dropout p=0 folded away)
    x = x_ref[...]
    xf = x.astype(jnp.float32)
    ln = _ln_f32(xf, g_ref, bn_ref, eps).astype(x.dtype)
    h = jnp.dot(ln, w1_ref[...], preferred_element_type=jnp.float32)
    h = _gelu(h + b1_ref[...].astype(jnp.float32)).astype(x.dtype)
    y = jnp.dot(h, w2_ref[...], preferred_element_type=jnp.float32)
    y = y + b2_ref[...].astype(jnp.float32)
    o_ref[...] = (xf + y).astype(o_ref.dtype)


def _attn_block_kernel(x_ref, g_ref, bn_ref, wqkv_ref, wout_ref, bout_ref, o_ref,
                       *, H, dh, t_real, scale, eps):
    # whole attention sub-layer for ONE batch element:
    #   ln -> qkv -> per-head cdist attention -> merge heads -> out-proj -> + residual
    x = x_ref[0]                                                   # (Tp, D) bf16
    Tp = x.shape[0]
    wd = H * dh
    xf = x.astype(jnp.float32)
    ln = _ln_f32(xf, g_ref, bn_ref, eps).astype(x.dtype)
    # qkv weight columns are pre-permuted to (k, h, d): q|k|v blocks, each head contiguous.
    qkv = jnp.dot(ln, wqkv_ref[...], preferred_element_type=jnp.float32)   # (Tp, 3*wd) f32

    col = lax.broadcasted_iota(jnp.int32, (Tp, Tp), 1)
    key_valid = col < t_real                                        # mask padded key columns
    ones = jnp.ones((1, dh), jnp.float32)

    outs = []
    for h in range(H):                                              # H is small & static
        q = qkv[:, h * dh:(h + 1) * dh]                             # f32
        k = qkv[:, wd + h * dh:wd + (h + 1) * dh]
        v = qkv[:, 2 * wd + h * dh:2 * wd + (h + 1) * dh]
        qq = jnp.sum(q * q, axis=-1, keepdims=True)                 # (Tp, 1)
        kk = lax.dot_general(ones, k * k, (((1,), (1,)), ((), ())),
                             preferred_element_type=jnp.float32)    # (1, Tp) without transpose
        qk = lax.dot_general(q, k, (((1,), (1,)), ((), ())),
                             preferred_element_type=jnp.float32)    # (Tp, Tp) all-f32
        d2 = jnp.maximum(qq + kk - 2.0 * qk, 0.0)
        s = jnp.sqrt(d2) * scale                                    # torch.cdist(q,k,p=2)*dim**-0.5
        s = jnp.where(key_valid, s, -1e30)
        s = s - jnp.max(s, axis=-1, keepdims=True)
        p = jnp.exp(s)
        p = p * pl.reciprocal(jnp.sum(p, axis=-1, keepdims=True), approx=True)
        o_h = jnp.dot(p.astype(x.dtype), v.astype(x.dtype),
                      preferred_element_type=jnp.float32)           # (Tp, dh)
        outs.append(o_h)

    merged = jnp.concatenate(outs, axis=-1).astype(x.dtype)         # (Tp, wd) == 'b t (h d)'
    proj = jnp.dot(merged, wout_ref[...], preferred_element_type=jnp.float32)
    proj = proj + bout_ref[...].astype(jnp.float32)
    o_ref[0] = (xf + proj).astype(o_ref.dtype)                      # residual add fused


# ----------------------------------------------------------------------------- cached pallas_call builders
@functools.lru_cache(maxsize=None)
def _build_linear_call(Mp, K, N, tm, in_dtype, out_dtype, single):
    vmem_limit, _ = _budgets()
    isz = jnp.dtype(in_dtype).itemsize
    return pl.pallas_call(
        _linear_kernel,
        out_shape=jax.ShapeDtypeStruct((Mp, N), out_dtype),
        grid_spec=pltpu.PrefetchScalarGridSpec(
            num_scalar_prefetch=0,
            grid=(Mp // tm,),
            in_specs=[
                pl.BlockSpec((tm, K), lambda i: (i, 0)),
                _resident_spec((K, N), single),
                _resident_spec((1, N), single),
            ],
            out_specs=pl.BlockSpec((tm, N), lambda i: (i, 0)),
        ),
        compiler_params=pltpu.CompilerParams(
            dimension_semantics=("parallel",), vmem_limit_bytes=vmem_limit),
        cost_estimate=pl.CostEstimate(
            flops=int(2 * Mp * K * N), transcendentals=0,
            bytes_accessed=int(isz * (Mp * K + K * N + N)
                               + jnp.dtype(out_dtype).itemsize * Mp * N)),
    )


@functools.lru_cache(maxsize=None)
def _build_attn_block_call(B, Tp, D, H, dh, t_real, scale, eps, dtype, single):
    vmem_limit, _ = _budgets()
    wd = H * dh
    isz = jnp.dtype(dtype).itemsize
    flops = B * (2 * Tp * D * 3 * wd + H * (4 * Tp * Tp * dh + 10 * Tp * Tp) + 2 * Tp * wd * D)
    return pl.pallas_call(
        functools.partial(_attn_block_kernel, H=H, dh=dh, t_real=t_real, scale=scale, eps=eps),
        out_shape=jax.ShapeDtypeStruct((B, Tp, D), dtype),
        grid_spec=pltpu.PrefetchScalarGridSpec(
            num_scalar_prefetch=0,
            grid=(B,),
            in_specs=[
                pl.BlockSpec((1, Tp, D), lambda i: (i, 0, 0)),
                _resident_spec((1, D), single),
                _resident_spec((1, D), single),
                _resident_spec((D, 3 * wd), single),
                _resident_spec((wd, D), single),
                _resident_spec((1, D), single),
            ],
            out_specs=pl.BlockSpec((1, Tp, D), lambda i: (i, 0, 0)),
        ),
        compiler_params=pltpu.CompilerParams(
            dimension_semantics=("parallel",), vmem_limit_bytes=vmem_limit),
        cost_estimate=pl.CostEstimate(
            flops=int(flops), transcendentals=int(B * H * Tp * Tp + B * Tp),
            bytes_accessed=int(isz * (2 * B * Tp * D + D * 3 * wd + wd * D + 3 * D))),
    )


@functools.lru_cache(maxsize=None)
def _build_mlp_block_call(Mp, D, Hid, tm, dtype, single):
    vmem_limit, _ = _budgets()
    isz = jnp.dtype(dtype).itemsize
    # TODO(synk): if an MLP is ever wide enough that resident w1+w2 exceed the v7x VMEM budget,
    # add an 'arbitrary' hidden-dim reduction grid axis with an f32 accumulator scratch.
    return pl.pallas_call(
        functools.partial(_ln_mlp_res_kernel, eps=_EPS),
        out_shape=jax.ShapeDtypeStruct((Mp, D), dtype),
        grid_spec=pltpu.PrefetchScalarGridSpec(
            num_scalar_prefetch=0,
            grid=(Mp // tm,),
            in_specs=[
                pl.BlockSpec((tm, D), lambda i: (i, 0)),
                _resident_spec((1, D), single),
                _resident_spec((1, D), single),
                _resident_spec((D, Hid), single),
                _resident_spec((1, Hid), single),
                _resident_spec((Hid, D), single),
                _resident_spec((1, D), single),
            ],
            out_specs=pl.BlockSpec((tm, D), lambda i: (i, 0)),
        ),
        compiler_params=pltpu.CompilerParams(
            dimension_semantics=("parallel",), vmem_limit_bytes=vmem_limit),
        cost_estimate=pl.CostEstimate(
            flops=int(4 * Mp * D * Hid + 10 * Mp * D), transcendentals=int(Mp * Hid),
            bytes_accessed=int(isz * (2 * Mp * D + 2 * D * Hid + Hid + 3 * D))),
    )


@functools.lru_cache(maxsize=None)
def _build_head_call(Mp, D, N, tm, in_dtype, single):
    vmem_limit, _ = _budgets()
    return pl.pallas_call(
        functools.partial(_ln_linear_kernel, eps=_EPS),
        out_shape=jax.ShapeDtypeStruct((Mp, N), jnp.float32),
        grid_spec=pltpu.PrefetchScalarGridSpec(
            num_scalar_prefetch=0,
            grid=(Mp // tm,),
            in_specs=[
                pl.BlockSpec((tm, D), lambda i: (i, 0)),
                _resident_spec((1, D), single),
                _resident_spec((1, D), single),
                _resident_spec((D, N), single),
                _resident_spec((1, N), single),
            ],
            out_specs=pl.BlockSpec((tm, N), lambda i: (i, 0)),
        ),
        compiler_params=pltpu.CompilerParams(
            dimension_semantics=("parallel",), vmem_limit_bytes=vmem_limit),
        cost_estimate=pl.CostEstimate(
            flops=int(2 * Mp * D * N + 10 * Mp * D), transcendentals=0,
            bytes_accessed=int(jnp.dtype(in_dtype).itemsize * (Mp * D + D * N + D * 2)
                               + 4 * Mp * N)),
    )


# ----------------------------------------------------------------------------- pallas wrappers
def linear_pallas(x2d, w, b):
    M, K = x2d.shape
    N = w.shape[1]
    tm, Mp = _pick_tm(M)
    call = _build_linear_call(Mp, K, N, tm, jnp.dtype(x2d.dtype), jnp.dtype(x2d.dtype), _single())
    xp = x2d if Mp == M else jnp.pad(x2d, ((0, Mp - M), (0, 0)))
    return call(xp, w, b)[:M]


def attn_block_pallas(x, bp, cfg, t_real):
    B, Tp, D = x.shape
    ap = bp["attn"]
    call = _build_attn_block_call(B, Tp, D, cfg.num_heads, cfg.dim_head, int(t_real),
                                  float(cfg.scale), float(_EPS), jnp.dtype(x.dtype), _single())
    return call(x, bp["norm1_g"], bp["norm1_b"], ap["w_qkv"], ap["w_out"], ap["b_out"])


def mlp_block_pallas(x, bp, cfg):
    B, Tp, D = x.shape
    mp = bp["mlp"]
    Hid = mp["w1"].shape[1]
    x2 = x.reshape(B * Tp, D)
    M = B * Tp
    tm, Mp = _pick_tm(M)
    call = _build_mlp_block_call(Mp, D, Hid, tm, jnp.dtype(x.dtype), _single())
    xp = x2 if Mp == M else jnp.pad(x2, ((0, Mp - M), (0, 0)))
    return call(xp, bp["norm2_g"], bp["norm2_b"],
                mp["w1"], mp["b1"], mp["w2"], mp["b2"])[:M].reshape(B, Tp, D)


def head_pallas(cls_out, params):
    M, D = cls_out.shape
    N = params["head_w"].shape[1]
    tm, Mp = _pick_tm(M)
    call = _build_head_call(Mp, D, N, tm, jnp.dtype(cls_out.dtype), _single())
    xp = cls_out if Mp == M else jnp.pad(cls_out, ((0, Mp - M), (0, 0)))
    return call(xp, params["head_norm_g"], params["head_norm_b"],
                params["head_w"], params["head_b"])[:M]


# ----------------------------------------------------------------------------- pure-jnp reference ops
def _ln_ref(x2d, g, b, eps=_EPS):
    xf = x2d.astype(jnp.float32)
    mu = jnp.mean(xf, axis=-1, keepdims=True)
    xc = xf - mu
    var = jnp.mean(xc * xc, axis=-1, keepdims=True)
    return (xc * lax.rsqrt(var + eps)) * g.astype(jnp.float32) + b.astype(jnp.float32)


def linear_ref(x2d, w, b):
    y = jnp.dot(x2d, w, preferred_element_type=jnp.float32) + b.astype(jnp.float32)
    return y.astype(x2d.dtype)


def attn_block_ref(x, bp, cfg, t_real):
    B, Tp, D = x.shape
    ap = bp["attn"]
    H, dh, wd = cfg.num_heads, cfg.dim_head, cfg.weight_dim
    xf = x.astype(jnp.float32)
    ln = _ln_ref(x.reshape(B * Tp, D), bp["norm1_g"], bp["norm1_b"]).astype(x.dtype)
    ln = ln.reshape(B, Tp, D)
    qkv = jnp.einsum("btd,de->bte", ln, ap["w_qkv"], preferred_element_type=jnp.float32)
    qkv = qkv.reshape(B, Tp, 3, H, dh)                              # permuted columns: (k, h, d)
    q = jnp.transpose(qkv[:, :, 0], (0, 2, 1, 3))                   # (B, H, Tp, dh) f32
    k = jnp.transpose(qkv[:, :, 1], (0, 2, 1, 3))
    v = jnp.transpose(qkv[:, :, 2], (0, 2, 1, 3))
    qq = jnp.sum(q * q, axis=-1, keepdims=True)
    kk = jnp.sum(k * k, axis=-1, keepdims=True)
    qk = jnp.einsum("bhid,bhjd->bhij", q, k)
    d2 = jnp.maximum(qq + jnp.swapaxes(kk, -1, -2) - 2.0 * qk, 0.0)
    s = jnp.sqrt(d2) * cfg.scale
    mask = jnp.arange(Tp)[None, None, None, :] < t_real
    s = jnp.where(mask, s, -1e30)
    s = s - jnp.max(s, axis=-1, keepdims=True)
    p = jnp.exp(s)
    p = p / jnp.sum(p, axis=-1, keepdims=True)
    o = jnp.einsum("bhij,bhjd->bhid", p.astype(x.dtype), v.astype(x.dtype),
                   preferred_element_type=jnp.float32)
    merged = jnp.transpose(o, (0, 2, 1, 3)).reshape(B, Tp, wd).astype(x.dtype)
    proj = jnp.einsum("btw,wd->btd", merged, ap["w_out"], preferred_element_type=jnp.float32)
    proj = proj + ap["b_out"].astype(jnp.float32)
    return (xf + proj).astype(x.dtype)


def mlp_block_ref(x, bp, cfg):
    B, Tp, D = x.shape
    mp = bp["mlp"]
    x2 = x.reshape(B * Tp, D)
    xf = x2.astype(jnp.float32)
    ln = _ln_ref(x2, bp["norm2_g"], bp["norm2_b"]).astype(x.dtype)
    h = jnp.dot(ln, mp["w1"], preferred_element_type=jnp.float32) + mp["b1"].astype(jnp.float32)
    h = _gelu(h).astype(x.dtype)
    y = jnp.dot(h, mp["w2"], preferred_element_type=jnp.float32) + mp["b2"].astype(jnp.float32)
    return (xf + y).astype(x.dtype).reshape(B, Tp, D)


def head_ref(cls_out, params):
    ln = _ln_ref(cls_out, params["head_norm_g"], params["head_norm_b"]).astype(cls_out.dtype)
    y = jnp.dot(ln, params["head_w"], preferred_element_type=jnp.float32)
    return (y + params["head_b"].astype(jnp.float32)).astype(jnp.float32)


Ops = namedtuple("Ops", ["linear", "attn_block", "mlp_block", "head"])
PALLAS_OPS = Ops(linear_pallas, attn_block_pallas, mlp_block_pallas, head_pallas)
REF_OPS = Ops(linear_ref, attn_block_ref, mlp_block_ref, head_ref)


# ----------------------------------------------------------------------------- model plumbing (XLA)
def _extract_patches(img, patch, stride_h, stride_w):
    """Replicates img.unfold(2,p,sh).unfold(3,p,sw).contiguous().view(B, nh*nw, C*p*p) exactly
    (including its raw row-major reinterpretation of the (B,C,nh,nw,p,p) buffer)."""
    B, C, H, W = img.shape
    n_h = (H - patch) // stride_h + 1
    n_w = (W - patch) // stride_w + 1
    rows = (jnp.arange(n_h) * stride_h)[:, None] + jnp.arange(patch)[None, :]   # (n_h, p)
    cols = (jnp.arange(n_w) * stride_w)[:, None] + jnp.arange(patch)[None, :]   # (n_w, p)
    patches = img[:, :, rows[:, None, :, None], cols[None, :, None, :]]         # (B,C,n_h,n_w,p,p)
    return patches.reshape(B, n_h * n_w, C * patch * patch)


def _max_singular_value(w32):
    try:
        return jnp.max(jnp.linalg.svd(w32, compute_uv=False))
    except Exception:  # fallback if SVD is unsupported on this backend
        import numpy as np
        s = np.linalg.svd(np.asarray(jax.device_get(w32), dtype=np.float32), compute_uv=False)
        return jnp.asarray(s.max(), jnp.float32)


def _spectral_rescale(w, init_spect_norm):
    # TODO(synk): torch.svd-based spectral rescale has no Pallas equivalent; it runs as a plain
    # XLA/numpy op inside prepare_params (once per weight update), not in the per-forward path.
    w32 = w.astype(jnp.float32)
    s_max = _max_singular_value(w32 + 1e-4)
    return (w32 * (init_spect_norm / s_max)).astype(w.dtype)


def prepare_params(params, cfg):
    """Hoist the per-forward qkv spectral rescale out of the hot path and permute qkv columns
    from einops '(d k h)' order to '(k h d)' so q/k/v per head are contiguous slices
    (eliminates the XLA rearrange between the qkv projection and attention)."""
    new = dict(params)
    blocks = []
    for bp in params["blocks"]:
        ap = bp["attn"]
        w_eff = _spectral_rescale(ap["w_qkv"], ap["init_spect_norm"])
        w4 = w_eff.reshape(cfg.dim, cfg.dim_head, 3, cfg.num_heads)              # (D, d, k, h)
        w_perm = jnp.transpose(w4, (0, 2, 3, 1)).reshape(cfg.dim, 3 * cfg.weight_dim)
        nbp = dict(bp)
        nbp["attn"] = {"w_qkv": w_perm.astype(ap["w_qkv"].dtype),
                       "w_out": ap["w_out"], "b_out": ap["b_out"]}
        blocks.append(nbp)
    new["blocks"] = blocks
    return new


def _forward(img, params, cfg, ops):
    p = cfg.patch_size
    stride_h = (img.shape[2] - p) // 8 + 1
    stride_w = (img.shape[3] - p) // 8 + 1
    tokens = _extract_patches(img, p, stride_h, stride_w).astype(COMPUTE_DTYPE)  # (B, T, token_dim)
    B, T, token_dim = tokens.shape
    x = ops.linear(tokens.reshape(B * T, token_dim), params["proj_w"], params["proj_b"])
    x = x.reshape(B, T, cfg.dim)
    cls = jnp.broadcast_to(params["cls_token"], (B, 1, cfg.dim)).astype(x.dtype)
    x = jnp.concatenate([cls, x], axis=1)                                        # (B, T+1, dim)
    x = x + params["pos_emb"][: T + 1][None].astype(x.dtype)
    # emb_dropout(p=0) == identity
    t_real = T + 1
    Tp = _round_up(t_real, _SUBLANE)
    if Tp > t_real:                       # pad sequence once; padded key columns masked in-kernel
        x = jnp.pad(x, ((0, 0), (0, Tp - t_real), (0, 0)))
    for bp in params["blocks"]:
        x = ops.attn_block(x, bp, cfg, t_real)
        x = ops.mlp_block(x, bp, cfg)
    cls_out = x[:, 0, :]
    logits = ops.head(cls_out, params)
    return jax.nn.sigmoid(logits.astype(jnp.float32))


def discriminator_forward(img, params, cfg):
    return _forward(img, params, cfg, PALLAS_OPS)


def discriminator_reference(img, params, cfg):
    return _forward(img, params, cfg, REF_OPS)


# ----------------------------------------------------------------------------- config & params
class DiscriminatorConfig:
    def __init__(self, in_channels=3, patch_size=8, extend_size=2, dim=384, blocks=2,
                 num_heads=6, dim_head=None, mlp_ratio=4):
        self.in_channels = in_channels
        self.patch_size = patch_size + 2 * extend_size          # effective patch size
        self.token_dim = in_channels * self.patch_size ** 2
        self.dim = dim
        self.blocks = blocks
        self.num_heads = num_heads
        self.dim_head = int(dim / num_heads) if dim_head is None else dim_head
        self.weight_dim = self.num_heads * self.dim_head
        self.scale = dim ** (-0.5)
        self.mlp_hid = dim * mlp_ratio


def _linear_params(key, fan_in, fan_out, dtype, bias=True):
    kw, kb = jax.random.split(key)
    lim = 1.0 / math.sqrt(fan_in)
    w = jax.random.uniform(kw, (fan_in, fan_out), jnp.float32, -lim, lim).astype(dtype)
    if not bias:
        return w, jnp.zeros((1, fan_out), dtype)
    b = jax.random.uniform(kb, (1, fan_out), jnp.float32, -lim, lim).astype(dtype)
    return w, b


def _block_params(key, cfg, dtype):
    kq, ko, k1, k2 = jax.random.split(key, 4)
    w_qkv, _ = _linear_params(kq, cfg.dim, cfg.weight_dim * 3, dtype, bias=False)
    init_sn = _max_singular_value(w_qkv.astype(jnp.float32))      # matches torch.svd at init
    w_out, b_out = _linear_params(ko, cfg.weight_dim, cfg.dim, dtype)
    w1, b1 = _linear_params(k1, cfg.dim, cfg.mlp_hid, dtype)
    w2, b2 = _linear_params(k2, cfg.mlp_hid, cfg.dim, dtype)
    return {
        "norm1_g": jnp.ones((1, cfg.dim), dtype), "norm1_b": jnp.zeros((1, cfg.dim), dtype),
        "norm2_g": jnp.ones((1, cfg.dim), dtype), "norm2_b": jnp.zeros((1, cfg.dim), dtype),
        "attn": {"w_qkv": w_qkv, "init_spect_norm": init_sn, "w_out": w_out, "b_out": b_out},
        "mlp": {"w1": w1, "b1": b1, "w2": w2, "b2": b2},
    }


def init_discriminator_params(key, cfg, dtype=COMPUTE_DTYPE):
    ks = jax.random.split(key, 4 + cfg.blocks)
    proj_w, proj_b = _linear_params(ks[0], cfg.token_dim, cfg.dim, dtype)
    cls_token = jax.random.normal(ks[1], (1, 1, cfg.dim), jnp.float32).astype(dtype)
    pos_emb = jax.random.normal(ks[2], (cfg.token_dim + 1, cfg.dim), jnp.float32).astype(dtype)
    head_w, head_b = _linear_params(ks[3], cfg.dim, 1, dtype)
    blocks = [_block_params(k, cfg, dtype) for k in ks[4:]]
    return {"proj_w": proj_w, "proj_b": proj_b, "cls_token": cls_token, "pos_emb": pos_emb,
            "blocks": blocks,
            "head_norm_g": jnp.ones((1, cfg.dim), dtype),
            "head_norm_b": jnp.zeros((1, cfg.dim), dtype),
            "head_w": head_w, "head_b": head_b}


# ----------------------------------------------------------------------------- main
if __name__ == "__main__":
    # small but structurally faithful config: patch=4+2*2=8, 16x16 image -> 25 tokens, dim=128
    cfg = DiscriminatorConfig(in_channels=3, patch_size=4, extend_size=2,
                              dim=128, blocks=2, num_heads=4)
    key = jax.random.PRNGKey(0)
    k_img, k_par = jax.random.split(key)
    img = jax.random.normal(k_img, (2, 3, 16, 16), jnp.float32)

    params = init_discriminator_params(k_par, cfg)
    params = prepare_params(params, cfg)     # spectral rescale + qkv column permute, off hot path

    _resolve_weight_buffering()

    fwd = jax.jit(functools.partial(discriminator_forward, cfg=cfg))
    ref_fwd = jax.jit(functools.partial(discriminator_reference, cfg=cfg))

    out = jax.block_until_ready(fwd(img, params))
    ref = jax.block_until_ready(ref_fwd(img, params))

    assert out.shape == (2, 1), out.shape
    assert bool(jnp.all(jnp.isfinite(out)))
    assert bool(jnp.allclose(out, ref, atol=2e-2, rtol=2e-2)), (out, ref)
    print("KERNEL_OK")
</pallas_src>

<mosaic_0001>
module attributes {stable_mosaic.version = 11 : i64} {
  func.func @_probe_kernel(%arg0: i32, %arg1: memref<16x128xbf16, #tpu.memory_space<vmem>>, %arg2: memref<128x128xbf16, #tpu.memory_space<vmem>>, %arg3: memref<16x128xf32, #tpu.memory_space<vmem>>) attributes {dimension_semantics = [#tpu.dimension_semantics<parallel>], iteration_bounds = array<i64: 2>, scalar_prefetch = 0 : i64, scratch_operands = 0 : i64, tpu.core_type = #tpu.core_type<tc>, window_params = [{transform_indices = @transform_0, window_bounds = array<i64: 16, 128>}, {pipeline_mode = #tpu.pipeline_mode<synchronous>, transform_indices = @transform_1, window_bounds = array<i64: 128, 128>}, {transform_indices = @transform_2, window_bounds = array<i64: 16, 128>}]} {
    %c0 = arith.constant 0 : index
    %c0_0 = arith.constant 0 : index
    %0 = vector.load %arg1[%c0, %c0_0] : memref<16x128xbf16, #tpu.memory_space<vmem>>, vector<16x128xbf16>
    %c0_1 = arith.constant 0 : index
    %c0_2 = arith.constant 0 : index
    %1 = vector.load %arg2[%c0_1, %c0_2] : memref<128x128xbf16, #tpu.memory_space<vmem>>, vector<128x128xbf16>
    %cst = arith.constant dense<0.000000e+00> : vector<16x128xf32>
    %2 = tpu.matmul %0, %1, %cst {dimension_numbers = #tpu.dot_dimension_numbers<[1], [0], [0], [1], [0, 0, 1, 1], [], []>} : vector<16x128xbf16>, vector<128x128xbf16>, vector<16x128xf32> -> vector<16x128xf32>
    %c0_3 = arith.constant 0 : index
    %c0_4 = arith.constant 0 : index
    %3 = vector.load %arg3[%c0_3, %c0_4] : memref<16x128xf32, #tpu.memory_space<vmem>>, vector<16x128xf32>
    tpu.vector_store %arg3[%c0_3, %c0_4], %2 {strides = array<i32>} : memref<16x128xf32, #tpu.memory_space<vmem>>, vector<16x128xf32>,
    return
  }
  func.func @transform_0(%arg0: i32) -> (i32, i32) {
    %c0_i32 = arith.constant 0 : i32
    %c0_i32_0 = arith.constant 0 : i32
    return %arg0, %c0_i32 : i32, i32
  }
  func.func @transform_1(%arg0: i32) -> (i32, i32) {
    %c0_i32 = arith.constant 0 : i32
    %c0_i32_0 = arith.constant 0 : i32
    %c0_i32_1 = arith.constant 0 : i32
    return %c0_i32, %c0_i32_0 : i32, i32
  }
  func.func @transform_2(%arg0: i32) -> (i32, i32) {
    %c0_i32 = arith.constant 0 : i32
    %c0_i32_0 = arith.constant 0 : i32
    return %arg0, %c0_i32 : i32, i32
  }
}

module attributes {stable_mosaic.version = 11 : i64} {
  func.func @_linear_kernel(%arg0: i32, %arg1: memref<32x192xbf16, #tpu.memory_space<vmem>>, %arg2: memref<192x128xbf16, #tpu.memory_space<vmem>>, %arg3: memref<1x128xbf16, #tpu.memory_space<vmem>>, %arg4: memref<32x128xbf16, #tpu.memory_space<vmem>>) attributes {dimension_semantics = [#tpu.dimension_semantics<parallel>], iteration_bounds = array<i64: 2>, scalar_prefetch = 0 : i64, scratch_operands = 0 : i64, tpu.core_type = #tpu.core_type<tc>, window_params = [{transform_indices = @transform_0, window_bounds = array<i64: 32, 192>}, {pipeline_mode = #tpu.pipeline_mode<synchronous>, transform_indices = @transform_1, window_bounds = array<i64: 192, 128>}, {pipeline_mode = #tpu.pipeline_mode<synchronous>, transform_indices = @transform_2, window_bounds = array<i64: 1, 128>}, {transform_indices = @transform_3, window_bounds = array<i64: 32, 128>}]} {
    %c0 = arith.constant 0 : index
    %c0_0 = arith.constant 0 : index
    %0 = vector.load %arg1[%c0, %c0_0] : memref<32x192xbf16, #tpu.memory_space<vmem>>, vector<32x192xbf16>
    %c0_1 = arith.constant 0 : index
    %c0_2 = arith.constant 0 : index
    %1 = vector.load %arg2[%c0_1, %c0_2] : memref<192x128xbf16, #tpu.memory_space<vmem>>, vector<192x128xbf16>
    %cst = arith.constant dense<0.000000e+00> : vector<32x128xf32>
    %2 = tpu.matmul %0, %1, %cst {dimension_numbers = #tpu.dot_dimension_numbers<[1], [0], [0], [1], [0, 0, 1, 1], [], []>} : vector<32x192xbf16>, vector<192x128xbf16>, vector<32x128xf32> -> vector<32x128xf32>
    %c0_3 = arith.constant 0 : index
    %c0_4 = arith.constant 0 : index
    %3 = vector.load %arg3[%c0_3, %c0_4] : memref<1x128xbf16, #tpu.memory_space<vmem>>, vector<1x128xbf16>
    %4 = arith.extf %3 : vector<1x128xbf16> to vector<1x128xf32>
    %5 = vector.broadcast %4 : vector<1x128xf32> to vector<32x128xf32>
    %6 = arith.addf %2, %5 : vector<32x128xf32>
    %7 = arith.truncf %6 : vector<32x128xf32> to vector<32x128xbf16>
    %c0_5 = arith.constant 0 : index
    %c0_6 = arith.constant 0 : index
    %8 = vector.load %arg4[%c0_5, %c0_6] : memref<32x128xbf16, #tpu.memory_space<vmem>>, vector<32x128xbf16>
    tpu.vector_store %arg4[%c0_5, %c0_6], %7 {strides = array<i32>} : memref<32x128xbf16, #tpu.memory_space<vmem>>, vector<32x128xbf16>,
    return
  }
  func.func @transform_0(%arg0: i32) -> (i32, i32) {
    %c0_i32 = arith.constant 0 : i32
    %c0_i32_0 = arith.constant 0 : i32
    return %arg0, %c0_i32 : i32, i32
  }
  func.func @transform_1(%arg0: i32) -> (i32, i32) {
    %c0_i32 = arith.constant 0 : i32
    %c0_i32_0 = arith.constant 0 : i32
    %c0_i32_1 = arith.constant 0 : i32
    return %c0_i32, %c0_i32_0 : i32, i32
  }
  func.func @transform_2(%arg0: i32) -> (i32, i32) {
    %c0_i32 = arith.constant 0 : i32
    %c0_i32_0 = arith.constant 0 : i32
    %c0_i32_1 = arith.constant 0 : i32
    return %c0_i32, %c0_i32_0 : i32, i32
  }
  func.func @transform_3(%arg0: i32) -> (i32, i32) {
    %c0_i32 = arith.constant 0 : i32
    %c0_i32_0 = arith.constant 0 : i32
    return %arg0, %c0_i32 : i32, i32
  }
}

module attributes {stable_mosaic.version = 11 : i64} {
  func.func @_attn_block_kernel(%arg0: i32, %arg1: memref<1x32x128xbf16, #tpu.memory_space<vmem>>, %arg2: memref<1x128xbf16, #tpu.memory_space<vmem>>, %arg3: memref<1x128xbf16, #tpu.memory_space<vmem>>, %arg4: memref<128x384xbf16, #tpu.memory_space<vmem>>, %arg5: memref<128x128xbf16, #tpu.memory_space<vmem>>, %arg6: memref<1x128xbf16, #tpu.memory_space<vmem>>, %arg7: memref<1x32x128xbf16, #tpu.memory_space<vmem>>) attributes {dimension_semantics = [#tpu.dimension_semantics<parallel>], iteration_bounds = array<i64: 2>, scalar_prefetch = 0 : i64, scratch_operands = 0 : i64, tpu.core_type = #tpu.core_type<tc>, window_params = [{transform_indices = @transform_0, window_bounds = array<i64: 1, 32, 128>}, {pipeline_mode = #tpu.pipeline_mode<synchronous>, transform_indices = @transform_1, window_bounds = array<i64: 1, 128>}, {pipeline_mode = #tpu.pipeline_mode<synchronous>, transform_indices = @transform_2, window_bounds = array<i64: 1, 128>}, {pipeline_mode = #tpu.pipeline_mode<synchronous>, transform_indices = @transform_3, window_bounds = array<i64: 128, 384>}, {pipeline_mode = #tpu.pipeline_mode<synchronous>, transform_indices = @transform_4, window_bounds = array<i64: 128, 128>}, {pipeline_mode = #tpu.pipeline_mode<synchronous>, transform_indices = @transform_5, window_bounds = array<i64: 1, 128>}, {transform_indices = @transform_6, window_bounds = array<i64: 1, 32, 128>}]} {
    %c0 = arith.constant 0 : index
    %c0_0 = arith.constant 0 : index
    %c0_1 = arith.constant 0 : index
    %0 = vector.load %arg1[%c0, %c0_0, %c0_1] : memref<1x32x128xbf16, #tpu.memory_space<vmem>>, vector<1x32x128xbf16>
    %1 = vector.shape_cast %0 : vector<1x32x128xbf16> to vector<32x128xbf16>
    %2 = arith.extf %1 : vector<32x128xbf16> to vector<32x128xf32>
    %cst = arith.constant dense<0.000000e+00> : vector<32xf32>
    %3 = vector.multi_reduction <add>, %2, %cst [1] : vector<32x128xf32> to vector<32xf32>
    %4 = vector.shape_cast %3 : vector<32xf32> to vector<32x1xf32>
    %cst_2 = arith.constant 1.280000e+02 : f32
    %5 = vector.broadcast %cst_2 : f32 to vector<32x1xf32>
    %6 = arith.divf %4, %5 : vector<32x1xf32>
    %7 = vector.broadcast %6 : vector<32x1xf32> to vector<32x128xf32>
    %8 = arith.subf %2, %7 : vector<32x128xf32>
    %9 = arith.mulf %8, %8 : vector<32x128xf32>
    %cst_3 = arith.constant dense<0.000000e+00> : vector<32xf32>
    %10 = vector.multi_reduction <add>, %9, %cst_3 [1] : vector<32x128xf32> to vector<32xf32>
    %11 = vector.shape_cast %10 : vector<32xf32> to vector<32x1xf32>
    %cst_4 = arith.constant 1.280000e+02 : f32
    %12 = vector.broadcast %cst_4 : f32 to vector<32x1xf32>
    %13 = arith.divf %11, %12 : vector<32x1xf32>
    %cst_5 = arith.constant 9.99999974E-6 : f32
    %14 = vector.broadcast %cst_5 : f32 to vector<32x1xf32>
    %15 = arith.addf %13, %14 : vector<32x1xf32>
    %16 = math.rsqrt %15 : vector<32x1xf32>
    %17 = vector.broadcast %16 : vector<32x1xf32> to vector<32x128xf32>
    %18 = arith.mulf %8, %17 : vector<32x128xf32>
    %c0_6 = arith.constant 0 : index
    %c0_7 = arith.constant 0 : index
    %19 = vector.load %arg2[%c0_6, %c0_7] : memref<1x128xbf16, #tpu.memory_space<vmem>>, vector<1x128xbf16>
    %20 = arith.extf %19 : vector<1x128xbf16> to vector<1x128xf32>
    %21 = vector.broadcast %20 : vector<1x128xf32> to vector<32x128xf32>
    %22 = arith.mulf %18, %21 : vector<32x128xf32>
    %c0_8 = arith.constant 0 : index
    %c0_9 = arith.constant 0 : index
    %23 = vector.load %arg3[%c0_8, %c0_9] : memref<1x128xbf16, #tpu.memory_space<vmem>>, vector<1x128xbf16>
    %24 = arith.extf %23 : vector<1x128xbf16> to vector<1x128xf32>
    %25 = vector.broadcast %24 : vector<1x128xf32> to vector<32x128xf32>
    %26 = arith.addf %22, %25 : vector<32x128xf32>
    %27 = arith.truncf %26 : vector<32x128xf32> to vector<32x128xbf16>
    %c0_10 = arith.constant 0 : index
    %c0_11 = arith.constant 0 : index
    %28 = vector.load %arg4[%c0_10, %c0_11] : memref<128x384xbf16, #tpu.memory_space<vmem>>, vector<128x384xbf16>
    %cst_12 = arith.constant dense<0.000000e+00> : vector<32x384xf32>
    %29 = tpu.matmul %27, %28, %cst_12 {dimension_numbers = #tpu.dot_dimension_numbers<[1], [0], [0], [1], [0, 0, 1, 1], [], []>} : vector<32x128xbf16>, vector<128x384xbf16>, vector<32x384xf32> -> vector<32x384xf32>
    %30 = tpu.iota {dimensions = array<i32: 1>} : vector<32x32xi32>
    %c26_i32 = arith.constant 26 : i32
    %31 = vector.broadcast %c26_i32 : i32 to vector<32x32xi32>
    %32 = arith.cmpi slt, %30, %31 : vector<32x32xi32>
    %cst_13 = arith.constant 1.000000e+00 : f32
    %33 = vector.broadcast %cst_13 : f32 to vector<1x32xf32>
    %34 = vector.extract_strided_slice %29 {offsets = [0, 0], sizes = [32, 32], strides = [1, 1]} : vector<32x384xf32> to vector<32x32xf32>
    %35 = vector.extract_strided_slice %29 {offsets = [0, 128], sizes = [32, 32], strides = [1, 1]} : vector<32x384xf32> to vector<32x32xf32>
    %36 = vector.extract_strided_slice %29 {offsets = [0, 256], sizes = [32, 32], strides = [1, 1]} : vector<32x384xf32> to vector<32x32xf32>
    %37 = arith.mulf %34, %34 : vector<32x32xf32>
    %cst_14 = arith.constant dense<0.000000e+00> : vector<32xf32>
    %38 = vector.multi_reduction <add>, %37, %cst_14 [1] : vector<32x32xf32> to vector<32xf32>
    %39 = vector.shape_cast %38 : vector<32xf32> to vector<32x1xf32>
    %40 = arith.mulf %35, %35 : vector<32x32xf32>
    %cst_15 = arith.constant dense<0.000000e+00> : vector<1x32xf32>
    %41 = tpu.matmul %33, %40, %cst_15 {dimension_numbers = #tpu.dot_dimension_numbers<[1], [1], [0], [0], [0, 0, 1, 0], [], []>} : vector<1x32xf32>, vector<32x32xf32>, vector<1x32xf32> -> vector<1x32xf32>
    %cst_16 = arith.constant dense<0.000000e+00> : vector<32x32xf32>
    %42 = tpu.matmul %34, %35, %cst_16 {dimension_numbers = #tpu.dot_dimension_numbers<[1], [1], [0], [0], [0, 0, 1, 0], [], []>} : vector<32x32xf32>, vector<32x32xf32>, vector<32x32xf32> -> vector<32x32xf32>
    %43 = vector.broadcast %39 : vector<32x1xf32> to vector<32x32xf32>
    %44 = vector.broadcast %41 : vector<1x32xf32> to vector<32x32xf32>
    %45 = arith.addf %43, %44 : vector<32x32xf32>
    %cst_17 = arith.constant 2.000000e+00 : f32
    %46 = vector.broadcast %cst_17 : f32 to vector<32x32xf32>
    %47 = arith.mulf %46, %42 : vector<32x32xf32>
    %48 = arith.subf %45, %47 : vector<32x32xf32>
    %cst_18 = arith.constant 0.000000e+00 : f32
    %49 = vector.broadcast %cst_18 : f32 to vector<32x32xf32>
    %50 = arith.maximumf %48, %49 : vector<32x32xf32>
    %51 = math.sqrt %50 : vector<32x32xf32>
    %cst_19 = arith.constant 0.0883883461 : f32
    %52 = vector.broadcast %cst_19 : f32 to vector<32x32xf32>
    %53 = arith.mulf %51, %52 : vector<32x32xf32>
    %cst_20 = arith.constant -1.000000e+30 : f32
    %54 = vector.broadcast %cst_20 : f32 to vector<32x32xf32>
    %55 = arith.select %32, %53, %54 : vector<32x32xi1>, vector<32x32xf32>
    %cst_21 = arith.constant dense<0xFF800000> : vector<32xf32>
    %56 = vector.multi_reduction <maximumf>, %55, %cst_21 [1] : vector<32x32xf32> to vector<32xf32>
    %57 = vector.shape_cast %56 : vector<32xf32> to vector<32x1xf32>
    %58 = vector.broadcast %57 : vector<32x1xf32> to vector<32x32xf32>
    %59 = arith.subf %55, %58 : vector<32x32xf32>
    %60 = math.exp %59 : vector<32x32xf32>
    %cst_22 = arith.constant dense<0.000000e+00> : vector<32xf32>
    %61 = vector.multi_reduction <add>, %60, %cst_22 [1] : vector<32x32xf32> to vector<32xf32>
    %62 = vector.shape_cast %61 : vector<32xf32> to vector<32x1xf32>
    %63 = tpu.reciprocal %62 {approx = true} : vector<32x1xf32> -> vector<32x1xf32>
    %64 = vector.broadcast %63 : vector<32x1xf32> to vector<32x32xf32>
    %65 = arith.mulf %60, %64 : vector<32x32xf32>
    %66 = arith.truncf %65 : vector<32x32xf32> to vector<32x32xbf16>
    %67 = arith.truncf %36 : vector<32x32xf32> to vector<32x32xbf16>
    %cst_23 = arith.constant dense<0.000000e+00> : vector<32x32xf32>
    %68 = tpu.matmul %66, %67, %cst_23 {dimension_numbers = #tpu.dot_dimension_numbers<[1], [0], [0], [1], [0, 0, 1, 1], [], []>} : vector<32x32xbf16>, vector<32x32xbf16>, vector<32x32xf32> -> vector<32x32xf32>
    %69 = vector.extract_strided_slice %29 {offsets = [0, 32], sizes = [32, 32], strides = [1, 1]} : vector<32x384xf32> to vector<32x32xf32>
    %70 = vector.extract_strided_slice %29 {offsets = [0, 160], sizes = [32, 32], strides = [1, 1]} : vector<32x384xf32> to vector<32x32xf32>
    %71 = vector.extract_strided_slice %29 {offsets = [0, 288], sizes = [32, 32], strides = [1, 1]} : vector<32x384xf32> to vector<32x32xf32>
    %72 = arith.mulf %69, %69 : vector<32x32xf32>
    %cst_24 = arith.constant dense<0.000000e+00> : vector<32xf32>
    %73 = vector.multi_reduction <add>, %72, %cst_24 [1] : vector<32x32xf32> to vector<32xf32>
    %74 = vector.shape_cast %73 : vector<32xf32> to vector<32x1xf32>
    %75 = arith.mulf %70, %70 : vector<32x32xf32>
    %cst_25 = arith.constant dense<0.000000e+00> : vector<1x32xf32>
    %76 = tpu.matmul %33, %75, %cst_25 {dimension_numbers = #tpu.dot_dimension_numbers<[1], [1], [0], [0], [0, 0, 1, 0], [], []>} : vector<1x32xf32>, vector<32x32xf32>, vector<1x32xf32> -> vector<1x32xf32>
    %cst_26 = arith.constant dense<0.000000e+00> : vector<32x32xf32>
    %77 = tpu.matmul %69, %70, %cst_26 {dimension_numbers = #tpu.dot_dimension_numbers<[1], [1], [0], [0], [0, 0, 1, 0], [], []>} : vector<32x32xf32>, vector<32x32xf32>, vector<32x32xf32> -> vector<32x32xf32>
    %78 = vector.broadcast %74 : vector<32x1xf32> to vector<32x32xf32>
    %79 = vector.broadcast %76 : vector<1x32xf32> to vector<32x32xf32>
    %80 = arith.addf %78, %79 : vector<32x32xf32>
    %cst_27 = arith.constant 2.000000e+00 : f32
    %81 = vector.broadcast %cst_27 : f32 to vector<32x32xf32>
    %82 = arith.mulf %81, %77 : vector<32x32xf32>
    %83 = arith.subf %80, %82 : vector<32x32xf32>
    %cst_28 = arith.constant 0.000000e+00 : f32
    %84 = vector.broadcast %cst_28 : f32 to vector<32x32xf32>
    %85 = arith.maximumf %83, %84 : vector<32x32xf32>
    %86 = math.sqrt %85 : vector<32x32xf32>
    %cst_29 = arith.constant 0.0883883461 : f32
    %87 = vector.broadcast %cst_29 : f32 to vector<32x32xf32>
    %88 = arith.mulf %86, %87 : vector<32x32xf32>
    %cst_30 = arith.constant -1.000000e+30 : f32
    %89 = vector.broadcast %cst_30 : f32 to vector<32x32xf32>
    %90 = arith.select %32, %88, %89 : vector<32x32xi1>, vector<32x32xf32>
    %cst_31 = arith.constant dense<0xFF800000> : vector<32xf32>
    %91 = vector.multi_reduction <maximumf>, %90, %cst_31 [1] : vector<32x32xf32> to vector<32xf32>
    %92 = vector.shape_cast %91 : vector<32xf32> to vector<32x1xf32>
    %93 = vector.broadcast %92 : vector<32x1xf32> to vector<32x32xf32>
    %94 = arith.subf %90, %93 : vector<32x32xf32>
    %95 = math.exp %94 : vector<32x32xf32>
    %cst_32 = arith.constant dense<0.000000e+00> : vector<32xf32>
    %96 = vector.multi_reduction <add>, %95, %cst_32 [1] : vector<32x32xf32> to vector<32xf32>
    %97 = vector.shape_cast %96 : vector<32xf32> to vector<32x1xf32>
    %98 = tpu.reciprocal %97 {approx = true} : vector<32x1xf32> -> vector<32x1xf32>
    %99 = vector.broadcast %98 : vector<32x1xf32> to vector<32x32xf32>
    %100 = arith.mulf %95, %99 : vector<32x32xf32>
    %101 = arith.truncf %100 : vector<32x32xf32> to vector<32x32xbf16>
    %102 = arith.truncf %71 : vector<32x32xf32> to vector<32x32xbf16>
    %cst_33 = arith.constant dense<0.000000e+00> : vector<32x32xf32>
    %103 = tpu.matmul %101, %102, %cst_33 {dimension_numbers = #tpu.dot_dimension_numbers<[1], [0], [0], [1], [0, 0, 1, 1], [], []>} : vector<32x32xbf16>, vector<32x32xbf16>, vector<32x32xf32> -> vector<32x32xf32>
    %104 = vector.extract_strided_slice %29 {offsets = [0, 64], sizes = [32, 32], strides = [1, 1]} : vector<32x384xf32> to vector<32x32xf32>
    %105 = vector.extract_strided_slice %29 {offsets = [0, 192], sizes = [32, 32], strides = [1, 1]} : vector<32x384xf32> to vector<32x32xf32>
    %106 = vector.extract_strided_slice %29 {offsets = [0, 320], sizes = [32, 32], strides = [1, 1]} : vector<32x384xf32> to vector<32x32xf32>
    %107 = arith.mulf %104, %104 : vector<32x32xf32>
    %cst_34 = arith.constant dense<0.000000e+00> : vector<32xf32>
    %108 = vector.multi_reduction <add>, %107, %cst_34 [1] : vector<32x32xf32> to vector<32xf32>
    %109 = vector.shape_cast %108 : vector<32xf32> to vector<32x1xf32>
    %110 = arith.mulf %105, %105 : vector<32x32xf32>
    %cst_35 = arith.constant dense<0.000000e+00> : vector<1x32xf32>
    %111 = tpu.matmul %33, %110, %cst_35 {dimension_numbers = #tpu.dot_dimension_numbers<[1], [1], [0], [0], [0, 0, 1, 0], [], []>} : vector<1x32xf32>, vector<32x32xf32>, vector<1x32xf32> -> vector<1x32xf32>
    %cst_36 = arith.constant dense<0.000000e+00> : vector<32x32xf32>
    %112 = tpu.matmul %104, %105, %cst_36 {dimension_numbers = #tpu.dot_dimension_numbers<[1], [1], [0], [0], [0, 0, 1, 0], [], []>} : vector<32x32xf32>, vector<32x32xf32>, vector<32x32xf32> -> vector<32x32xf32>
    %113 = vector.broadcast %109 : vector<32x1xf32> to vector<32x32xf32>
    %114 = vector.broadcast %111 : vector<1x32xf32> to vector<32x32xf32>
    %115 = arith.addf %113, %114 : vector<32x32xf32>
    %cst_37 = arith.constant 2.000000e+00 : f32
    %116 = vector.broadcast %cst_37 : f32 to vector<32x32xf32>
    %117 = arith.mulf %116, %112 : vector<32x32xf32>
    %118 = arith.subf %115, %117 : vector<32x32xf32>
    %cst_38 = arith.constant 0.000000e+00 : f32
    %119 = vector.broadcast %cst_38 : f32 to vector<32x32xf32>
    %120 = arith.maximumf %118, %119 : vector<32x32xf32>
    %121 = math.sqrt %120 : vector<32x32xf32>
    %cst_39 = arith.constant 0.0883883461 : f32
    %122 = vector.broadcast %cst_39 : f32 to vector<32x32xf32>
    %123 = arith.mulf %121, %122 : vector<32x32xf32>
    %cst_40 = arith.constant -1.000000e+30 : f32
    %124 = vector.broadcast %cst_40 : f32 to vector<32x32xf32>
    %125 = arith.select %32, %123, %124 : vector<32x32xi1>, vector<32x32xf32>
    %cst_41 = arith.constant dense<0xFF800000> : vector<32xf32>
    %126 = vector.multi_reduction <maximumf>, %125, %cst_41 [1] : vector<32x32xf32> to vector<32xf32>
    %127 = vector.shape_cast %126 : vector<32xf32> to vector<32x1xf32>
    %128 = vector.broadcast %127 : vector<32x1xf32> to vector<32x32xf32>
    %129 = arith.subf %125, %128 : vector<32x32xf32>
    %130 = math.exp %129 : vector<32x32xf32>
    %cst_42 = arith.constant dense<0.000000e+00> : vector<32xf32>
    %131 = vector.multi_reduction <add>, %130, %cst_42 [1] : vector<32x32xf32> to vector<32xf32>
    %132 = vector.shape_cast %131 : vector<32xf32> to vector<32x1xf32>
    %133 = tpu.reciprocal %132 {approx = true} : vector<32x1xf32> -> vector<32x1xf32>
    %134 = vector.broadcast %133 : vector<32x1xf32> to vector<32x32xf32>
    %135 = arith.mulf %130, %134 : vector<32x32xf32>
    %136 = arith.truncf %135 : vector<32x32xf32> to vector<32x32xbf16>
    %137 = arith.truncf %106 : vector<32x32xf32> to vector<32x32xbf16>
    %cst_43 = arith.constant dense<0.000000e+00> : vector<32x32xf32>
    %138 = tpu.matmul %136, %137, %cst_43 {dimension_numbers = #tpu.dot_dimension_numbers<[1], [0], [0], [1], [0, 0, 1, 1], [], []>} : vector<32x32xbf16>, vector<32x32xbf16>, vector<32x32xf32> -> vector<32x32xf32>
    %139 = vector.extract_strided_slice %29 {offsets = [0, 96], sizes = [32, 32], strides = [1, 1]} : vector<32x384xf32> to vector<32x32xf32>
    %140 = vector.extract_strided_slice %29 {offsets = [0, 224], sizes = [32, 32], strides = [1, 1]} : vector<32x384xf32> to vector<32x32xf32>
    %141 = vector.extract_strided_slice %29 {offsets = [0, 352], sizes = [32, 32], strides = [1, 1]} : vector<32x384xf32> to vector<32x32xf32>
    %142 = arith.mulf %139, %139 : vector<32x32xf32>
    %cst_44 = arith.constant dense<0.000000e+00> : vector<32xf32>
    %143 = vector.multi_reduction <add>, %142, %cst_44 [1] : vector<32x32xf32> to vector<32xf32>
    %144 = vector.shape_cast %143 : vector<32xf32> to vector<32x1xf32>
    %145 = arith.mulf %140, %140 : vector<32x32xf32>
    %cst_45 = arith.constant dense<0.000000e+00> : vector<1x32xf32>
    %146 = tpu.matmul %33, %145, %cst_45 {dimension_numbers = #tpu.dot_dimension_numbers<[1], [1], [0], [0], [0, 0, 1, 0], [], []>} : vector<1x32xf32>, vector<32x32xf32>, vector<1x32xf32> -> vector<1x32xf32>
    %cst_46 = arith.constant dense<0.000000e+00> : vector<32x32xf32>
    %147 = tpu.matmul %139, %140, %cst_46 {dimension_numbers = #tpu.dot_dimension_numbers<[1], [1], [0], [0], [0, 0, 1, 0], [], []>} : vector<32x32xf32>, vector<32x32xf32>, vector<32x32xf32> -> vector<32x32xf32>
    %148 = vector.broadcast %144 : vector<32x1xf32> to vector<32x32xf32>
    %149 = vector.broadcast %146 : vector<1x32xf32> to vector<32x32xf32>
    %150 = arith.addf %148, %149 : vector<32x32xf32>
    %cst_47 = arith.constant 2.000000e+00 : f32
    %151 = vector.broadcast %cst_47 : f32 to vector<32x32xf32>
    %152 = arith.mulf %151, %147 : vector<32x32xf32>
    %153 = arith.subf %150, %152 : vector<32x32xf32>
    %cst_48 = arith.constant 0.000000e+00 : f32
    %154 = vector.broadcast %cst_48 : f32 to vector<32x32xf32>
    %155 = arith.maximumf %153, %154 : vector<32x32xf32>
    %156 = math.sqrt %155 : vector<32x32xf32>
    %cst_49 = arith.constant 0.0883883461 : f32
    %157 = vector.broadcast %cst_49 : f32 to vector<32x32xf32>
    %158 = arith.mulf %156, %157 : vector<32x32xf32>
    %cst_50 = arith.constant -1.000000e+30 : f32
    %159 = vector.broadcast %cst_50 : f32 to vector<32x32xf32>
    %160 = arith.select %32, %158, %159 : vector<32x32xi1>, vector<32x32xf32>
    %cst_51 = arith.constant dense<0xFF800000> : vector<32xf32>
    %161 = vector.multi_reduction <maximumf>, %160, %cst_51 [1] : vector<32x32xf32> to vector<32xf32>
    %162 = vector.shape_cast %161 : vector<32xf32> to vector<32x1xf32>
    %163 = vector.broadcast %162 : vector<32x1xf32> to vector<32x32xf32>
    %164 = arith.subf %160, %163 : vector<32x32xf32>
    %165 = math.exp %164 : vector<32x32xf32>
    %cst_52 = arith.constant dense<0.000000e+00> : vector<32xf32>
    %166 = vector.multi_reduction <add>, %165, %cst_52 [1] : vector<32x32xf32> to vector<32xf32>
    %167 = vector.shape_cast %166 : vector<32xf32> to vector<32x1xf32>
    %168 = tpu.reciprocal %167 {approx = true} : vector<32x1xf32> -> vector<32x1xf32>
    %169 = vector.broadcast %168 : vector<32x1xf32> to vector<32x32xf32>
    %170 = arith.mulf %165, %169 : vector<32x32xf32>
    %171 = arith.truncf %170 : vector<32x32xf32> to vector<32x32xbf16>
    %172 = arith.truncf %141 : vector<32x32xf32> to vector<32x32xbf16>
    %cst_53 = arith.constant dense<0.000000e+00> : vector<32x32xf32>
    %173 = tpu.matmul %171, %172, %cst_53 {dimension_numbers = #tpu.dot_dimension_numbers<[1], [0], [0], [1], [0, 0, 1, 1], [], []>} : vector<32x32xbf16>, vector<32x32xbf16>, vector<32x32xf32> -> vector<32x32xf32>
    %174 = tpu.concatenate %68, %103, %138, %173 in 1 : vector<32x32xf32>, vector<32x32xf32>, vector<32x32xf32>, vector<32x32xf32> -> vector<32x128xf32>
    %175 = arith.truncf %174 : vector<32x128xf32> to vector<32x128xbf16>
    %c0_54 = arith.constant 0 : index
    %c0_55 = arith.constant 0 : index
    %176 = vector.load %arg5[%c0_54, %c0_55] : memref<128x128xbf16, #tpu.memory_space<vmem>>, vector<128x128xbf16>
    %cst_56 = arith.constant dense<0.000000e+00> : vector<32x128xf32>
    %177 = tpu.matmul %175, %176, %cst_56 {dimension_numbers = #tpu.dot_dimension_numbers<[1], [0], [0], [1], [0, 0, 1, 1], [], []>} : vector<32x128xbf16>, vector<128x128xbf16>, vector<32x128xf32> -> vector<32x128xf32>
    %c0_57 = arith.constant 0 : index
    %c0_58 = arith.constant 0 : index
    %178 = vector.load %arg6[%c0_57, %c0_58] : memref<1x128xbf16, #tpu.memory_space<vmem>>, vector<1x128xbf16>
    %179 = arith.extf %178 : vector<1x128xbf16> to vector<1x128xf32>
    %180 = vector.broadcast %179 : vector<1x128xf32> to vector<32x128xf32>
    %181 = arith.addf %177, %180 : vector<32x128xf32>
    %182 = arith.addf %2, %181 : vector<32x128xf32>
    %183 = arith.truncf %182 : vector<32x128xf32> to vector<32x128xbf16>
    %c0_59 = arith.constant 0 : index
    %c0_60 = arith.constant 0 : index
    %c0_61 = arith.constant 0 : index
    %184 = vector.load %arg7[%c0_59, %c0_60, %c0_61] : memref<1x32x128xbf16, #tpu.memory_space<vmem>>, vector<1x32x128xbf16>
    %185 = vector.shape_cast %184 : vector<1x32x128xbf16> to vector<32x128xbf16>
    %186 = vector.shape_cast %183 : vector<32x128xbf16> to vector<1x32x128xbf16>
    tpu.vector_store %arg7[%c0_59, %c0_60, %c0_61], %186 {strides = array<i32>} : memref<1x32x128xbf16, #tpu.memory_space<vmem>>, vector<1x32x128xbf16>,
    return
  }
  func.func @transform_0(%arg0: i32) -> (i32, i32, i32) {
    %c0_i32 = arith.constant 0 : i32
    %c0_i32_0 = arith.constant 0 : i32
    %c0_i32_1 = arith.constant 0 : i32
    return %arg0, %c0_i32, %c0_i32_0 : i32, i32, i32
  }
  func.func @transform_1(%arg0: i32) -> (i32, i32) {
    %c0_i32 = arith.constant 0 : i32
    %c0_i32_0 = arith.constant 0 : i32
    %c0_i32_1 = arith.constant 0 : i32
    return %c0_i32, %c0_i32_0 : i32, i32
  }
  func.func @transform_2(%arg0: i32) -> (i32, i32) {
    %c0_i32 = arith.constant 0 : i32
    %c0_i32_0 = arith.constant 0 : i32
    %c0_i32_1 = arith.constant 0 : i32
    return %c0_i32, %c0_i32_0 : i32, i32
  }
  func.func @transform_3(%arg0: i32) -> (i32, i32) {
    %c0_i32 = arith.constant 0 : i32
    %c0_i32_0 = arith.constant 0 : i32
    %c0_i32_1 = arith.constant 0 : i32
    return %c0_i32, %c0_i32_0 : i32, i32
  }
  func.func @transform_4(%arg0: i32) -> (i32, i32) {
    %c0_i32 = arith.constant 0 : i32
    %c0_i32_0 = arith.constant 0 : i32
    %c0_i32_1 = arith.constant 0 : i32
    return %c0_i32, %c0_i32_0 : i32, i32
  }
  func.func @transform_5(%arg0: i32) -> (i32, i32) {
    %c0_i32 = arith.constant 0 : i32
    %c0_i32_0 = arith.constant 0 : i32
    %c0_i32_1 = arith.constant 0 : i32
    return %c0_i32, %c0_i32_0 : i32, i32
  }
  func.func @transform_6(%arg0: i32) -> (i32, i32, i32) {
    %c0_i32 = arith.constant 0 : i32
    %c0_i32_0 = arith.constant 0 : i32
    %c0_i32_1 = arith.constant 0 : i32
    return %arg0, %c0_i32, %c0_i32_0 : i32, i32, i32
  }
}

module attributes {stable_mosaic.version = 11 : i64} {
  func.func @_ln_mlp_res_kernel(%arg0: i32, %arg1: memref<32x128xbf16, #tpu.memory_space<vmem>>, %arg2: memref<1x128xbf16, #tpu.memory_space<vmem>>, %arg3: memref<1x128xbf16, #tpu.memory_space<vmem>>, %arg4: memref<128x512xbf16, #tpu.memory_space<vmem>>, %arg5: memref<1x512xbf16, #tpu.memory_space<vmem>>, %arg6: memref<512x128xbf16, #tpu.memory_space<vmem>>, %arg7: memref<1x128xbf16, #tpu.memory_space<vmem>>, %arg8: memref<32x128xbf16, #tpu.memory_space<vmem>>) attributes {dimension_semantics = [#tpu.dimension_semantics<parallel>], iteration_bounds = array<i64: 2>, scalar_prefetch = 0 : i64, scratch_operands = 0 : i64, tpu.core_type = #tpu.core_type<tc>, window_params = [{transform_indices = @transform_0, window_bounds = array<i64: 32, 128>}, {pipeline_mode = #tpu.pipeline_mode<synchronous>, transform_indices = @transform_1, window_bounds = array<i64: 1, 128>}, {pipeline_mode = #tpu.pipeline_mode<synchronous>, transform_indices = @transform_2, window_bounds = array<i64: 1, 128>}, {pipeline_mode = #tpu.pipeline_mode<synchronous>, transform_indices = @transform_3, window_bounds = array<i64: 128, 512>}, {pipeline_mode = #tpu.pipeline_mode<synchronous>, transform_indices = @transform_4, window_bounds = array<i64: 1, 512>}, {pipeline_mode = #tpu.pipeline_mode<synchronous>, transform_indices = @transform_5, window_bounds = array<i64: 512, 128>}, {pipeline_mode = #tpu.pipeline_mode<synchronous>, transform_indices = @transform_6, window_bounds = array<i64: 1, 128>}, {transform_indices = @transform_7, window_bounds = array<i64: 32, 128>}]} {
    %c0 = arith.constant 0 : index
    %c0_0 = arith.constant 0 : index
    %0 = vector.load %arg1[%c0, %c0_0] : memref<32x128xbf16, #tpu.memory_space<vmem>>, vector<32x128xbf16>
    %1 = arith.extf %0 : vector<32x128xbf16> to vector<32x128xf32>
    %cst = arith.constant dense<0.000000e+00> : vector<32xf32>
    %2 = vector.multi_reduction <add>, %1, %cst [1] : vector<32x128xf32> to vector<32xf32>
    %3 = vector.shape_cast %2 : vector<32xf32> to vector<32x1xf32>
    %cst_1 = arith.constant 1.280000e+02 : f32
    %4 = vector.broadcast %cst_1 : f32 to vector<32x1xf32>
    %5 = arith.divf %3, %4 : vector<32x1xf32>
    %6 = vector.broadcast %5 : vector<32x1xf32> to vector<32x128xf32>
    %7 = arith.subf %1, %6 : vector<32x128xf32>
    %8 = arith.mulf %7, %7 : vector<32x128xf32>
    %cst_2 = arith.constant dense<0.000000e+00> : vector<32xf32>
    %9 = vector.multi_reduction <add>, %8, %cst_2 [1] : vector<32x128xf32> to vector<32xf32>
    %10 = vector.shape_cast %9 : vector<32xf32> to vector<32x1xf32>
    %cst_3 = arith.constant 1.280000e+02 : f32
    %11 = vector.broadcast %cst_3 : f32 to vector<32x1xf32>
    %12 = arith.divf %10, %11 : vector<32x1xf32>
    %cst_4 = arith.constant 9.99999974E-6 : f32
    %13 = vector.broadcast %cst_4 : f32 to vector<32x1xf32>
    %14 = arith.addf %12, %13 : vector<32x1xf32>
    %15 = math.rsqrt %14 : vector<32x1xf32>
    %16 = vector.broadcast %15 : vector<32x1xf32> to vector<32x128xf32>
    %17 = arith.mulf %7, %16 : vector<32x128xf32>
    %c0_5 = arith.constant 0 : index
    %c0_6 = arith.constant 0 : index
    %18 = vector.load %arg2[%c0_5, %c0_6] : memref<1x128xbf16, #tpu.memory_space<vmem>>, vector<1x128xbf16>
    %19 = arith.extf %18 : vector<1x128xbf16> to vector<1x128xf32>
    %20 = vector.broadcast %19 : vector<1x128xf32> to vector<32x128xf32>
    %21 = arith.mulf %17, %20 : vector<32x128xf32>
    %c0_7 = arith.constant 0 : index
    %c0_8 = arith.constant 0 : index
    %22 = vector.load %arg3[%c0_7, %c0_8] : memref<1x128xbf16, #tpu.memory_space<vmem>>, vector<1x128xbf16>
    %23 = arith.extf %22 : vector<1x128xbf16> to vector<1x128xf32>
    %24 = vector.broadcast %23 : vector<1x128xf32> to vector<32x128xf32>
    %25 = arith.addf %21, %24 : vector<32x128xf32>
    %26 = arith.truncf %25 : vector<32x128xf32> to vector<32x128xbf16>
    %c0_9 = arith.constant 0 : index
    %c0_10 = arith.constant 0 : index
    %27 = vector.load %arg4[%c0_9, %c0_10] : memref<128x512xbf16, #tpu.memory_space<vmem>>, vector<128x512xbf16>
    %cst_11 = arith.constant dense<0.000000e+00> : vector<32x512xf32>
    %28 = tpu.matmul %26, %27, %cst_11 {dimension_numbers = #tpu.dot_dimension_numbers<[1], [0], [0], [1], [0, 0, 1, 1], [], []>} : vector<32x128xbf16>, vector<128x512xbf16>, vector<32x512xf32> -> vector<32x512xf32>
    %c0_12 = arith.constant 0 : index
    %c0_13 = arith.constant 0 : index
    %29 = vector.load %arg5[%c0_12, %c0_13] : memref<1x512xbf16, #tpu.memory_space<vmem>>, vector<1x512xbf16>
    %30 = arith.extf %29 : vector<1x512xbf16> to vector<1x512xf32>
    %31 = vector.broadcast %30 : vector<1x512xf32> to vector<32x512xf32>
    %32 = arith.addf %28, %31 : vector<32x512xf32>
    %cst_14 = arith.constant 5.000000e-01 : f32
    %33 = vector.broadcast %cst_14 : f32 to vector<32x512xf32>
    %34 = arith.mulf %33, %32 : vector<32x512xf32>
    %cst_15 = arith.constant 0.707106769 : f32
    %35 = vector.broadcast %cst_15 : f32 to vector<32x512xf32>
    %36 = arith.mulf %32, %35 : vector<32x512xf32>
    %37 = math.erf %36 : vector<32x512xf32>
    %cst_16 = arith.constant 1.000000e+00 : f32
    %38 = vector.broadcast %cst_16 : f32 to vector<32x512xf32>
    %39 = arith.addf %38, %37 : vector<32x512xf32>
    %40 = arith.mulf %34, %39 : vector<32x512xf32>
    %41 = arith.truncf %40 : vector<32x512xf32> to vector<32x512xbf16>
    %c0_17 = arith.constant 0 : index
    %c0_18 = arith.constant 0 : index
    %42 = vector.load %arg6[%c0_17, %c0_18] : memref<512x128xbf16, #tpu.memory_space<vmem>>, vector<512x128xbf16>
    %cst_19 = arith.constant dense<0.000000e+00> : vector<32x128xf32>
    %43 = tpu.matmul %41, %42, %cst_19 {dimension_numbers = #tpu.dot_dimension_numbers<[1], [0], [0], [1], [0, 0, 1, 1], [], []>} : vector<32x512xbf16>, vector<512x128xbf16>, vector<32x128xf32> -> vector<32x128xf32>
    %c0_20 = arith.constant 0 : index
    %c0_21 = arith.constant 0 : index
    %44 = vector.load %arg7[%c0_20, %c0_21] : memref<1x128xbf16, #tpu.memory_space<vmem>>, vector<1x128xbf16>
    %45 = arith.extf %44 : vector<1x128xbf16> to vector<1x128xf32>
    %46 = vector.broadcast %45 : vector<1x128xf32> to vector<32x128xf32>
    %47 = arith.addf %43, %46 : vector<32x128xf32>
    %48 = arith.addf %1, %47 : vector<32x128xf32>
    %49 = arith.truncf %48 : vector<32x128xf32> to vector<32x128xbf16>
    %c0_22 = arith.constant 0 : index
    %c0_23 = arith.constant 0 : index
    %50 = vector.load %arg8[%c0_22, %c0_23] : memref<32x128xbf16, #tpu.memory_space<vmem>>, vector<32x128xbf16>
    tpu.vector_store %arg8[%c0_22, %c0_23], %49 {strides = array<i32>} : memref<32x128xbf16, #tpu.memory_space<vmem>>, vector<32x128xbf16>,
    return
  }
  func.func @transform_0(%arg0: i32) -> (i32, i32) {
    %c0_i32 = arith.constant 0 : i32
    %c0_i32_0 = arith.constant 0 : i32
    return %arg0, %c0_i32 : i32, i32
  }
  func.func @transform_1(%arg0: i32) -> (i32, i32) {
    %c0_i32 = arith.constant 0 : i32
    %c0_i32_0 = arith.constant 0 : i32
    %c0_i32_1 = arith.constant 0 : i32
    return %c0_i32, %c0_i32_0 : i32, i32
  }
  func.func @transform_2(%arg0: i32) -> (i32, i32) {
    %c0_i32 = arith.constant 0 : i32
    %c0_i32_0 = arith.constant 0 : i32
    %c0_i32_1 = arith.constant 0 : i32
    return %c0_i32, %c0_i32_0 : i32, i32
  }
  func.func @transform_3(%arg0: i32) -> (i32, i32) {
    %c0_i32 = arith.constant 0 : i32
    %c0_i32_0 = arith.constant 0 : i32
    %c0_i32_1 = arith.constant 0 : i32
    return %c0_i32, %c0_i32_0 : i32, i32
  }
  func.func @transform_4(%arg0: i32) -> (i32, i32) {
    %c0_i32 = arith.constant 0 : i32
    %c0_i32_0 = arith.constant 0 : i32
    %c0_i32_1 = arith.constant 0 : i32
    return %c0_i32, %c0_i32_0 : i32, i32
  }
  func.func @transform_5(%arg0: i32) -> (i32, i32) {
    %c0_i32 = arith.constant 0 : i32
    %c0_i32_0 = arith.constant 0 : i32
    %c0_i32_1 = arith.constant 0 : i32
    return %c0_i32, %c0_i32_0 : i32, i32
  }
  func.func @transform_6(%arg0: i32) -> (i32, i32) {
    %c0_i32 = arith.constant 0 : i32
    %c0_i32_0 = arith.constant 0 : i32
    %c0_i32_1 = arith.constant 0 : i32
    return %c0_i32, %c0_i32_0 : i32, i32
  }
  func.func @transform_7(%arg0: i32) -> (i32, i32) {
    %c0_i32 = arith.constant 0 : i32
    %c0_i32_0 = arith.constant 0 : i32
    return %arg0, %c0_i32 : i32, i32
  }
}

module attributes {stable_mosaic.version = 11 : i64} {
  func.func @_ln_linear_kernel(%arg0: i32, %arg1: memref<16x128xbf16, #tpu.memory_space<vmem>>, %arg2: memref<1x128xbf16, #tpu.memory_space<vmem>>, %arg3: memref<1x128xbf16, #tpu.memory_space<vmem>>, %arg4: memref<128x1xbf16, #tpu.memory_space<vmem>>, %arg5: memref<1x1xbf16, #tpu.memory_space<vmem>>, %arg6: memref<16x1xf32, #tpu.memory_space<vmem>>) attributes {dimension_semantics = [#tpu.dimension_semantics<parallel>], iteration_bounds = array<i64: 1>, scalar_prefetch = 0 : i64, scratch_operands = 0 : i64, tpu.core_type = #tpu.core_type<tc>, window_params = [{transform_indices = @transform_0, window_bounds = array<i64: 16, 128>}, {pipeline_mode = #tpu.pipeline_mode<synchronous>, transform_indices = @transform_1, window_bounds = array<i64: 1, 128>}, {pipeline_mode = #tpu.pipeline_mode<synchronous>, transform_indices = @transform_2, window_bounds = array<i64: 1, 128>}, {pipeline_mode = #tpu.pipeline_mode<synchronous>, transform_indices = @transform_3, window_bounds = array<i64: 128, 1>}, {pipeline_mode = #tpu.pipeline_mode<synchronous>, transform_indices = @transform_4, window_bounds = array<i64: 1, 1>}, {transform_indices = @transform_5, window_bounds = array<i64: 16, 1>}]} {
    %c0 = arith.constant 0 : index
    %c0_0 = arith.constant 0 : index
    %0 = vector.load %arg1[%c0, %c0_0] : memref<16x128xbf16, #tpu.memory_space<vmem>>, vector<16x128xbf16>
    %1 = arith.extf %0 : vector<16x128xbf16> to vector<16x128xf32>
    %cst = arith.constant dense<0.000000e+00> : vector<16xf32>
    %2 = vector.multi_reduction <add>, %1, %cst [1] : vector<16x128xf32> to vector<16xf32>
    %3 = vector.shape_cast %2 : vector<16xf32> to vector<16x1xf32>
    %cst_1 = arith.constant 1.280000e+02 : f32
    %4 = vector.broadcast %cst_1 : f32 to vector<16x1xf32>
    %5 = arith.divf %3, %4 : vector<16x1xf32>
    %6 = vector.broadcast %5 : vector<16x1xf32> to vector<16x128xf32>
    %7 = arith.subf %1, %6 : vector<16x128xf32>
    %8 = arith.mulf %7, %7 : vector<16x128xf32>
    %cst_2 = arith.constant dense<0.000000e+00> : vector<16xf32>
    %9 = vector.multi_reduction <add>, %8, %cst_2 [1] : vector<16x128xf32> to vector<16xf32>
    %10 = vector.shape_cast %9 : vector<16xf32> to vector<16x1xf32>
    %cst_3 = arith.constant 1.280000e+02 : f32
    %11 = vector.broadcast %cst_3 : f32 to vector<16x1xf32>
    %12 = arith.divf %10, %11 : vector<16x1xf32>
    %cst_4 = arith.constant 9.99999974E-6 : f32
    %13 = vector.broadcast %cst_4 : f32 to vector<16x1xf32>
    %14 = arith.addf %12, %13 : vector<16x1xf32>
    %15 = math.rsqrt %14 : vector<16x1xf32>
    %16 = vector.broadcast %15 : vector<16x1xf32> to vector<16x128xf32>
    %17 = arith.mulf %7, %16 : vector<16x128xf32>
    %c0_5 = arith.constant 0 : index
    %c0_6 = arith.constant 0 : index
    %18 = vector.load %arg2[%c0_5, %c0_6] : memref<1x128xbf16, #tpu.memory_space<vmem>>, vector<1x128xbf16>
    %19 = arith.extf %18 : vector<1x128xbf16> to vector<1x128xf32>
    %20 = vector.broadcast %19 : vector<1x128xf32> to vector<16x128xf32>
    %21 = arith.mulf %17, %20 : vector<16x128xf32>
    %c0_7 = arith.constant 0 : index
    %c0_8 = arith.constant 0 : index
    %22 = vector.load %arg3[%c0_7, %c0_8] : memref<1x128xbf16, #tpu.memory_space<vmem>>, vector<1x128xbf16>
    %23 = arith.extf %22 : vector<1x128xbf16> to vector<1x128xf32>
    %24 = vector.broadcast %23 : vector<1x128xf32> to vector<16x128xf32>
    %25 = arith.addf %21, %24 : vector<16x128xf32>
    %26 = arith.truncf %25 : vector<16x128xf32> to vector<16x128xbf16>
    %c0_9 = arith.constant 0 : index
    %c0_10 = arith.constant 0 : index
    %27 = vector.load %arg4[%c0_9, %c0_10] : memref<128x1xbf16, #tpu.memory_space<vmem>>, vector<128x1xbf16>
    %cst_11 = arith.constant dense<0.000000e+00> : vector<16x1xf32>
    %28 = tpu.matmul %26, %27, %cst_11 {dimension_numbers = #tpu.dot_dimension_numbers<[1], [0], [0], [1], [0, 0, 1, 1], [], []>} : vector<16x128xbf16>, vector<128x1xbf16>, vector<16x1xf32> -> vector<16x1xf32>
    %c0_12 = arith.constant 0 : index
    %c0_13 = arith.constant 0 : index
    %29 = vector.load %arg5[%c0_12, %c0_13] : memref<1x1xbf16, #tpu.memory_space<vmem>>, vector<1x1xbf16>
    %30 = arith.extf %29 : vector<1x1xbf16> to vector<1x1xf32>
    %31 = vector.broadcast %30 : vector<1x1xf32> to vector<16x1xf32>
    %32 = arith.addf %28, %31 : vector<16x1xf32>
    %c0_14 = arith.constant 0 : index
    %c0_15 = arith.constant 0 : index
    %33 = vector.load %arg6[%c0_14, %c0_15] : memref<16x1xf32, #tpu.memory_space<vmem>>, vector<16x1xf32>
    tpu.vector_store %arg6[%c0_14, %c0_15], %32 {strides = array<i32>} : memref<16x1xf32, #tpu.memory_space<vmem>>, vector<16x1xf32>,
    return
  }
  func.func @transform_0(%arg0: i32) -> (i32, i32) {
    %c0_i32 = arith.constant 0 : i32
    %c0_i32_0 = arith.constant 0 : i32
    return %arg0, %c0_i32 : i32, i32
  }
  func.func @transform_1(%arg0: i32) -> (i32, i32) {
    %c0_i32 = arith.constant 0 : i32
    %c0_i32_0 = arith.constant 0 : i32
    %c0_i32_1 = arith.constant 0 : i32
    return %c0_i32, %c0_i32_0 : i32, i32
  }
  func.func @transform_2(%arg0: i32) -> (i32, i32) {
    %c0_i32 = arith.constant 0 : i32
    %c0_i32_0 = arith.constant 0 : i32
    %c0_i32_1 = arith.constant 0 : i32
    return %c0_i32, %c0_i32_0 : i32, i32
  }
  func.func @transform_3(%arg0: i32) -> (i32, i32) {
    %c0_i32 = arith.constant 0 : i32
    %c0_i32_0 = arith.constant 0 : i32
    %c0_i32_1 = arith.constant 0 : i32
    return %c0_i32, %c0_i32_0 : i32, i32
  }
  func.func @transform_4(%arg0: i32) -> (i32, i32) {
    %c0_i32 = arith.constant 0 : i32
    %c0_i32_0 = arith.constant 0 : i32
    %c0_i32_1 = arith.constant 0 : i32
    return %c0_i32, %c0_i32_0 : i32, i32
  }
  func.func @transform_5(%arg0: i32) -> (i32, i32) {
    %c0_i32 = arith.constant 0 : i32
    %c0_i32_0 = arith.constant 0 : i32
    return %arg0, %c0_i32 : i32, i32
  }
}

</mosaic_0001>

<llo_original>
// kernel: tpu_custom_call.1
$region0: #{tpu_custom_call.1}
  #allocation0 [shape = 'u32[]', space=smem, size = 0x4, offset = 0x4, fixed_abs, tag = 'smem constant byte address 0x4 - core index']
  #allocation1 [shape = 'u32[72,128]{1,0:T(1,128)}', space=vmem, size = 0x9000, scoped, tag = 'internal scratch']
  %s0 = inlined_call_operand.hbm [shape: bf16[32,128], index: 0, kind: input, shape index: {}]
  %s1 = inlined_call_operand.hbm [shape: bf16[128,128], index: 1, kind: input, shape index: {}]
  %s2 = inlined_call_operand.hbm [shape: f32[32,128], index: 2, kind: output, shape index: {}]
  %s3 = sld [smem:[#allocation0]]
  $region49: #{tpu_custom_call.1} parent=0
    _
  %s5 = ssub.s32 1, %s3
  %s6 = scalar_select 0, %s5, %s3
  $region1: #{tpu_custom_call.1} parent=0
    #allocation2 [shape = 'u8[8192]{0}', space=vmem, size = 0x2000, scoped, tag = 'input window, operand 0']
    #allocation3 [shape = 's32[2]{0}', space=sflag, size = 0x8, scoped, tag = 'scoped memory for tpu_custom_call.1']
    #allocation4 [shape = 's32[2]{0}', space=sflag, size = 0x8, scoped, tag = 'scoped memory for tpu_custom_call.1']
    #allocation5 [shape = 'u8[32768]{0}', space=vmem, size = 0x8000, scoped, tag = 'input window, operand 1, single buffered']
    #allocation6 [shape = 's32[1]{0}', space=sflag, size = 0x4, scoped, tag = 'scoped memory for tpu_custom_call.1']
    #allocation7 [shape = 'u8[16384]{0}', space=vmem, size = 0x4000, scoped, tag = 'output window, operand 0']
    %7 = vsyncpa [#allocation3], 0
    %s8 = scalar_lea.sflag [#allocation3], 1
    %9 = vsyncpa %s8, 0
    %10 = vsyncpa [#allocation6], 0
    %11 = vsyncpa [#allocation4], 0
    %s12 = scalar_lea.sflag [#allocation4], 1
    %13 = vsyncpa %s12, 0
    loop: start=0, step=1, limit=4
    $region2: #{tpu_custom_call.1} parent=1 // loop_pre_header
      _
    $region3: #{tpu_custom_call.1} parent=1 // loop_header
      %s15 = sphi 0, %s19
      %p16 = scmp.ge.s32.totalorder %s15, 4
      %s25 = sphi 0, %s27
      %s28 = sphi 0, %s25
      %s29 = sphi 0, %s28
      %s45 = sphi 0, %s29
      %s49 = sphi 0, %s49
      %s51 = sphi 0, %s49
      %s52 = sphi 0, %s51
      %s66 = sphi 0, %s52
      %s72 = sphi 0, %s74
      %s75 = sphi 0, %s72
      %s76 = sphi 0, %s75
      %s92 = sphi 0, %s76
    $region4: #{tpu_custom_call.1} parent=1 // loop_header_branch
      %18 = sbr.rel (%p16) target = $region8
    $region5: #{tpu_custom_call.1} parent=1 // loop_body
      %s20 = ssub.s32 %s15, 1
      %s21 = ssub.s32 %s15, 2
      %s22 = sadd.s32 %s15, 1
      %s23 = ssub.s32 %s15, %s22
      %p24 = scmp.eq.s32.totalorder %s23, 0
      %s26 = sadd.s32 %s25, 1
      %s27 = scalar_select %p24, %s25, %s26
      %p30 = pneg %p24
      %p31 = scmp.eq.s32.totalorder %s15, 1
      %p32 = por %p30, %p31
      %p33 = scmp.ne.s32.totalorder %s25, %s28
      %p34 = scmp.eq.s32.totalorder %s15, 0
      %p35 = por %p33, %p34
      %p36 = scmp.ne.s32.totalorder %s25, %s28
      %p37 = scmp.eq.s32.totalorder %s20, 1
      %p38 = por %p36, %p37
      %p39 = scmp.ne.s32.totalorder %s28, %s29
      %p40 = scmp.eq.s32.totalorder %s20, 0
      %p41 = por %p39, %p40
      %p42 = scmp.ne.s32.totalorder %s28, %s29
      %p43 = scmp.eq.s32.totalorder %s21, 1
      %p44 = por %p42, %p43
      %p46 = scmp.ne.s32.totalorder %s29, %s45
      %p47 = scmp.eq.s32.totalorder %s21, 0
      %p48 = por %p46, %p47
      %s50 = sadd.s32 %s49, 1
      %p53 = scmp.eq.s32.totalorder %s15, 1
      %p54 = scmp.ne.s32.totalorder %s49, %s51
      %p55 = scmp.eq.s32.totalorder %s15, 0
      %p56 = por %p54, %p55
      %p57 = scmp.ne.s32.totalorder %s49, %s51
      %p58 = scmp.eq.s32.totalorder %s20, 1
      %p59 = por %p57, %p58
      %p60 = scmp.ne.s32.totalorder %s51, %s52
      %p61 = scmp.eq.s32.totalorder %s20, 0
      %p62 = por %p60, %p61
      %p63 = scmp.ne.s32.totalorder %s51, %s52
      %p64 = scmp.eq.s32.totalorder %s21, 1
      %p65 = por %p63, %p64
      %p67 = scmp.ne.s32.totalorder %s52, %s66
      %p68 = scmp.eq.s32.totalorder %s21, 0
      %p69 = por %p67, %p68
      %s70 = ssub.s32 %s15, %s22
      %p71 = scmp.eq.s32.totalorder %s70, 0
      %s73 = sadd.s32 %s72, 1
      %s74 = scalar_select %p71, %s72, %s73
      %p77 = pneg %p71
      %p78 = scmp.eq.s32.totalorder %s15, 1
      %p79 = por %p77, %p78
      %p80 = scmp.ne.s32.totalorder %s72, %s75
      %p81 = scmp.eq.s32.totalorder %s15, 0
      %p82 = por %p80, %p81
      %p83 = scmp.ne.s32.totalorder %s72, %s75
      %p84 = scmp.eq.s32.totalorder %s20, 1
      %p85 = por %p83, %p84
      %p86 = scmp.ne.s32.totalorder %s75, %s76
      %p87 = scmp.eq.s32.totalorder %s20, 0
      %p88 = por %p86, %p87
      %p89 = scmp.ne.s32.totalorder %s75, %s76
      %p90 = scmp.eq.s32.totalorder %s21, 1
      %p91 = por %p89, %p90
      %p93 = scmp.ne.s32.totalorder %s76, %s92
      %p94 = scmp.eq.s32.totalorder %s21, 0
      %p95 = por %p93, %p94
      %p96 = scmp.le.s32.totalorder 1, %s15
      %p97 = scmp.lt.s32.totalorder %s15, 3
      %p98 = pnand %p96, %p97
      %p99 = pneg %p98
      // Predicated region
      $region9: #{tpu_custom_call.1} parent=5 // pred_check
        _
      $region10: #{tpu_custom_call.1} parent=5 // pred_check_branch
        %101 = sbr.rel (%p98) target = $region12
      $region11: #{tpu_custom_call.1} parent=5 // pred_region
        %s102 = ssub.s32 %s15, 1
        // Predicated region
        $region13: #{tpu_custom_call.1} parent=11 // pred_check
          %p103 = pneg %p62
        $region14: #{tpu_custom_call.1} parent=11 // pred_check_branch
          %105 = sbr.rel (%p103) target = $region16
        $region15: #{tpu_custom_call.1} parent=11 // pred_region
          %107 = vsyncadd [#allocation6], 0
          %s108 = sshll.u32 %s1, 4
          %s109 = int_to_ptr.hbm [resolvable:$true] %s108
          %s110 = sshll.u32 [#allocation5], 4
          %s111 = int_to_ptr.vmem [resolvable:$true] %s110
          %116 = dma.hbm_to_vmem [thread:$0]  %s109, 1024, %s111, [#allocation6], 64, 64, 4
        $region16: #{tpu_custom_call.1} parent=11 // pred_fallthru
          _
      $region12: #{tpu_custom_call.1} parent=5 // pred_fallthru
        _
      %p117 = scmp.lt.s32.totalorder %s15, 2
      // Predicated region
      $region17: #{tpu_custom_call.1} parent=5 // pred_check
        %p118 = pneg %p117
      $region18: #{tpu_custom_call.1} parent=5 // pred_check_branch
        %120 = sbr.rel (%p118) target = $region20
      $region19: #{tpu_custom_call.1} parent=5 // pred_region
        // Predicated region
        $region21: #{tpu_custom_call.1} parent=19 // pred_check
          %p121 = pneg %p35
        $region22: #{tpu_custom_call.1} parent=19 // pred_check_branch
          %123 = sbr.rel (%p121) target = $region24
        $region23: #{tpu_custom_call.1} parent=19 // pred_region
          %s124 = sand.u32 %s25, 1
          %s125 = scalar_lea.sflag [#allocation3], %s124
          %s126 = sand.u32 %s25, 1
          %s127 = smul.addr %s126, 8
          %s128 = scalar_lea.vmem [#allocation2], %s127
          %s129 = smul.u32 2, %s15
          %131 = vsyncadd %s125, 0
          %s132 = smul.addr %s129, 4
          %s133 = scalar_lea.hbm %s0, %s132
          %s134 = sshll.u32 %s133, 4
          %s135 = int_to_ptr.hbm [resolvable:$true] %s134
          %s136 = sshll.u32 %s128, 4
          %s137 = int_to_ptr.vmem [resolvable:$true] %s136
          %142 = dma.hbm_to_vmem [thread:$0]  %s135, 128, %s137, %s125, 64, 64, 4
        $region24: #{tpu_custom_call.1} parent=19 // pred_fallthru
          _
      $region20: #{tpu_custom_call.1} parent=5 // pred_fallthru
        _
      %p143 = scmp.le.s32.totalorder 1, %s15
      %p144 = scmp.lt.s32.totalorder %s15, 3
      %p145 = pnand %p143, %p144
      %p146 = pneg %p145
      // Predicated region
      $region25: #{tpu_custom_call.1} parent=5 // pred_check
        _
      $region26: #{tpu_custom_call.1} parent=5 // pred_check_branch
        %148 = sbr.rel (%p145) target = $region28
      $region27: #{tpu_custom_call.1} parent=5 // pred_region
        %s149 = ssub.s32 %s15, 1
        %s150 = sand.u32 %s28, 1
        %s151 = scalar_lea.sflag [#allocation3], %s150
        %s152 = sand.u32 %s28, 1
        %s153 = smul.addr %s152, 8
        %s154 = scalar_lea.vmem [#allocation2], %s153
        // Predicated region
        $region29: #{tpu_custom_call.1} parent=27 // pred_check
          %p155 = pneg %p41
        $region30: #{tpu_custom_call.1} parent=27 // pred_check_branch
          %157 = sbr.rel (%p155) target = $region32
        $region31: #{tpu_custom_call.1} parent=27 // pred_region
          %159 = dma.done %s151, 128
        $region32: #{tpu_custom_call.1} parent=27 // pred_fallthru
          _
        // Predicated region
        $region33: #{tpu_custom_call.1} parent=27 // pred_check
          %p160 = pneg %p62
        $region34: #{tpu_custom_call.1} parent=27 // pred_check_branch
          %162 = sbr.rel (%p160) target = $region36
        $region35: #{tpu_custom_call.1} parent=27 // pred_region
          %164 = dma.done [#allocation6], 1024
        $region36: #{tpu_custom_call.1} parent=27 // pred_fallthru
          _
        %s165 = sand.u32 %s28, 1
        %s166 = scalar_lea.sflag [#allocation3], %s165
        %s167 = sand.u32 %s28, 1
        %s168 = smul.addr %s167, 8
        %s169 = scalar_lea.vmem [#allocation2], %s168
        %p170 = pneg %p41
        %p171 = pneg %p38
        %p172 = pneg %p62
        %p173 = pneg %p59
        %p174 = pneg %p88
        %p175 = pneg %p85
        %s176 = sand.u32 %s75, 1
        %s177 = scalar_lea.sflag [#allocation4], %s176
        %s178 = sand.u32 %s75, 1
        %s179 = smul.addr %s178, 16
        %s180 = scalar_lea.vmem [#allocation7], %s179
        %s181 = smul.u32 2, %s20
        %s182 = smul.u32 2, %s20
        %v183 = vld [vmem:[%s154] sm:$0xf]
        %v184 = vld [vmem:[%s154 + $0x4] sm:$0xf]
        %v185 = vld [vmem:[#allocation5] sm:$0xf]
        %v186 = vld [vmem:[#allocation5 + $0x4] sm:$0xf]
        %v187 = vld [vmem:[#allocation5 + $0x8] sm:$0xf]
        %v188 = vld [vmem:[#allocation5 + $0xc] sm:$0xf]
        %v189 = vld [vmem:[#allocation5 + $0x10] sm:$0xf]
        %v190 = vld [vmem:[#allocation5 + $0x14] sm:$0xf]
        %v191 = vld [vmem:[#allocation5 + $0x18] sm:$0xf]
        %v192 = vld [vmem:[#allocation5 + $0x1c] sm:$0xf]
        %v193 = vld [vmem:[#allocation5 + $0x20] sm:$0xf]
        %v194 = vld [vmem:[#allocation5 + $0x24] sm:$0xf]
        %v195 = vld [vmem:[#allocation5 + $0x28] sm:$0xf]
        %v196 = vld [vmem:[#allocation5 + $0x2c] sm:$0xf]
        %v197 = vld [vmem:[#allocation5 + $0x30] sm:$0xf]
        %v198 = vld [vmem:[#allocation5 + $0x34] sm:$0xf]
        %v199 = vld [vmem:[#allocation5 + $0x38] sm:$0xf]
        %v200 = vld [vmem:[#allocation5 + $0x3c] sm:$0xf]
        %v203 = vunpack.c.l.b16 %v183
        %v204 = vunpack.c.l.b16 %v184
        %v205 = vpack.c.b16 %v204, %v203
        %v223 = vunpack.c.l.b16 %v185
        %v224 = vunpack.c.l.b16 %v186
        %v225 = vunpack.c.l.b16 %v187
        %v226 = vunpack.c.l.b16 %v188
        %v227 = vunpack.c.l.b16 %v189
        %v228 = vunpack.c.l.b16 %v190
        %v229 = vunpack.c.l.b16 %v191
        %v230 = vunpack.c.l.b16 %v192
        %v231 = vunpack.c.l.b16 %v193
        %v232 = vunpack.c.l.b16 %v194
        %v233 = vunpack.c.l.b16 %v195
        %v234 = vunpack.c.l.b16 %v196
        %v235 = vunpack.c.l.b16 %v197
        %v236 = vunpack.c.l.b16 %v198
        %v237 = vunpack.c.l.b16 %v199
        %v238 = vunpack.c.l.b16 %v200
        %v239 = vpack.c.b16 %v224, %v223
        %v240 = vpack.c.b16 %v226, %v225
        %v241 = vpack.c.b16 %v228, %v227
        %v242 = vpack.c.b16 %v230, %v229
        %v243 = vpack.c.b16 %v232, %v231
        %v244 = vpack.c.b16 %v234, %v233
        %v245 = vpack.c.b16 %v236, %v235
        %v246 = vpack.c.b16 %v238, %v237
        %255 = vmatpush.bf16.msra.mxu0 %v246
        %256 = vmatpush.bf16.msra.mxu0 %v245
        %257 = vmatpush.bf16.msra.mxu0 %v244
        %258 = vmatpush.bf16.msra.mxu0 %v243
        %259 = vmatpush.bf16.msra.mxu0 %v242
        %260 = vmatpush.bf16.msra.mxu0 %v241
        %261 = vmatpush.bf16.msra.mxu0 %v240
        %262 = vmatpush.bf16.msra.mxu0 %v239
        %263 = vmatmul.bf16.gmra.mxu0 %v205
        %v264 = vpop.f32.mrf.mxu0
        %v265 = vadd.f32 0.0, %v264
        %v266 = vpop.f32.mrf.mxu0
        %v267 = vadd.f32 0.0, %v266
        %268 = vdwg.mxu0
        %269 = vst [vmem:[%s180] sm:$0xff] %v265
        %270 = vst [vmem:[%s180 + $0x8] sm:$0xff] %v267
        %s271 = sand.u32 %s75, 1
        %s272 = scalar_lea.sflag [#allocation4], %s271
        %s273 = sand.u32 %s75, 1
        %s274 = smul.addr %s273, 16
        %s275 = scalar_lea.vmem [#allocation7], %s274
        // Predicated region
        $region37: #{tpu_custom_call.1} parent=27 // pred_check
          %p276 = pneg %p85
        $region38: #{tpu_custom_call.1} parent=27 // pred_check_branch
          %278 = sbr.rel (%p276) target = $region40
        $region39: #{tpu_custom_call.1} parent=27 // pred_region
          %s279 = smul.u32 2, %s20
          %281 = vsyncadd %s272, 0
          %s282 = smul.addr %s279, 8
          %s283 = scalar_lea.hbm %s2, %s282
          %s284 = sshll.u32 %s275, 4
          %s285 = int_to_ptr.vmem [resolvable:$true] %s284
          %s286 = sshll.u32 %s283, 4
          %s287 = int_to_ptr.hbm [resolvable:$true] %s286
          %292 = dma.vmem_to_hbm [thread:$0]  %s285, 256, %s287, %s272, 128, 128, 8
        $region40: #{tpu_custom_call.1} parent=27 // pred_fallthru
          _
      $region28: #{tpu_custom_call.1} parent=5 // pred_fallthru
        _
      %p293 = scmp.le.s32.totalorder 2, %s15
      // Predicated region
      $region41: #{tpu_custom_call.1} parent=5 // pred_check
        %p294 = pneg %p293
      $region42: #{tpu_custom_call.1} parent=5 // pred_check_branch
        %296 = sbr.rel (%p294) target = $region44
      $region43: #{tpu_custom_call.1} parent=5 // pred_region
        %s297 = ssub.s32 %s15, 2
        // Predicated region
        $region45: #{tpu_custom_call.1} parent=43 // pred_check
          %p298 = pneg %p91
        $region46: #{tpu_custom_call.1} parent=43 // pred_check_branch
          %300 = sbr.rel (%p298) target = $region48
        $region47: #{tpu_custom_call.1} parent=43 // pred_region
          %s301 = sand.u32 %s76, 1
          %s302 = scalar_lea.sflag [#allocation4], %s301
          %s303 = sand.u32 %s76, 1
          %s304 = smul.addr %s303, 16
          %s305 = scalar_lea.vmem [#allocation7], %s304
          %307 = dma.done %s302, 256
        $region48: #{tpu_custom_call.1} parent=43 // pred_fallthru
          _
      $region44: #{tpu_custom_call.1} parent=5 // pred_fallthru
        _
    $region6: #{tpu_custom_call.1} parent=1 // loop_footer
      %s19 = sadd.s32 1, %s15
    $region7: #{tpu_custom_call.1} parent=1 // loop_footer_branch
      %14 = sbr.rel target = $region3
    $region8: #{tpu_custom_call.1} parent=1 // loop_exit
      _
    %308 = vsyncpa [#allocation3], 1
    %s309 = scalar_lea.sflag [#allocation3], 1
    %310 = vsyncpa %s309, 1
    %311 = vsyncpa [#allocation6], 1
    %312 = vsyncpa [#allocation4], 1
    %s313 = scalar_lea.sflag [#allocation4], 1
    %314 = vsyncpa %s313, 1

// kernel: discriminator_forward.6
$region0: #{discriminator_forward.6}
  #allocation0 [shape = 'u32[]', space=smem, size = 0x4, offset = 0x4, fixed_abs, tag = 'smem constant byte address 0x4 - core index']
  #allocation1 [shape = 'u32[72,128]{1,0:T(1,128)}', space=vmem, size = 0x9000, scoped, tag = 'internal scratch']
  %s0 = inlined_call_operand.vmem [shape: bf16[64,192], index: 0, kind: input, shape index: {}]
  %s1 = inlined_call_operand.vmem [shape: bf16[192,128], index: 1, kind: input, shape index: {}]
  %s2 = inlined_call_operand.vmem [shape: bf16[1,128], index: 2, kind: input, shape index: {}]
  %s3 = inlined_call_operand.vmem [shape: bf16[64,128], index: 3, kind: output, shape index: {}]
  %s4 = sld [smem:[#allocation0]]
  $region45: #{discriminator_forward.6} parent=0
    _
  %s6 = ssub.s32 1, %s4
  %s7 = scalar_select 0, %s6, %s4
  loop: start=0, step=1, limit=4
  $region2: #{discriminator_forward.6} parent=0 // loop_pre_header
    _
  $region3: #{discriminator_forward.6} parent=0 // loop_header
    %s9 = sphi 0, %s13
    %p10 = scmp.ge.s32.totalorder %s9, 4
    %s19 = sphi 0, %s21
    %s22 = sphi 0, %s19
    %s23 = sphi 0, %s22
    %s39 = sphi 0, %s23
    %s43 = sphi 0, %s43
    %s45 = sphi 0, %s43
    %s46 = sphi 0, %s45
    %s60 = sphi 0, %s46
    %s64 = sphi 0, %s64
    %s66 = sphi 0, %s64
    %s67 = sphi 0, %s66
    %s81 = sphi 0, %s67
    %s87 = sphi 0, %s89
    %s90 = sphi 0, %s87
    %s91 = sphi 0, %s90
    %s107 = sphi 0, %s91
  $region4: #{discriminator_forward.6} parent=0 // loop_header_branch
    %12 = sbr.rel (%p10) target = $region8
  $region5: #{discriminator_forward.6} parent=0 // loop_body
    %s14 = ssub.s32 %s9, 1
    %s15 = ssub.s32 %s9, 2
    %s16 = sadd.s32 %s9, 1
    %s17 = ssub.s32 %s9, %s16
    %p18 = scmp.eq.s32.totalorder %s17, 0
    %s20 = sadd.s32 %s19, 1
    %s21 = scalar_select %p18, %s19, %s20
    %p24 = pneg %p18
    %p25 = scmp.eq.s32.totalorder %s9, 1
    %p26 = por %p24, %p25
    %p27 = scmp.ne.s32.totalorder %s19, %s22
    %p28 = scmp.eq.s32.totalorder %s9, 0
    %p29 = por %p27, %p28
    %p30 = scmp.ne.s32.totalorder %s19, %s22
    %p31 = scmp.eq.s32.totalorder %s14, 1
    %p32 = por %p30, %p31
    %p33 = scmp.ne.s32.totalorder %s22, %s23
    %p34 = scmp.eq.s32.totalorder %s14, 0
    %p35 = por %p33, %p34
    %p36 = scmp.ne.s32.totalorder %s22, %s23
    %p37 = scmp.eq.s32.totalorder %s15, 1
    %p38 = por %p36, %p37
    %p40 = scmp.ne.s32.totalorder %s23, %s39
    %p41 = scmp.eq.s32.totalorder %s15, 0
    %p42 = por %p40, %p41
    %s44 = sadd.s32 %s43, 1
    %p47 = scmp.eq.s32.totalorder %s9, 1
    %p48 = scmp.ne.s32.totalorder %s43, %s45
    %p49 = scmp.eq.s32.totalorder %s9, 0
    %p50 = por %p48, %p49
    %p51 = scmp.ne.s32.totalorder %s43, %s45
    %p52 = scmp.eq.s32.totalorder %s14, 1
    %p53 = por %p51, %p52
    %p54 = scmp.ne.s32.totalorder %s45, %s46
    %p55 = scmp.eq.s32.totalorder %s14, 0
    %p56 = por %p54, %p55
    %p57 = scmp.ne.s32.totalorder %s45, %s46
    %p58 = scmp.eq.s32.totalorder %s15, 1
    %p59 = por %p57, %p58
    %p61 = scmp.ne.s32.totalorder %s46, %s60
    %p62 = scmp.eq.s32.totalorder %s15, 0
    %p63 = por %p61, %p62
    %s65 = sadd.s32 %s64, 1
    %p68 = scmp.eq.s32.totalorder %s9, 1
    %p69 = scmp.ne.s32.totalorder %s64, %s66
    %p70 = scmp.eq.s32.totalorder %s9, 0
    %p71 = por %p69, %p70
    %p72 = scmp.ne.s32.totalorder %s64, %s66
    %p73 = scmp.eq.s32.totalorder %s14, 1
    %p74 = por %p72, %p73
    %p75 = scmp.ne.s32.totalorder %s66, %s67
    %p76 = scmp.eq.s32.totalorder %s14, 0
    %p77 = por %p75, %p76
    %p78 = scmp.ne.s32.totalorder %s66, %s67
    %p79 = scmp.eq.s32.totalorder %s15, 1
    %p80 = por %p78, %p79
    %p82 = scmp.ne.s32.totalorder %s67, %s81
    %p83 = scmp.eq.s32.totalorder %s15, 0
    %p84 = por %p82, %p83
    %s85 = ssub.s32 %s9, %s16
    %p86 = scmp.eq.s32.totalorder %s85, 0
    %s88 = sadd.s32 %s87, 1
    %s89 = scalar_select %p86, %s87, %s88
    %p92 = pneg %p86
    %p93 = scmp.eq.s32.totalorder %s9, 1
    %p94 = por %p92, %p93
    %p95 = scmp.ne.s32.totalorder %s87, %s90
    %p96 = scmp.eq.s32.totalorder %s9, 0
    %p97 = por %p95, %p96
    %p98 = scmp.ne.s32.totalorder %s87, %s90
    %p99 = scmp.eq.s32.totalorder %s14, 1
    %p100 = por %p98, %p99
    %p101 = scmp.ne.s32.totalorder %s90, %s91
    %p102 = scmp.eq.s32.totalorder %s14, 0
    %p103 = por %p101, %p102
    %p104 = scmp.ne.s32.totalorder %s90, %s91
    %p105 = scmp.eq.s32.totalorder %s15, 1
    %p106 = por %p104, %p105
    %p108 = scmp.ne.s32.totalorder %s91, %s107
    %p109 = scmp.eq.s32.totalorder %s15, 0
    %p110 = por %p108, %p109
    %p111 = scmp.le.s32.totalorder 1, %s9
    %p112 = scmp.lt.s32.totalorder %s9, 3
    %p113 = pnand %p111, %p112
    %p114 = pneg %p113
    // Predicated region
    $region9: #{discriminator_forward.6} parent=5 // pred_check
      _
    $region10: #{discriminator_forward.6} parent=5 // pred_check_branch
      %116 = sbr.rel (%p113) target = $region12
    $region11: #{discriminator_forward.6} parent=5 // pred_region
      %s117 = ssub.s32 %s9, 1
      // Predicated region
      $region13: #{discriminator_forward.6} parent=11 // pred_check
        %p118 = pneg %p56
      $region14: #{discriminator_forward.6} parent=11 // pred_check_branch
        %120 = sbr.rel (%p118) target = $region16
      $region15: #{discriminator_forward.6} parent=11 // pred_region
        _
      $region16: #{discriminator_forward.6} parent=11 // pred_fallthru
        _
      // Predicated region
      $region17: #{discriminator_forward.6} parent=11 // pred_check
        %p121 = pneg %p77
      $region18: #{discriminator_forward.6} parent=11 // pred_check_branch
        %123 = sbr.rel (%p121) target = $region20
      $region19: #{discriminator_forward.6} parent=11 // pred_region
        _
      $region20: #{discriminator_forward.6} parent=11 // pred_fallthru
        _
    $region12: #{discriminator_forward.6} parent=5 // pred_fallthru
      _
    %p124 = scmp.lt.s32.totalorder %s9, 2
    // Predicated region
    $region21: #{discriminator_forward.6} parent=5 // pred_check
      %p125 = pneg %p124
    $region22: #{discriminator_forward.6} parent=5 // pred_check_branch
      %127 = sbr.rel (%p125) target = $region24
    $region23: #{discriminator_forward.6} parent=5 // pred_region
      // Predicated region
      $region25: #{discriminator_forward.6} parent=23 // pred_check
        %p128 = pneg %p29
      $region26: #{discriminator_forward.6} parent=23 // pred_check_branch
        %130 = sbr.rel (%p128) target = $region28
      $region27: #{discriminator_forward.6} parent=23 // pred_region
        %s131 = smul.u32 4, %s9
        %p132 = scmp.lt.s32.totalorder %s131, 7
        %s133 = scalar_select %p132, %s131, 7
        %s134 = smul.addr %s133, 2
        %s135 = smul.addr %s134, 4
        %s136 = scalar_lea.vmem %s0, %s135
        %s137 = smul.u32 4, %s9
      $region28: #{discriminator_forward.6} parent=23 // pred_fallthru
        _
    $region24: #{discriminator_forward.6} parent=5 // pred_fallthru
      _
    %p138 = scmp.le.s32.totalorder 1, %s9
    %p139 = scmp.lt.s32.totalorder %s9, 3
    %p140 = pnand %p138, %p139
    %p141 = pneg %p140
    // Predicated region
    $region29: #{discriminator_forward.6} parent=5 // pred_check
      _
    $region30: #{discriminator_forward.6} parent=5 // pred_check_branch
      %143 = sbr.rel (%p140) target = $region32
    $region31: #{discriminator_forward.6} parent=5 // pred_region
      %s144 = ssub.s32 %s9, 1
      %s145 = smul.u32 4, %s14
      %p146 = scmp.lt.s32.totalorder %s145, 7
      %s147 = scalar_select %p146, %s145, 7
      %s148 = smul.addr %s147, 2
      %s149 = smul.addr %s148, 4
      %s150 = scalar_lea.vmem %s0, %s149
      %p151 = pneg %p35
      %p152 = pneg %p32
      %p153 = pneg %p56
      %p154 = pneg %p53
      %p155 = pneg %p77
      %p156 = pneg %p74
      %p157 = pneg %p103
      %p158 = pneg %p100
      %s159 = smul.u32 4, %s14
      %p160 = scmp.lt.s32.totalorder %s159, 7
      %s161 = scalar_select %p160, %s159, 7
      %s162 = smul.addr %s161, 4
      %s163 = scalar_lea.vmem %s3, %s162
      %s164 = smul.u32 4, %s14
      %p165 = scmp.lt.s32.totalorder %s164, 7
      %s166 = scalar_select %p165, %s164, 7
      %s167 = smul.addr %s166, 2
      %s168 = smul.addr %s167, 4
      %s169 = scalar_lea.vmem %s0, %s168
      %s170 = smul.u32 4, %s14
      %s171 = smul.u32 4, %s14
      %p172 = scmp.lt.s32.totalorder %s171, 7
      %s173 = scalar_select %p172, %s171, 7
      %s174 = smul.addr %s173, 4
      %s175 = scalar_lea.vmem %s3, %s174
      %s176 = smul.u32 4, %s14
      %v178 = vld [vmem:[%s169] sm:$0xff]
      %v179 = vld [vmem:[%s169 + $0x8] sm:$0xff]
      %v180 = vld [vmem:[%s169 + $0x10] sm:$0xff]
      %v181 = vld [vmem:[%s169 + $0x18] sm:$0xff]
      %v182 = vld [vmem:[%s1] sm:$0xf]
      %v183 = vld [vmem:[%s1 + $0x4] sm:$0xf]
      %v184 = vld [vmem:[%s1 + $0x8] sm:$0xf]
      %v185 = vld [vmem:[%s1 + $0xc] sm:$0xf]
      %v186 = vld [vmem:[%s1 + $0x10] sm:$0xf]
      %v187 = vld [vmem:[%s1 + $0x14] sm:$0xf]
      %v188 = vld [vmem:[%s1 + $0x18] sm:$0xf]
      %v189 = vld [vmem:[%s1 + $0x1c] sm:$0xf]
      %v190 = vld [vmem:[%s1 + $0x20] sm:$0xf]
      %v191 = vld [vmem:[%s1 + $0x24] sm:$0xf]
      %v192 = vld [vmem:[%s1 + $0x28] sm:$0xf]
      %v193 = vld [vmem:[%s1 + $0x2c] sm:$0xf]
      %v194 = vld [vmem:[%s1 + $0x30] sm:$0xf]
      %v195 = vld [vmem:[%s1 + $0x34] sm:$0xf]
      %v196 = vld [vmem:[%s1 + $0x38] sm:$0xf]
      %v197 = vld [vmem:[%s1 + $0x3c] sm:$0xf]
      %v198 = vld [vmem:[%s1 + $0x40] sm:$0xf]
      %v199 = vld [vmem:[%s1 + $0x44] sm:$0xf]
      %v200 = vld [vmem:[%s1 + $0x48] sm:$0xf]
      %v201 = vld [vmem:[%s1 + $0x4c] sm:$0xf]
      %v202 = vld [vmem:[%s1 + $0x50] sm:$0xf]
      %v203 = vld [vmem:[%s1 + $0x54] sm:$0xf]
      %v204 = vld [vmem:[%s1 + $0x58] sm:$0xf]
      %v205 = vld [vmem:[%s1 + $0x5c] sm:$0xf]
      %v206 = vld [vmem:[%s2] sm:$0x1]
      %v207 = vunpack.c.l.bf16 %v206
      %v208 = vperm.slane %v207, 0
      %v213 = vunpack.c.l.b16 %v178
      %v214 = vunpack.c.h.b16 %v178
      %v215 = vunpack.c.l.b16 %v179
      %v216 = vunpack.c.h.b16 %v179
      %v217 = vunpack.c.l.b16 %v180
      %v218 = vunpack.c.h.b16 %v180
      %v219 = vunpack.c.l.b16 %v181
      %v220 = vunpack.c.h.b16 %v181
      %v221 = vpack.c.b16 %v215, %v213
      %v222 = vpack.c.b16 %v216, %v214
      %v223 = vpack.c.b16 %v219, %v217
      %v224 = vpack.c.b16 %v220, %v218
      %v251 = vunpack.c.l.b16 %v182
      %v252 = vunpack.c.l.b16 %v183
      %v253 = vunpack.c.l.b16 %v184
      %v254 = vunpack.c.l.b16 %v185
      %v255 = vunpack.c.l.b16 %v186
      %v256 = vunpack.c.l.b16 %v187
      %v257 = vunpack.c.l.b16 %v188
      %v258 = vunpack.c.l.b16 %v189
      %v259 = vunpack.c.l.b16 %v190
      %v260 = vunpack.c.l.b16 %v191
      %v261 = vunpack.c.l.b16 %v192
      %v262 = vunpack.c.l.b16 %v193
      %v263 = vunpack.c.l.b16 %v194
      %v264 = vunpack.c.l.b16 %v195
      %v265 = vunpack.c.l.b16 %v196
      %v266 = vunpack.c.l.b16 %v197
      %v267 = vunpack.c.l.b16 %v198
      %v268 = vunpack.c.l.b16 %v199
      %v269 = vunpack.c.l.b16 %v200
      %v270 = vunpack.c.l.b16 %v201
      %v271 = vunpack.c.l.b16 %v202
      %v272 = vunpack.c.l.b16 %v203
      %v273 = vunpack.c.l.b16 %v204
      %v274 = vunpack.c.l.b16 %v205
      %v275 = vpack.c.b16 %v252, %v251
      %v276 = vpack.c.b16 %v254, %v253
      %v277 = vpack.c.b16 %v256, %v255
      %v278 = vpack.c.b16 %v258, %v257
      %v279 = vpack.c.b16 %v260, %v259
      %v280 = vpack.c.b16 %v262, %v261
      %v281 = vpack.c.b16 %v264, %v263
      %v282 = vpack.c.b16 %v266, %v265
      %v283 = vpack.c.b16 %v268, %v267
      %v284 = vpack.c.b16 %v270, %v269
      %v285 = vpack.c.b16 %v272, %v271
      %v286 = vpack.c.b16 %v274, %v273
      %vm299 = vcmask 523264
      %v301 = vsel %vm299, %v222, 0
      %v304 = vsel %vm299, %v224, 0
      %306 = vmatpush.bf16.msra.mxu0 %v282
      %307 = vmatpush.bf16.msra.mxu0 %v281
      %308 = vmatpush.bf16.msra.mxu0 %v280
      %309 = vmatpush.bf16.msra.mxu0 %v279
      %310 = vmatpush.bf16.msra.mxu0 %v278
      %311 = vmatpush.bf16.msra.mxu0 %v277
      %312 = vmatpush.bf16.msra.mxu0 %v276
      %313 = vmatpush.bf16.msra.mxu0 %v275
      %314 = vmatmul.bf16.gmra.mxu0 %v221
      %v315 = vpop.f32.mrf.mxu0
      %v316 = vadd.f32 %v208, %v315
      %v317 = vpop.f32.mrf.mxu0
      %v318 = vadd.f32 %v208, %v317
      %319 = vmatmul.bf16.gmra.mxu0 %v223
      %v320 = vpop.f32.mrf.mxu0
      %v321 = vadd.f32 %v208, %v320
      %v322 = vpop.f32.mrf.mxu0
      %v323 = vadd.f32 %v208, %v322
      %324 = vdwg.mxu0
      %325 = vmatpush.bf16.msra.mxu0 0
      %326 = vmatpush.bf16.msra.mxu0 0
      %327 = vmatpush.bf16.msra.mxu0 0
      %328 = vmatpush.bf16.msra.mxu0 0
      %329 = vmatpush.bf16.msra.mxu0 %v286
      %330 = vmatpush.bf16.msra.mxu0 %v285
      %331 = vmatpush.bf16.msra.mxu0 %v284
      %332 = vmatpush.bf16.msra.mxu0 %v283
      %333 = vmatmul.bf16.gmra.mxu0 %v301
      %v334 = vpop.f32.mrf.mxu0
      %v335 = vadd.f32 %v316, %v334
      %v336 = vpop.f32.mrf.mxu0
      %v337 = vadd.f32 %v318, %v336
      %338 = vmatmul.bf16.gmra.mxu0 %v304
      %v339 = vpop.f32.mrf.mxu0
      %v340 = vadd.f32 %v321, %v339
      %v341 = vpop.f32.mrf.mxu0
      %v342 = vadd.f32 %v323, %v341
      %343 = vdwg.mxu0
      %v344 = vpack.c.bf16 %v335, %v335
      %v345 = vpack.c.bf16 %v337, %v337
      %v346 = vpack.c.bf16 %v340, %v340
      %v347 = vpack.c.bf16 %v342, %v342
      %348 = vst [vmem:[%s175] sm:$0xf] %v344
      %349 = vst [vmem:[%s175 + $0x4] sm:$0xf] %v345
      %350 = vst [vmem:[%s175 + $0x8] sm:$0xf] %v346
      %351 = vst [vmem:[%s175 + $0xc] sm:$0xf] %v347
      %s352 = smul.u32 4, %s14
      %p353 = scmp.lt.s32.totalorder %s352, 7
      %s354 = scalar_select %p353, %s352, 7
      %s355 = smul.addr %s354, 4
      %s356 = scalar_lea.vmem %s3, %s355
      // Predicated region
      $region33: #{discriminator_forward.6} parent=31 // pred_check
        %p357 = pneg %p100
      $region34: #{discriminator_forward.6} parent=31 // pred_check_branch
        %359 = sbr.rel (%p357) target = $region36
      $region35: #{discriminator_forward.6} parent=31 // pred_region
        %s360 = smul.u32 4, %s14
      $region36: #{discriminator_forward.6} parent=31 // pred_fallthru
        _
    $region32: #{discriminator_forward.6} parent=5 // pred_fallthru
      _
    %p361 = scmp.le.s32.totalorder 2, %s9
    // Predicated region
    $region37: #{discriminator_forward.6} parent=5 // pred_check
      %p362 = pneg %p361
    $region38: #{discriminator_forward.6} parent=5 // pred_check_branch
      %364 = sbr.rel (%p362) target = $region40
    $region39: #{discriminator_forward.6} parent=5 // pred_region
      %s365 = ssub.s32 %s9, 2
      // Predicated region
      $region41: #{discriminator_forward.6} parent=39 // pred_check
        %p366 = pneg %p106
      $region42: #{discriminator_forward.6} parent=39 // pred_check_branch
        %368 = sbr.rel (%p366) target = $region44
      $region43: #{discriminator_forward.6} parent=39 // pred_region
        %s369 = smul.u32 4, %s15
        %p370 = scmp.lt.s32.totalorder %s369, 7
        %s371 = scalar_select %p370, %s369, 7
        %s372 = smul.addr %s371, 4
        %s373 = scalar_lea.vmem %s3, %s372
      $region44: #{discriminator_forward.6} parent=39 // pred_fallthru
        _
    $region40: #{discriminator_forward.6} parent=5 // pred_fallthru
      _
  $region6: #{discriminator_forward.6} parent=0 // loop_footer
    %s13 = sadd.s32 1, %s9
  $region7: #{discriminator_forward.6} parent=0 // loop_footer_branch
    %8 = sbr.rel target = $region3
  $region8: #{discriminator_forward.6} parent=0 // loop_exit
    _

// kernel: discriminator_forward.7
$region0: #{discriminator_forward.7}
  #allocation0 [shape = 'u32[]', space=smem, size = 0x4, offset = 0x4, fixed_abs, tag = 'smem constant byte address 0x4 - core index']
  #allocation1 [shape = 'u32[72,128]{1,0:T(1,128)}', space=vmem, size = 0x9000, scoped, tag = 'internal scratch']
  %s0 = inlined_call_operand.vmem [shape: bf16[2,32,128], index: 0, kind: input, shape index: {}]
  %s1 = inlined_call_operand.vmem [shape: bf16[1,128], index: 1, kind: input, shape index: {}]
  %s2 = inlined_call_operand.vmem [shape: bf16[1,128], index: 2, kind: input, shape index: {}]
  %s3 = inlined_call_operand.vmem [shape: bf16[128,384], index: 3, kind: input, shape index: {}]
  %s4 = inlined_call_operand.vmem [shape: bf16[128,128], index: 4, kind: input, shape index: {}]
  %s5 = inlined_call_operand.vmem [shape: bf16[1,128], index: 5, kind: input, shape index: {}]
  %s6 = inlined_call_operand.vmem [shape: bf16[2,32,128], index: 6, kind: output, shape index: {}]
  %s7 = sld [smem:[#allocation0]]
  $region57: #{discriminator_forward.7} parent=0
    _
  %s9 = ssub.s32 1, %s7
  %s10 = scalar_select 0, %s9, %s7
  loop: start=0, step=1, limit=4
  $region2: #{discriminator_forward.7} parent=0 // loop_pre_header
    _
  $region3: #{discriminator_forward.7} parent=0 // loop_header
    %s12 = sphi 0, %s16
    %p13 = scmp.ge.s32.totalorder %s12, 4
    %s22 = sphi 0, %s24
    %s25 = sphi 0, %s22
    %s26 = sphi 0, %s25
    %s42 = sphi 0, %s26
    %s46 = sphi 0, %s46
    %s48 = sphi 0, %s46
    %s49 = sphi 0, %s48
    %s63 = sphi 0, %s49
    %s67 = sphi 0, %s67
    %s69 = sphi 0, %s67
    %s70 = sphi 0, %s69
    %s84 = sphi 0, %s70
    %s88 = sphi 0, %s88
    %s90 = sphi 0, %s88
    %s91 = sphi 0, %s90
    %s105 = sphi 0, %s91
    %s109 = sphi 0, %s109
    %s111 = sphi 0, %s109
    %s112 = sphi 0, %s111
    %s126 = sphi 0, %s112
    %s130 = sphi 0, %s130
    %s132 = sphi 0, %s130
    %s133 = sphi 0, %s132
    %s147 = sphi 0, %s133
    %s153 = sphi 0, %s155
    %s156 = sphi 0, %s153
    %s157 = sphi 0, %s156
    %s173 = sphi 0, %s157
  $region4: #{discriminator_forward.7} parent=0 // loop_header_branch
    %15 = sbr.rel (%p13) target = $region8
  $region5: #{discriminator_forward.7} parent=0 // loop_body
    %s17 = ssub.s32 %s12, 1
    %s18 = ssub.s32 %s12, 2
    %s19 = sadd.s32 %s12, 1
    %s20 = ssub.s32 %s12, %s19
    %p21 = scmp.eq.s32.totalorder %s20, 0
    %s23 = sadd.s32 %s22, 1
    %s24 = scalar_select %p21, %s22, %s23
    %p27 = pneg %p21
    %p28 = scmp.eq.s32.totalorder %s12, 1
    %p29 = por %p27, %p28
    %p30 = scmp.ne.s32.totalorder %s22, %s25
    %p31 = scmp.eq.s32.totalorder %s12, 0
    %p32 = por %p30, %p31
    %p33 = scmp.ne.s32.totalorder %s22, %s25
    %p34 = scmp.eq.s32.totalorder %s17, 1
    %p35 = por %p33, %p34
    %p36 = scmp.ne.s32.totalorder %s25, %s26
    %p37 = scmp.eq.s32.totalorder %s17, 0
    %p38 = por %p36, %p37
    %p39 = scmp.ne.s32.totalorder %s25, %s26
    %p40 = scmp.eq.s32.totalorder %s18, 1
    %p41 = por %p39, %p40
    %p43 = scmp.ne.s32.totalorder %s26, %s42
    %p44 = scmp.eq.s32.totalorder %s18, 0
    %p45 = por %p43, %p44
    %s47 = sadd.s32 %s46, 1
    %p50 = scmp.eq.s32.totalorder %s12, 1
    %p51 = scmp.ne.s32.totalorder %s46, %s48
    %p52 = scmp.eq.s32.totalorder %s12, 0
    %p53 = por %p51, %p52
    %p54 = scmp.ne.s32.totalorder %s46, %s48
    %p55 = scmp.eq.s32.totalorder %s17, 1
    %p56 = por %p54, %p55
    %p57 = scmp.ne.s32.totalorder %s48, %s49
    %p58 = scmp.eq.s32.totalorder %s17, 0
    %p59 = por %p57, %p58
    %p60 = scmp.ne.s32.totalorder %s48, %s49
    %p61 = scmp.eq.s32.totalorder %s18, 1
    %p62 = por %p60, %p61
    %p64 = scmp.ne.s32.totalorder %s49, %s63
    %p65 = scmp.eq.s32.totalorder %s18, 0
    %p66 = por %p64, %p65
    %s68 = sadd.s32 %s67, 1
    %p71 = scmp.eq.s32.totalorder %s12, 1
    %p72 = scmp.ne.s32.totalorder %s67, %s69
    %p73 = scmp.eq.s32.totalorder %s12, 0
    %p74 = por %p72, %p73
    %p75 = scmp.ne.s32.totalorder %s67, %s69
    %p76 = scmp.eq.s32.totalorder %s17, 1
    %p77 = por %p75, %p76
    %p78 = scmp.ne.s32.totalorder %s69, %s70
    %p79 = scmp.eq.s32.totalorder %s17, 0
    %p80 = por %p78, %p79
    %p81 = scmp.ne.s32.totalorder %s69, %s70
    %p82 = scmp.eq.s32.totalorder %s18, 1
    %p83 = por %p81, %p82
    %p85 = scmp.ne.s32.totalorder %s70, %s84
    %p86 = scmp.eq.s32.totalorder %s18, 0
    %p87 = por %p85, %p86
    %s89 = sadd.s32 %s88, 1
    %p92 = scmp.eq.s32.totalorder %s12, 1
    %p93 = scmp.ne.s32.totalorder %s88, %s90
    %p94 = scmp.eq.s32.totalorder %s12, 0
    %p95 = por %p93, %p94
    %p96 = scmp.ne.s32.totalorder %s88, %s90
    %p97 = scmp.eq.s32.totalorder %s17, 1
    %p98 = por %p96, %p97
    %p99 = scmp.ne.s32.totalorder %s90, %s91
    %p100 = scmp.eq.s32.totalorder %s17, 0
    %p101 = por %p99, %p100
    %p102 = scmp.ne.s32.totalorder %s90, %s91
    %p103 = scmp.eq.s32.totalorder %s18, 1
    %p104 = por %p102, %p103
    %p106 = scmp.ne.s32.totalorder %s91, %s105
    %p107 = scmp.eq.s32.totalorder %s18, 0
    %p108 = por %p106, %p107
    %s110 = sadd.s32 %s109, 1
    %p113 = scmp.eq.s32.totalorder %s12, 1
    %p114 = scmp.ne.s32.totalorder %s109, %s111
    %p115 = scmp.eq.s32.totalorder %s12, 0
    %p116 = por %p114, %p115
    %p117 = scmp.ne.s32.totalorder %s109, %s111
    %p118 = scmp.eq.s32.totalorder %s17, 1
    %p119 = por %p117, %p118
    %p120 = scmp.ne.s32.totalorder %s111, %s112
    %p121 = scmp.eq.s32.totalorder %s17, 0
    %p122 = por %p120, %p121
    %p123 = scmp.ne.s32.totalorder %s111, %s112
    %p124 = scmp.eq.s32.totalorder %s18, 1
    %p125 = por %p123, %p124
    %p127 = scmp.ne.s32.totalorder %s112, %s126
    %p128 = scmp.eq.s32.totalorder %s18, 0
    %p129 = por %p127, %p128
    %s131 = sadd.s32 %s130, 1
    %p134 = scmp.eq.s32.totalorder %s12, 1
    %p135 = scmp.ne.s32.totalorder %s130, %s132
    %p136 = scmp.eq.s32.totalorder %s12, 0
    %p137 = por %p135, %p136
    %p138 = scmp.ne.s32.totalorder %s130, %s132
    %p139 = scmp.eq.s32.totalorder %s17, 1
    %p140 = por %p138, %p139
    %p141 = scmp.ne.s32.totalorder %s132, %s133
    %p142 = scmp.eq.s32.totalorder %s17, 0
    %p143 = por %p141, %p142
    %p144 = scmp.ne.s32.totalorder %s132, %s133
    %p145 = scmp.eq.s32.totalorder %s18, 1
    %p146 = por %p144, %p145
    %p148 = scmp.ne.s32.totalorder %s133, %s147
    %p149 = scmp.eq.s32.totalorder %s18, 0
    %p150 = por %p148, %p149
    %s151 = ssub.s32 %s12, %s19
    %p152 = scmp.eq.s32.totalorder %s151, 0
    %s154 = sadd.s32 %s153, 1
    %s155 = scalar_select %p152, %s153, %s154
    %p158 = pneg %p152
    %p159 = scmp.eq.s32.totalorder %s12, 1
    %p160 = por %p158, %p159
    %p161 = scmp.ne.s32.totalorder %s153, %s156
    %p162 = scmp.eq.s32.totalorder %s12, 0
    %p163 = por %p161, %p162
    %p164 = scmp.ne.s32.totalorder %s153, %s156
    %p165 = scmp.eq.s32.totalorder %s17, 1
    %p166 = por %p164, %p165
    %p167 = scmp.ne.s32.totalorder %s156, %s157
    %p168 = scmp.eq.s32.totalorder %s17, 0
    %p169 = por %p167, %p168
    %p170 = scmp.ne.s32.totalorder %s156, %s157
    %p171 = scmp.eq.s32.totalorder %s18, 1
    %p172 = por %p170, %p171
    %p174 = scmp.ne.s32.totalorder %s157, %s173
    %p175 = scmp.eq.s32.totalorder %s18, 0
    %p176 = por %p174, %p175
    %p177 = scmp.le.s32.totalorder 1, %s12
    %p178 = scmp.lt.s32.totalorder %s12, 3
    %p179 = pnand %p177, %p178
    %p180 = pneg %p179
    // Predicated region
    $region9: #{discriminator_forward.7} parent=5 // pred_check
      _
    $region10: #{discriminator_forward.7} parent=5 // pred_check_branch
      %182 = sbr.rel (%p179) target = $region12
    $region11: #{discriminator_forward.7} parent=5 // pred_region
      %s183 = ssub.s32 %s12, 1
      // Predicated region
      $region13: #{discriminator_forward.7} parent=11 // pred_check
        %p184 = pneg %p59
      $region14: #{discriminator_forward.7} parent=11 // pred_check_branch
        %186 = sbr.rel (%p184) target = $region16
      $region15: #{discriminator_forward.7} parent=11 // pred_region
        _
      $region16: #{discriminator_forward.7} parent=11 // pred_fallthru
        _
      // Predicated region
      $region17: #{discriminator_forward.7} parent=11 // pred_check
        %p187 = pneg %p80
      $region18: #{discriminator_forward.7} parent=11 // pred_check_branch
        %189 = sbr.rel (%p187) target = $region20
      $region19: #{discriminator_forward.7} parent=11 // pred_region
        _
      $region20: #{discriminator_forward.7} parent=11 // pred_fallthru
        _
      // Predicated region
      $region21: #{discriminator_forward.7} parent=11 // pred_check
        %p190 = pneg %p101
      $region22: #{discriminator_forward.7} parent=11 // pred_check_branch
        %192 = sbr.rel (%p190) target = $region24
      $region23: #{discriminator_forward.7} parent=11 // pred_region
        _
      $region24: #{discriminator_forward.7} parent=11 // pred_fallthru
        _
      // Predicated region
      $region25: #{discriminator_forward.7} parent=11 // pred_check
        %p193 = pneg %p122
      $region26: #{discriminator_forward.7} parent=11 // pred_check_branch
        %195 = sbr.rel (%p193) target = $region28
      $region27: #{discriminator_forward.7} parent=11 // pred_region
        _
      $region28: #{discriminator_forward.7} parent=11 // pred_fallthru
        _
      // Predicated region
      $region29: #{discriminator_forward.7} parent=11 // pred_check
        %p196 = pneg %p143
      $region30: #{discriminator_forward.7} parent=11 // pred_check_branch
        %198 = sbr.rel (%p196) target = $region32
      $region31: #{discriminator_forward.7} parent=11 // pred_region
        _
      $region32: #{discriminator_forward.7} parent=11 // pred_fallthru
        _
    $region12: #{discriminator_forward.7} parent=5 // pred_fallthru
      _
    %p199 = scmp.lt.s32.totalorder %s12, 2
    // Predicated region
    $region33: #{discriminator_forward.7} parent=5 // pred_check
      %p200 = pneg %p199
    $region34: #{discriminator_forward.7} parent=5 // pred_check_branch
      %202 = sbr.rel (%p200) target = $region36
    $region35: #{discriminator_forward.7} parent=5 // pred_region
      // Predicated region
      $region37: #{discriminator_forward.7} parent=35 // pred_check
        %p203 = pneg %p32
      $region38: #{discriminator_forward.7} parent=35 // pred_check_branch
        %205 = sbr.rel (%p203) target = $region40
      $region39: #{discriminator_forward.7} parent=35 // pred_region
        %p206 = scmp.lt.s32.totalorder %s12, 1
        %s207 = scalar_select %p206, %s12, 1
        %s208 = smul.addr %s207, 4
        %s209 = smul.addr %s208, 4
        %s210 = scalar_lea.vmem %s0, %s209
      $region40: #{discriminator_forward.7} parent=35 // pred_fallthru
        _
    $region36: #{discriminator_forward.7} parent=5 // pred_fallthru
      _
    %p211 = scmp.le.s32.totalorder 1, %s12
    %p212 = scmp.lt.s32.totalorder %s12, 3
    %p213 = pnand %p211, %p212
    %p214 = pneg %p213
    // Predicated region
    $region41: #{discriminator_forward.7} parent=5 // pred_check
      _
    $region42: #{discriminator_forward.7} parent=5 // pred_check_branch
      %216 = sbr.rel (%p213) target = $region44
    $region43: #{discriminator_forward.7} parent=5 // pred_region
      %s217 = ssub.s32 %s12, 1
      %p218 = scmp.lt.s32.totalorder %s17, 1
      %s219 = scalar_select %p218, %s17, 1
      %s220 = smul.addr %s219, 4
      %s221 = smul.addr %s220, 4
      %s222 = scalar_lea.vmem %s0, %s221
      %p223 = pneg %p38
      %p224 = pneg %p35
      %p225 = pneg %p59
      %p226 = pneg %p56
      %p227 = pneg %p80
      %p228 = pneg %p77
      %p229 = pneg %p101
      %p230 = pneg %p98
      %p231 = pneg %p122
      %p232 = pneg %p119
      %p233 = pneg %p143
      %p234 = pneg %p140
      %p235 = pneg %p169
      %p236 = pneg %p166
      %p237 = scmp.lt.s32.totalorder %s17, 1
      %s238 = scalar_select %p237, %s17, 1
      %s239 = smul.addr %s238, 4
      %s240 = smul.addr %s239, 4
      %s241 = scalar_lea.vmem %s6, %s240
      %p242 = scmp.lt.s32.totalorder %s17, 1
      %s243 = scalar_select %p242, %s17, 1
      %s244 = smul.addr %s243, 4
      %s245 = smul.addr %s244, 4
      %s246 = scalar_lea.vmem %s0, %s245
      %p247 = scmp.lt.s32.totalorder %s17, 1
      %s248 = scalar_select %p247, %s17, 1
      %s249 = smul.addr %s248, 4
      %s250 = smul.addr %s249, 4
      %s251 = scalar_lea.vmem %s6, %s250
      %v253 = vld [vmem:[%s246] sm:$0xf]
      %v254 = vld [vmem:[%s246 + $0x4] sm:$0xf]
      %v255 = vld [vmem:[%s246 + $0x8] sm:$0xf]
      %v256 = vld [vmem:[%s246 + $0xc] sm:$0xf]
      %v257 = vunpack.c.l.bf16 %v253
      %v258 = vunpack.c.l.bf16 %v254
      %v259 = vunpack.c.l.bf16 %v255
      %v260 = vunpack.c.l.bf16 %v256
      %261 = vadd.xlane.f32.xlu0 %v257
      %v262 = vpop.xlane.xlu0 %261
      %263 = vadd.xlane.f32.xlu0 %v258
      %v264 = vpop.xlane.xlu0 %263
      %265 = vadd.xlane.f32.xlu0 %v259
      %v266 = vpop.xlane.xlu0 %265
      %267 = vadd.xlane.f32.xlu0 %v260
      %v268 = vpop.xlane.xlu0 %267
      %v269 = vrcp.pop 128.0
      %v270 = vmul.f32 128.0, %v269
      %v271 = vsub.f32 1.0, %v270
      %v272 = vmul.f32 %v269, %v271
      %v273 = vadd.f32 %v269, %v272
      %vm274 = vweird.f32 %v269
      %v275 = vsel %vm274, %v269, %v273
      %v276 = vmul.f32 %v262, %v275
      %v277 = vmul.f32 %v264, %v275
      %v278 = vmul.f32 %v266, %v275
      %v279 = vmul.f32 %v268, %v275
      %v280 = vsub.f32 %v257, %v276
      %v281 = vsub.f32 %v258, %v277
      %v282 = vsub.f32 %v259, %v278
      %v283 = vsub.f32 %v260, %v279
      %v284 = vmul.f32 %v280, %v280
      %v285 = vmul.f32 %v281, %v281
      %v286 = vmul.f32 %v282, %v282
      %v287 = vmul.f32 %v283, %v283
      %288 = vadd.xlane.f32.xlu0 %v284
      %v289 = vpop.xlane.xlu0 %288
      %290 = vadd.xlane.f32.xlu0 %v285
      %v291 = vpop.xlane.xlu0 %290
      %292 = vadd.xlane.f32.xlu0 %v286
      %v293 = vpop.xlane.xlu0 %292
      %294 = vadd.xlane.f32.xlu0 %v287
      %v295 = vpop.xlane.xlu0 %294
      %v296 = vmul.f32 %v289, %v275
      %v297 = vmul.f32 %v291, %v275
      %v298 = vmul.f32 %v293, %v275
      %v299 = vmul.f32 %v295, %v275
      %v300 = vadd.f32 %v296, 1e-05
      %v301 = vadd.f32 %v297, 1e-05
      %v302 = vadd.f32 %v298, 1e-05
      %v303 = vadd.f32 %v299, 1e-05
      %v304 = vrsqrt.pop %v300
      %v305 = vmul.f32 %v304, %v300
      %v306 = vmul.f32 %v305, %v304
      %v307 = vmul.f32 0.5, %v306
      %v308 = vsub.f32 1.5, %v307
      %v309 = vmul.f32 %v304, %v308
      %vm310 = vweird.f32 %v300
      %vm311 = vweird.f32 %v304
      %vm312 = vmor %vm310, %vm311
      %v313 = vsel %vm312, %v304, %v309
      %v314 = vrsqrt.pop %v301
      %v315 = vmul.f32 %v314, %v301
      %v316 = vmul.f32 %v315, %v314
      %v317 = vmul.f32 0.5, %v316
      %v318 = vsub.f32 1.5, %v317
      %v319 = vmul.f32 %v314, %v318
      %vm320 = vweird.f32 %v301
      %vm321 = vweird.f32 %v314
      %vm322 = vmor %vm320, %vm321
      %v323 = vsel %vm322, %v314, %v319
      %v324 = vrsqrt.pop %v302
      %v325 = vmul.f32 %v324, %v302
      %v326 = vmul.f32 %v325, %v324
      %v327 = vmul.f32 0.5, %v326
      %v328 = vsub.f32 1.5, %v327
      %v329 = vmul.f32 %v324, %v328
      %vm330 = vweird.f32 %v302
      %vm331 = vweird.f32 %v324
      %vm332 = vmor %vm330, %vm331
      %v333 = vsel %vm332, %v324, %v329
      %v334 = vrsqrt.pop %v303
      %v335 = vmul.f32 %v334, %v303
      %v336 = vmul.f32 %v335, %v334
      %v337 = vmul.f32 0.5, %v336
      %v338 = vsub.f32 1.5, %v337
      %v339 = vmul.f32 %v334, %v338
      %vm340 = vweird.f32 %v303
      %vm341 = vweird.f32 %v334
      %vm342 = vmor %vm340, %vm341
      %v343 = vsel %vm342, %v334, %v339
      %v344 = vmul.f32 %v280, %v313
      %v345 = vmul.f32 %v281, %v323
      %v346 = vmul.f32 %v282, %v333
      %v347 = vmul.f32 %v283, %v343
      %v348 = vld [vmem:[%s1] sm:$0x1]
      %v349 = vunpack.c.l.bf16 %v348
      %v350 = vperm.slane %v349, 0
      %v351 = vmul.f32 %v344, %v350
      %v352 = vmul.f32 %v345, %v350
      %v353 = vmul.f32 %v346, %v350
      %v354 = vmul.f32 %v347, %v350
      %v355 = vld [vmem:[%s2] sm:$0x1]
      %v356 = vunpack.c.l.bf16 %v355
      %v357 = vperm.slane %v356, 0
      %v358 = vadd.f32 %v351, %v357
      %v359 = vadd.f32 %v352, %v357
      %v360 = vadd.f32 %v353, %v357
      %v361 = vadd.f32 %v354, %v357
      %v362 = vpack.c.bf16 %v359, %v358
      %v363 = vpack.c.bf16 %v361, %v360
      %v364 = vld [vmem:[%s3] sm:$0xff]
      %v365 = vld [vmem:[%s3 + $0x8] sm:$0xf]
      %v366 = vld [vmem:[%s3 + $0xc] sm:$0xff]
      %v367 = vld [vmem:[%s3 + $0x14] sm:$0xf]
      %v368 = vld [vmem:[%s3 + $0x18] sm:$0xff]
      %v369 = vld [vmem:[%s3 + $0x20] sm:$0xf]
      %v370 = vld [vmem:[%s3 + $0x24] sm:$0xff]
      %v371 = vld [vmem:[%s3 + $0x2c] sm:$0xf]
      %v372 = vld [vmem:[%s3 + $0x30] sm:$0xff]
      %v373 = vld [vmem:[%s3 + $0x38] sm:$0xf]
      %v374 = vld [vmem:[%s3 + $0x3c] sm:$0xff]
      %v375 = vld [vmem:[%s3 + $0x44] sm:$0xf]
      %v376 = vld [vmem:[%s3 + $0x48] sm:$0xff]
      %v377 = vld [vmem:[%s3 + $0x50] sm:$0xf]
      %v378 = vld [vmem:[%s3 + $0x54] sm:$0xff]
      %v379 = vld [vmem:[%s3 + $0x5c] sm:$0xf]
      %v380 = vld [vmem:[%s3 + $0x60] sm:$0xff]
      %v381 = vld [vmem:[%s3 + $0x68] sm:$0xf]
      %v382 = vld [vmem:[%s3 + $0x6c] sm:$0xff]
      %v383 = vld [vmem:[%s3 + $0x74] sm:$0xf]
      %v384 = vld [vmem:[%s3 + $0x78] sm:$0xff]
      %v385 = vld [vmem:[%s3 + $0x80] sm:$0xf]
      %v386 = vld [vmem:[%s3 + $0x84] sm:$0xff]
      %v387 = vld [vmem:[%s3 + $0x8c] sm:$0xf]
      %v388 = vld [vmem:[%s3 + $0x90] sm:$0xff]
      %v389 = vld [vmem:[%s3 + $0x98] sm:$0xf]
      %v390 = vld [vmem:[%s3 + $0x9c] sm:$0xff]
      %v391 = vld [vmem:[%s3 + $0xa4] sm:$0xf]
      %v392 = vld [vmem:[%s3 + $0xa8] sm:$0xff]
      %v393 = vld [vmem:[%s3 + $0xb0] sm:$0xf]
      %v394 = vld [vmem:[%s3 + $0xb4] sm:$0xff]
      %v395 = vld [vmem:[%s3 + $0xbc] sm:$0xf]
      %v428 = vunpack.c.l.b16 %v364
      %v429 = vunpack.c.h.b16 %v364
      %v430 = vunpack.c.l.b16 %v365
      %v431 = vunpack.c.l.b16 %v366
      %v432 = vunpack.c.h.b16 %v366
      %v433 = vunpack.c.l.b16 %v367
      %v434 = vunpack.c.l.b16 %v368
      %v435 = vunpack.c.h.b16 %v368
      %v436 = vunpack.c.l.b16 %v369
      %v437 = vunpack.c.l.b16 %v370
      %v438 = vunpack.c.h.b16 %v370
      %v439 = vunpack.c.l.b16 %v371
      %v440 = vunpack.c.l.b16 %v372
      %v441 = vunpack.c.h.b16 %v372
      %v442 = vunpack.c.l.b16 %v373
      %v443 = vunpack.c.l.b16 %v374
      %v444 = vunpack.c.h.b16 %v374
      %v445 = vunpack.c.l.b16 %v375
      %v446 = vunpack.c.l.b16 %v376
      %v447 = vunpack.c.h.b16 %v376
      %v448 = vunpack.c.l.b16 %v377
      %v449 = vunpack.c.l.b16 %v378
      %v450 = vunpack.c.h.b16 %v378
      %v451 = vunpack.c.l.b16 %v379
      %v452 = vunpack.c.l.b16 %v380
      %v453 = vunpack.c.h.b16 %v380
      %v454 = vunpack.c.l.b16 %v381
      %v455 = vunpack.c.l.b16 %v382
      %v456 = vunpack.c.h.b16 %v382
      %v457 = vunpack.c.l.b16 %v383
      %v458 = vunpack.c.l.b16 %v384
      %v459 = vunpack.c.h.b16 %v384
      %v460 = vunpack.c.l.b16 %v385
      %v461 = vunpack.c.l.b16 %v386
      %v462 = vunpack.c.h.b16 %v386
      %v463 = vunpack.c.l.b16 %v387
      %v464 = vunpack.c.l.b16 %v388
      %v465 = vunpack.c.h.b16 %v388
      %v466 = vunpack.c.l.b16 %v389
      %v467 = vunpack.c.l.b16 %v390
      %v468 = vunpack.c.h.b16 %v390
      %v469 = vunpack.c.l.b16 %v391
      %v470 = vunpack.c.l.b16 %v392
      %v471 = vunpack.c.h.b16 %v392
      %v472 = vunpack.c.l.b16 %v393
      %v473 = vunpack.c.l.b16 %v394
      %v474 = vunpack.c.h.b16 %v394
      %v475 = vunpack.c.l.b16 %v395
      %v476 = vpack.c.b16 %v431, %v428
      %v477 = vpack.c.b16 %v432, %v429
      %v478 = vpack.c.b16 %v433, %v430
      %v479 = vpack.c.b16 %v437, %v434
      %v480 = vpack.c.b16 %v438, %v435
      %v481 = vpack.c.b16 %v439, %v436
      %v482 = vpack.c.b16 %v443, %v440
      %v483 = vpack.c.b16 %v444, %v441
      %v484 = vpack.c.b16 %v445, %v442
      %v485 = vpack.c.b16 %v449, %v446
      %v486 = vpack.c.b16 %v450, %v447
      %v487 = vpack.c.b16 %v451, %v448
      %v488 = vpack.c.b16 %v455, %v452
      %v489 = vpack.c.b16 %v456, %v453
      %v490 = vpack.c.b16 %v457, %v454
      %v491 = vpack.c.b16 %v461, %v458
      %v492 = vpack.c.b16 %v462, %v459
      %v493 = vpack.c.b16 %v463, %v460
      %v494 = vpack.c.b16 %v467, %v464
      %v495 = vpack.c.b16 %v468, %v465
      %v496 = vpack.c.b16 %v469, %v466
      %v497 = vpack.c.b16 %v473, %v470
      %v498 = vpack.c.b16 %v474, %v471
      %v499 = vpack.c.b16 %v475, %v472
      %524 = vmatpush.bf16.msra.mxu0 %v497
      %525 = vmatpush.bf16.msra.mxu0 %v494
      %526 = vmatpush.bf16.msra.mxu0 %v491
      %527 = vmatpush.bf16.msra.mxu0 %v488
      %528 = vmatpush.bf16.msra.mxu0 %v485
      %529 = vmatpush.bf16.msra.mxu0 %v482
      %530 = vmatpush.bf16.msra.mxu0 %v479
      %531 = vmatpush.bf16.msra.mxu0 %v476
      %532 = vmatmul.bf16.gmra.mxu0 %v362
      %v533 = vpop.f32.mrf.mxu0
      %v534 = vadd.f32 0.0, %v533
      %v535 = vpop.f32.mrf.mxu0
      %v536 = vadd.f32 0.0, %v535
      %537 = vmatmul.bf16.gmra.mxu0 %v363
      %v538 = vpop.f32.mrf.mxu0
      %v539 = vadd.f32 0.0, %v538
      %v540 = vpop.f32.mrf.mxu0
      %v541 = vadd.f32 0.0, %v540
      %542 = vdwg.mxu0
      %543 = vmatpush.bf16.msra.mxu0 %v498
      %544 = vmatpush.bf16.msra.mxu0 %v495
      %545 = vmatpush.bf16.msra.mxu0 %v492
      %546 = vmatpush.bf16.msra.mxu0 %v489
      %547 = vmatpush.bf16.msra.mxu0 %v486
      %548 = vmatpush.bf16.msra.mxu0 %v483
      %549 = vmatpush.bf16.msra.mxu0 %v480
      %550 = vmatpush.bf16.msra.mxu0 %v477
      %551 = vmatmul.bf16.gmra.mxu0 %v362
      %v552 = vpop.f32.mrf.mxu0
      %v553 = vadd.f32 0.0, %v552
      %v554 = vpop.f32.mrf.mxu0
      %v555 = vadd.f32 0.0, %v554
      %556 = vmatmul.bf16.gmra.mxu0 %v363
      %v557 = vpop.f32.mrf.mxu0
      %v558 = vadd.f32 0.0, %v557
      %v559 = vpop.f32.mrf.mxu0
      %v560 = vadd.f32 0.0, %v559
      %561 = vdwg.mxu0
      %562 = vmatpush.bf16.msra.mxu0 %v499
      %563 = vmatpush.bf16.msra.mxu0 %v496
      %564 = vmatpush.bf16.msra.mxu0 %v493
      %565 = vmatpush.bf16.msra.mxu0 %v490
      %566 = vmatpush.bf16.msra.mxu0 %v487
      %567 = vmatpush.bf16.msra.mxu0 %v484
      %568 = vmatpush.bf16.msra.mxu0 %v481
      %569 = vmatpush.bf16.msra.mxu0 %v478
      %570 = vmatmul.bf16.gmra.mxu0 %v362
      %v571 = vpop.f32.mrf.mxu0
      %v572 = vadd.f32 0.0, %v571
      %v573 = vpop.f32.mrf.mxu0
      %v574 = vadd.f32 0.0, %v573
      %575 = vmatmul.bf16.gmra.mxu0 %v363
      %v576 = vpop.f32.mrf.mxu0
      %v577 = vadd.f32 0.0, %v576
      %v578 = vpop.f32.mrf.mxu0
      %v579 = vadd.f32 0.0, %v578
      %580 = vdwg.mxu0
      %v581 = vlaneseq
      %v582 = vand.u32 %v581, 127
      %vm583 = vcmp.lt.s32.totalorder %v582, 26
      %v584 = vmul.f32 %v534, %v534
      %v585 = vmul.f32 %v536, %v536
      %v586 = vmul.f32 %v539, %v539
      %v587 = vmul.f32 %v541, %v541
      %vm588 = vcmask 261120
      %v589 = vsel %vm588, %v584, 0.0
      %590 = vadd.xlane.f32.xlu0 %v589
      %v591 = vpop.xlane.xlu0 %590
      %v592 = vsel %vm588, %v585, 0.0
      %593 = vadd.xlane.f32.xlu0 %v592
      %v594 = vpop.xlane.xlu0 %593
      %v595 = vsel %vm588, %v586, 0.0
      %596 = vadd.xlane.f32.xlu0 %v595
      %v597 = vpop.xlane.xlu0 %596
      %v598 = vsel %vm588, %v587, 0.0
      %599 = vadd.xlane.f32.xlu0 %v598
      %v600 = vpop.xlane.xlu0 %599
      %v601 = vmul.f32 %v553, %v553
      %v602 = vmul.f32 %v555, %v555
      %v603 = vmul.f32 %v558, %v558
      %v604 = vmul.f32 %v560, %v560
      %v606 = vsel %vm588, 1.0, 0
      %v609 = vsel %vm588, %v601, 0
      %v612 = vsel %vm588, %v602, 0
      %v615 = vsel %vm588, %v603, 0
      %v618 = vsel %vm588, %v604, 0
      %620 = vmatpush.xpose.msra.mxu0 0.0
      %621 = vmatpush.xpose.msra.mxu0 0.0
      %622 = vmatpush.xpose.msra.mxu0 0.0
      %623 = vmatpush.xpose.msra.mxu0 0.0
      %624 = vmatpush.xpose.msra.mxu0 0.0
      %625 = vmatpush.xpose.msra.mxu0 0.0
      %626 = vmatpush.xpose.msra.mxu0 0.0
      %627 = vmatpush.xpose.msra.mxu0 0.0
      %628 = vmatpush.xpose.msra.mxu0 0.0
      %629 = vmatpush.xpose.msra.mxu0 0.0
      %630 = vmatpush.xpose.msra.mxu0 0.0
      %631 = vmatpush.xpose.msra.mxu0 0.0
      %632 = vmatpush.xpose.msra.mxu0 %v618
      %633 = vmatpush.xpose.msra.mxu0 %v615
      %634 = vmatpush.xpose.msra.mxu0 %v612
      %635 = vmatpush.xpose.msra.mxu0 %v609
      %636 = vmatmul.f32.gmra.mxu0 %v606
      %v637 = vpop.f32.mrf.mxu0
      %v638 = vadd.f32 0.0, %v637
      %639 = vdwg.mxu0
      %v641 = vsel %vm588, %v534, 0
      %v644 = vsel %vm588, %v536, 0
      %v647 = vsel %vm588, %v539, 0
      %v650 = vsel %vm588, %v541, 0
      %v653 = vsel %vm588, %v553, 0
      %v656 = vsel %vm588, %v555, 0
      %v659 = vsel %vm588, %v558, 0
      %v662 = vsel %vm588, %v560, 0
      %664 = vmatpush.xpose.msra.mxu0 0.0
      %665 = vmatpush.xpose.msra.mxu0 0.0
      %666 = vmatpush.xpose.msra.mxu0 0.0
      %667 = vmatpush.xpose.msra.mxu0 0.0
      %668 = vmatpush.xpose.msra.mxu0 0.0
      %669 = vmatpush.xpose.msra.mxu0 0.0
      %670 = vmatpush.xpose.msra.mxu0 0.0
      %671 = vmatpush.xpose.msra.mxu0 0.0
      %672 = vmatpush.xpose.msra.mxu0 0.0
      %673 = vmatpush.xpose.msra.mxu0 0.0
      %674 = vmatpush.xpose.msra.mxu0 0.0
      %675 = vmatpush.xpose.msra.mxu0 0.0
      %676 = vmatpush.xpose.msra.mxu0 %v662
      %677 = vmatpush.xpose.msra.mxu0 %v659
      %678 = vmatpush.xpose.msra.mxu0 %v656
      %679 = vmatpush.xpose.msra.mxu0 %v653
      %680 = vmatmul.f32.gmra.mxu0 %v641
      %v681 = vpop.f32.mrf.mxu0
      %v682 = vadd.f32 0.0, %v681
      %683 = vmatmul.f32.gmra.mxu0 %v644
      %v684 = vpop.f32.mrf.mxu0
      %v685 = vadd.f32 0.0, %v684
      %686 = vmatmul.f32.gmra.mxu0 %v647
      %v687 = vpop.f32.mrf.mxu0
      %v688 = vadd.f32 0.0, %v687
      %689 = vmatmul.f32.gmra.mxu0 %v650
      %v690 = vpop.f32.mrf.mxu0
      %v691 = vadd.f32 0.0, %v690
      %692 = vdwg.mxu0
      %v693 = vperm.slane %v638, 0
      %v694 = vadd.f32 %v591, %v693
      %v695 = vadd.f32 %v594, %v693
      %v696 = vadd.f32 %v597, %v693
      %v697 = vadd.f32 %v600, %v693
      %v698 = vmul.f32 %v682, 2.0
      %v699 = vmul.f32 %v685, 2.0
      %v700 = vmul.f32 %v688, 2.0
      %v701 = vmul.f32 %v691, 2.0
      %v702 = vsub.f32 %v694, %v698
      %v703 = vsub.f32 %v695, %v699
      %v704 = vsub.f32 %v696, %v700
      %v705 = vsub.f32 %v697, %v701
      %v706 = vmax.f32 %v702, 0.0
      %v707 = vmax.f32 %v703, 0.0
      %v708 = vmax.f32 %v704, 0.0
      %v709 = vmax.f32 %v705, 0.0
      %v710 = vrsqrt.pop %v706
      %v711 = vmul.f32 %v710, %v706
      %v712 = vmul.f32 %v711, %v710
      %v713 = vmul.f32 0.5, %v712
      %v714 = vsub.f32 1.5, %v713
      %v715 = vmul.f32 %v710, %v714
      %v716 = vmul.f32 %v706, %v715
      %vm717 = vcmp.eq.f32.partialorder %v706, inf
      %v718 = vsel %vm717, %v706, %v716
      %vm719 = vcmp.eq.f32.partialorder %v706, 0.0
      %v720 = vand.u32 %v706, 2147483648
      %v721 = vsel %vm719, %v720, %v718
      %v722 = vrsqrt.pop %v707
      %v723 = vmul.f32 %v722, %v707
      %v724 = vmul.f32 %v723, %v722
      %v725 = vmul.f32 0.5, %v724
      %v726 = vsub.f32 1.5, %v725
      %v727 = vmul.f32 %v722, %v726
      %v728 = vmul.f32 %v707, %v727
      %vm729 = vcmp.eq.f32.partialorder %v707, inf
      %v730 = vsel %vm729, %v707, %v728
      %vm731 = vcmp.eq.f32.partialorder %v707, 0.0
      %v732 = vand.u32 %v707, 2147483648
      %v733 = vsel %vm731, %v732, %v730
      %v734 = vrsqrt.pop %v708
      %v735 = vmul.f32 %v734, %v708
      %v736 = vmul.f32 %v735, %v734
      %v737 = vmul.f32 0.5, %v736
      %v738 = vsub.f32 1.5, %v737
      %v739 = vmul.f32 %v734, %v738
      %v740 = vmul.f32 %v708, %v739
      %vm741 = vcmp.eq.f32.partialorder %v708, inf
      %v742 = vsel %vm741, %v708, %v740
      %vm743 = vcmp.eq.f32.partialorder %v708, 0.0
      %v744 = vand.u32 %v708, 2147483648
      %v745 = vsel %vm743, %v744, %v742
      %v746 = vrsqrt.pop %v709
      %v747 = vmul.f32 %v746, %v709
      %v748 = vmul.f32 %v747, %v746
      %v749 = vmul.f32 0.5, %v748
      %v750 = vsub.f32 1.5, %v749
      %v751 = vmul.f32 %v746, %v750
      %v752 = vmul.f32 %v709, %v751
      %vm753 = vcmp.eq.f32.partialorder %v709, inf
      %v754 = vsel %vm753, %v709, %v752
      %vm755 = vcmp.eq.f32.partialorder %v709, 0.0
      %v756 = vand.u32 %v709, 2147483648
      %v757 = vsel %vm755, %v756, %v754
      %v758 = vmul.f32 %v721, 0.088388346
      %v759 = vmul.f32 %v733, 0.088388346
      %v760 = vmul.f32 %v745, 0.088388346
      %v761 = vmul.f32 %v757, 0.088388346
      %v762 = vsel %vm583, %v758, -1e+30
      %v763 = vsel %vm583, %v759, -1e+30
      %v764 = vsel %vm583, %v760, -1e+30
      %v765 = vsel %vm583, %v761, -1e+30
      %v766 = vsel %vm588, %v762, -inf
      %767 = vmax.xlane.f32.xlu0 %v766
      %v768 = vpop.xlane.xlu0 %767
      %v769 = vsel %vm588, %v763, -inf
      %770 = vmax.xlane.f32.xlu0 %v769
      %v771 = vpop.xlane.xlu0 %770
      %v772 = vsel %vm588, %v764, -inf
      %773 = vmax.xlane.f32.xlu0 %v772
      %v774 = vpop.xlane.xlu0 %773
      %v775 = vsel %vm588, %v765, -inf
      %776 = vmax.xlane.f32.xlu0 %v775
      %v777 = vpop.xlane.xlu0 %776
      %v778 = vsub.f32 %v762, %v768
      %v779 = vsub.f32 %v763, %v771
      %v780 = vsub.f32 %v764, %v774
      %v781 = vsub.f32 %v765, %v777
      %v782 = vmul.f32 %v778, 1.442695
      %v783 = vpow.pop %v782
      %v784 = vmul.f32 %v779, 1.442695
      %v785 = vpow.pop %v784
      %v786 = vmul.f32 %v780, 1.442695
      %v787 = vpow.pop %v786
      %v788 = vmul.f32 %v781, 1.442695
      %v789 = vpow.pop %v788
      %v790 = vsel %vm588, %v783, 0.0
      %791 = vadd.xlane.f32.xlu0 %v790
      %v792 = vpop.xlane.xlu0 %791
      %v793 = vsel %vm588, %v785, 0.0
      %794 = vadd.xlane.f32.xlu0 %v793
      %v795 = vpop.xlane.xlu0 %794
      %v796 = vsel %vm588, %v787, 0.0
      %797 = vadd.xlane.f32.xlu0 %v796
      %v798 = vpop.xlane.xlu0 %797
      %v799 = vsel %vm588, %v789, 0.0
      %800 = vadd.xlane.f32.xlu0 %v799
      %v801 = vpop.xlane.xlu0 %800
      %v802 = vrcp.pop %v792
      %v803 = vrcp.pop %v795
      %v804 = vrcp.pop %v798
      %v805 = vrcp.pop %v801
      %v806 = vmul.f32 %v783, %v802
      %v807 = vmul.f32 %v785, %v803
      %v808 = vmul.f32 %v787, %v804
      %v809 = vmul.f32 %v789, %v805
      %v810 = vpack.c.bf16 %v807, %v806
      %v811 = vpack.c.bf16 %v809, %v808
      %v812 = vpack.c.bf16 %v574, %v572
      %v813 = vpack.c.bf16 %v579, %v577
      %v815 = vsel %vm588, %v810, 0
      %v818 = vsel %vm588, %v811, 0
      %820 = vmatpush.bf16.msra.mxu0 0
      %821 = vmatpush.bf16.msra.mxu0 0
      %822 = vmatpush.bf16.msra.mxu0 0
      %823 = vmatpush.bf16.msra.mxu0 0
      %824 = vmatpush.bf16.msra.mxu0 0
      %825 = vmatpush.bf16.msra.mxu0 0
      %826 = vmatpush.bf16.msra.mxu0 %v813
      %827 = vmatpush.bf16.msra.mxu0 %v812
      %828 = vmatmul.bf16.gmra.mxu0 %v815
      %v829 = vpop.f32.mrf.mxu0
      %v830 = vadd.f32 0.0, %v829
      %v831 = vpop.f32.mrf.mxu0
      %v832 = vadd.f32 0.0, %v831
      %833 = vmatmul.bf16.gmra.mxu0 %v818
      %v834 = vpop.f32.mrf.mxu0
      %v835 = vadd.f32 0.0, %v834
      %v836 = vpop.f32.mrf.mxu0
      %v837 = vadd.f32 0.0, %v836
      %838 = vdwg.mxu0
      %843 = vrot.lane.b32.xlu0 %v584, 96
      %v844 = vpop.permute.xlu0 %843
      %845 = vrot.lane.b32.xlu0 %v585, 96
      %v846 = vpop.permute.xlu0 %845
      %847 = vrot.lane.b32.xlu0 %v586, 96
      %v848 = vpop.permute.xlu0 %847
      %849 = vrot.lane.b32.xlu0 %v587, 96
      %v850 = vpop.permute.xlu0 %849
      %v855 = vsel %vm588, %v844, 0.0
      %856 = vadd.xlane.f32.xlu0 %v855
      %v857 = vpop.xlane.xlu0 %856
      %v858 = vsel %vm588, %v846, 0.0
      %859 = vadd.xlane.f32.xlu0 %v858
      %v860 = vpop.xlane.xlu0 %859
      %v861 = vsel %vm588, %v848, 0.0
      %862 = vadd.xlane.f32.xlu0 %v861
      %v863 = vpop.xlane.xlu0 %862
      %v864 = vsel %vm588, %v850, 0.0
      %865 = vadd.xlane.f32.xlu0 %v864
      %v866 = vpop.xlane.xlu0 %865
      %867 = vrot.lane.b32.xlu0 %v601, 96
      %v868 = vpop.permute.xlu0 %867
      %869 = vrot.lane.b32.xlu0 %v602, 96
      %v870 = vpop.permute.xlu0 %869
      %871 = vrot.lane.b32.xlu0 %v603, 96
      %v872 = vpop.permute.xlu0 %871
      %873 = vrot.lane.b32.xlu0 %v604, 96
      %v874 = vpop.permute.xlu0 %873
      %v875 = vsel %vm588, %v868, 0
      %v877 = vsel %vm588, %v870, 0
      %v879 = vsel %vm588, %v872, 0
      %v881 = vsel %vm588, %v874, 0
      %883 = vmatpush.xpose.msra.mxu0 0.0
      %884 = vmatpush.xpose.msra.mxu0 0.0
      %885 = vmatpush.xpose.msra.mxu0 0.0
      %886 = vmatpush.xpose.msra.mxu0 0.0
      %887 = vmatpush.xpose.msra.mxu0 0.0
      %888 = vmatpush.xpose.msra.mxu0 0.0
      %889 = vmatpush.xpose.msra.mxu0 0.0
      %890 = vmatpush.xpose.msra.mxu0 0.0
      %891 = vmatpush.xpose.msra.mxu0 0.0
      %892 = vmatpush.xpose.msra.mxu0 0.0
      %893 = vmatpush.xpose.msra.mxu0 0.0
      %894 = vmatpush.xpose.msra.mxu0 0.0
      %895 = vmatpush.xpose.msra.mxu0 %v881
      %896 = vmatpush.xpose.msra.mxu0 %v879
      %897 = vmatpush.xpose.msra.mxu0 %v877
      %898 = vmatpush.xpose.msra.mxu0 %v875
      %899 = vmatmul.f32.gmra.mxu0 %v606
      %v900 = vpop.f32.mrf.mxu0
      %v901 = vadd.f32 0.0, %v900
      %902 = vdwg.mxu0
      %903 = vrot.lane.b32.xlu0 %v534, 96
      %v904 = vpop.permute.xlu0 %903
      %905 = vrot.lane.b32.xlu0 %v536, 96
      %v906 = vpop.permute.xlu0 %905
      %907 = vrot.lane.b32.xlu0 %v539, 96
      %v908 = vpop.permute.xlu0 %907
      %909 = vrot.lane.b32.xlu0 %v541, 96
      %v910 = vpop.permute.xlu0 %909
      %911 = vrot.lane.b32.xlu0 %v553, 96
      %v912 = vpop.permute.xlu0 %911
      %913 = vrot.lane.b32.xlu0 %v555, 96
      %v914 = vpop.permute.xlu0 %913
      %915 = vrot.lane.b32.xlu0 %v558, 96
      %v916 = vpop.permute.xlu0 %915
      %917 = vrot.lane.b32.xlu0 %v560, 96
      %v918 = vpop.permute.xlu0 %917
      %v919 = vsel %vm588, %v904, 0
      %v921 = vsel %vm588, %v906, 0
      %v923 = vsel %vm588, %v908, 0
      %v925 = vsel %vm588, %v910, 0
      %v927 = vsel %vm588, %v912, 0
      %v929 = vsel %vm588, %v914, 0
      %v931 = vsel %vm588, %v916, 0
      %v933 = vsel %vm588, %v918, 0
      %935 = vmatpush.xpose.msra.mxu0 0.0
      %936 = vmatpush.xpose.msra.mxu0 0.0
      %937 = vmatpush.xpose.msra.mxu0 0.0
      %938 = vmatpush.xpose.msra.mxu0 0.0
      %939 = vmatpush.xpose.msra.mxu0 0.0
      %940 = vmatpush.xpose.msra.mxu0 0.0
      %941 = vmatpush.xpose.msra.mxu0 0.0
      %942 = vmatpush.xpose.msra.mxu0 0.0
      %943 = vmatpush.xpose.msra.mxu0 0.0
      %944 = vmatpush.xpose.msra.mxu0 0.0
      %945 = vmatpush.xpose.msra.mxu0 0.0
      %946 = vmatpush.xpose.msra.mxu0 0.0
      %947 = vmatpush.xpose.msra.mxu0 %v933
      %948 = vmatpush.xpose.msra.mxu0 %v931
      %949 = vmatpush.xpose.msra.mxu0 %v929
      %950 = vmatpush.xpose.msra.mxu0 %v927
      %951 = vmatmul.f32.gmra.mxu0 %v919
      %v952 = vpop.f32.mrf.mxu0
      %v953 = vadd.f32 0.0, %v952
      %954 = vmatmul.f32.gmra.mxu0 %v921
      %v955 = vpop.f32.mrf.mxu0
      %v956 = vadd.f32 0.0, %v955
      %957 = vmatmul.f32.gmra.mxu0 %v923
      %v958 = vpop.f32.mrf.mxu0
      %v959 = vadd.f32 0.0, %v958
      %960 = vmatmul.f32.gmra.mxu0 %v925
      %v961 = vpop.f32.mrf.mxu0
      %v962 = vadd.f32 0.0, %v961
      %963 = vdwg.mxu0
      %v964 = vperm.slane %v901, 0
      %v965 = vadd.f32 %v857, %v964
      %v966 = vadd.f32 %v860, %v964
      %v967 = vadd.f32 %v863, %v964
      %v968 = vadd.f32 %v866, %v964
      %v969 = vmul.f32 %v953, 2.0
      %v970 = vmul.f32 %v956, 2.0
      %v971 = vmul.f32 %v959, 2.0
      %v972 = vmul.f32 %v962, 2.0
      %v973 = vsub.f32 %v965, %v969
      %v974 = vsub.f32 %v966, %v970
      %v975 = vsub.f32 %v967, %v971
      %v976 = vsub.f32 %v968, %v972
      %v977 = vmax.f32 %v973, 0.0
      %v978 = vmax.f32 %v974, 0.0
      %v979 = vmax.f32 %v975, 0.0
      %v980 = vmax.f32 %v976, 0.0
      %v981 = vrsqrt.pop %v977
      %v982 = vmul.f32 %v981, %v977
      %v983 = vmul.f32 %v982, %v981
      %v984 = vmul.f32 0.5, %v983
      %v985 = vsub.f32 1.5, %v984
      %v986 = vmul.f32 %v981, %v985
      %v987 = vmul.f32 %v977, %v986
      %vm988 = vcmp.eq.f32.partialorder %v977, inf
      %v989 = vsel %vm988, %v977, %v987
      %vm990 = vcmp.eq.f32.partialorder %v977, 0.0
      %v991 = vand.u32 %v977, 2147483648
      %v992 = vsel %vm990, %v991, %v989
      %v993 = vrsqrt.pop %v978
      %v994 = vmul.f32 %v993, %v978
      %v995 = vmul.f32 %v994, %v993
      %v996 = vmul.f32 0.5, %v995
      %v997 = vsub.f32 1.5, %v996
      %v998 = vmul.f32 %v993, %v997
      %v999 = vmul.f32 %v978, %v998
      %vm1000 = vcmp.eq.f32.partialorder %v978, inf
      %v1001 = vsel %vm1000, %v978, %v999
      %vm1002 = vcmp.eq.f32.partialorder %v978, 0.0
      %v1003 = vand.u32 %v978, 2147483648
      %v1004 = vsel %vm1002, %v1003, %v1001
      %v1005 = vrsqrt.pop %v979
      %v1006 = vmul.f32 %v1005, %v979
      %v1007 = vmul.f32 %v1006, %v1005
      %v1008 = vmul.f32 0.5, %v1007
      %v1009 = vsub.f32 1.5, %v1008
      %v1010 = vmul.f32 %v1005, %v1009
      %v1011 = vmul.f32 %v979, %v1010
      %vm1012 = vcmp.eq.f32.partialorder %v979, inf
      %v1013 = vsel %vm1012, %v979, %v1011
      %vm1014 = vcmp.eq.f32.partialorder %v979, 0.0
      %v1015 = vand.u32 %v979, 2147483648
      %v1016 = vsel %vm1014, %v1015, %v1013
      %v1017 = vrsqrt.pop %v980
      %v1018 = vmul.f32 %v1017, %v980
      %v1019 = vmul.f32 %v1018, %v1017
      %v1020 = vmul.f32 0.5, %v1019
      %v1021 = vsub.f32 1.5, %v1020
      %v1022 = vmul.f32 %v1017, %v1021
      %v1023 = vmul.f32 %v980, %v1022
      %vm1024 = vcmp.eq.f32.partialorder %v980, inf
      %v1025 = vsel %vm1024, %v980, %v1023
      %vm1026 = vcmp.eq.f32.partialorder %v980, 0.0
      %v1027 = vand.u32 %v980, 2147483648
      %v1028 = vsel %vm1026, %v1027, %v1025
      %v1029 = vmul.f32 %v992, 0.088388346
      %v1030 = vmul.f32 %v1004, 0.088388346
      %v1031 = vmul.f32 %v1016, 0.088388346
      %v1032 = vmul.f32 %v1028, 0.088388346
      %v1033 = vsel %vm583, %v1029, -1e+30
      %v1034 = vsel %vm583, %v1030, -1e+30
      %v1035 = vsel %vm583, %v1031, -1e+30
      %v1036 = vsel %vm583, %v1032, -1e+30
      %v1037 = vsel %vm588, %v1033, -inf
      %1038 = vmax.xlane.f32.xlu0 %v1037
      %v1039 = vpop.xlane.xlu0 %1038
      %v1040 = vsel %vm588, %v1034, -inf
      %1041 = vmax.xlane.f32.xlu0 %v1040
      %v1042 = vpop.xlane.xlu0 %1041
      %v1043 = vsel %vm588, %v1035, -inf
      %1044 = vmax.xlane.f32.xlu0 %v1043
      %v1045 = vpop.xlane.xlu0 %1044
      %v1046 = vsel %vm588, %v1036, -inf
      %1047 = vmax.xlane.f32.xlu0 %v1046
      %v1048 = vpop.xlane.xlu0 %1047
      %v1049 = vsub.f32 %v1033, %v1039
      %v1050 = vsub.f32 %v1034, %v1042
      %v1051 = vsub.f32 %v1035, %v1045
      %v1052 = vsub.f32 %v1036, %v1048
      %v1053 = vmul.f32 %v1049, 1.442695
      %v1054 = vpow.pop %v1053
      %v1055 = vmul.f32 %v1050, 1.442695
      %v1056 = vpow.pop %v1055
      %v1057 = vmul.f32 %v1051, 1.442695
      %v1058 = vpow.pop %v1057
      %v1059 = vmul.f32 %v1052, 1.442695
      %v1060 = vpow.pop %v1059
      %v1061 = vsel %vm588, %v1054, 0.0
      %1062 = vadd.xlane.f32.xlu0 %v1061
      %v1063 = vpop.xlane.xlu0 %1062
      %v1064 = vsel %vm588, %v1056, 0.0
      %1065 = vadd.xlane.f32.xlu0 %v1064
      %v1066 = vpop.xlane.xlu0 %1065
      %v1067 = vsel %vm588, %v1058, 0.0
      %1068 = vadd.xlane.f32.xlu0 %v1067
      %v1069 = vpop.xlane.xlu0 %1068
      %v1070 = vsel %vm588, %v1060, 0.0
      %1071 = vadd.xlane.f32.xlu0 %v1070
      %v1072 = vpop.xlane.xlu0 %1071
      %v1073 = vrcp.pop %v1063
      %v1074 = vrcp.pop %v1066
      %v1075 = vrcp.pop %v1069
      %v1076 = vrcp.pop %v1072
      %v1077 = vmul.f32 %v1054, %v1073
      %v1078 = vmul.f32 %v1056, %v1074
      %v1079 = vmul.f32 %v1058, %v1075
      %v1080 = vmul.f32 %v1060, %v1076
      %v1081 = vpack.c.bf16 %v1078, %v1077
      %v1082 = vpack.c.bf16 %v1080, %v1079
      %1085 = vrot.lane.b32.xlu0 %v812, 96
      %v1086 = vpop.permute.xlu0 %1085
      %1087 = vrot.lane.b32.xlu0 %v813, 96
      %v1088 = vpop.permute.xlu0 %1087
      %v1092 = vsel %vm588, %v1081, 0
      %v1095 = vsel %vm588, %v1082, 0
      %1097 = vmatpush.bf16.msra.mxu0 0
      %1098 = vmatpush.bf16.msra.mxu0 0
      %1099 = vmatpush.bf16.msra.mxu0 0
      %1100 = vmatpush.bf16.msra.mxu0 0
      %1101 = vmatpush.bf16.msra.mxu0 0
      %1102 = vmatpush.bf16.msra.mxu0 0
      %1103 = vmatpush.bf16.msra.mxu0 %v1088
      %1104 = vmatpush.bf16.msra.mxu0 %v1086
      %1105 = vmatmul.bf16.gmra.mxu0 %v1092
      %v1106 = vpop.f32.mrf.mxu0
      %v1107 = vadd.f32 0.0, %v1106
      %v1108 = vpop.f32.mrf.mxu0
      %v1109 = vadd.f32 0.0, %v1108
      %1110 = vmatmul.bf16.gmra.mxu0 %v1095
      %v1111 = vpop.f32.mrf.mxu0
      %v1112 = vadd.f32 0.0, %v1111
      %v1113 = vpop.f32.mrf.mxu0
      %v1114 = vadd.f32 0.0, %v1113
      %1115 = vdwg.mxu0
      %1116 = vrot.lane.b32.xlu0 %v584, 64
      %v1117 = vpop.permute.xlu0 %1116
      %1118 = vrot.lane.b32.xlu0 %v585, 64
      %v1119 = vpop.permute.xlu0 %1118
      %1120 = vrot.lane.b32.xlu0 %v586, 64
      %v1121 = vpop.permute.xlu0 %1120
      %1122 = vrot.lane.b32.xlu0 %v587, 64
      %v1123 = vpop.permute.xlu0 %1122
      %v1128 = vsel %vm588, %v1117, 0.0
      %1129 = vadd.xlane.f32.xlu0 %v1128
      %v1130 = vpop.xlane.xlu0 %1129
      %v1131 = vsel %vm588, %v1119, 0.0
      %1132 = vadd.xlane.f32.xlu0 %v1131
      %v1133 = vpop.xlane.xlu0 %1132
      %v1134 = vsel %vm588, %v1121, 0.0
      %1135 = vadd.xlane.f32.xlu0 %v1134
      %v1136 = vpop.xlane.xlu0 %1135
      %v1137 = vsel %vm588, %v1123, 0.0
      %1138 = vadd.xlane.f32.xlu0 %v1137
      %v1139 = vpop.xlane.xlu0 %1138
      %1140 = vrot.lane.b32.xlu0 %v601, 64
      %v1141 = vpop.permute.xlu0 %1140
      %1142 = vrot.lane.b32.xlu0 %v602, 64
      %v1143 = vpop.permute.xlu0 %1142
      %1144 = vrot.lane.b32.xlu0 %v603, 64
      %v1145 = vpop.permute.xlu0 %1144
      %1146 = vrot.lane.b32.xlu0 %v604, 64
      %v1147 = vpop.permute.xlu0 %1146
      %v1148 = vsel %vm588, %v1141, 0
      %v1150 = vsel %vm588, %v1143, 0
      %v1152 = vsel %vm588, %v1145, 0
      %v1154 = vsel %vm588, %v1147, 0
      %1156 = vmatpush.xpose.msra.mxu0 0.0
      %1157 = vmatpush.xpose.msra.mxu0 0.0
      %1158 = vmatpush.xpose.msra.mxu0 0.0
      %1159 = vmatpush.xpose.msra.mxu0 0.0
      %1160 = vmatpush.xpose.msra.mxu0 0.0
      %1161 = vmatpush.xpose.msra.mxu0 0.0
      %1162 = vmatpush.xpose.msra.mxu0 0.0
      %1163 = vmatpush.xpose.msra.mxu0 0.0
      %1164 = vmatpush.xpose.msra.mxu0 0.0
      %1165 = vmatpush.xpose.msra.mxu0 0.0
      %1166 = vmatpush.xpose.msra.mxu0 0.0
      %1167 = vmatpush.xpose.msra.mxu0 0.0
      %1168 = vmatpush.xpose.msra.mxu0 %v1154
      %1169 = vmatpush.xpose.msra.mxu0 %v1152
      %1170 = vmatpush.xpose.msra.mxu0 %v1150
      %1171 = vmatpush.xpose.msra.mxu0 %v1148
      %1172 = vmatmul.f32.gmra.mxu0 %v606
      %v1173 = vpop.f32.mrf.mxu0
      %v1174 = vadd.f32 0.0, %v1173
      %1175 = vdwg.mxu0
      %1176 = vrot.lane.b32.xlu0 %v534, 64
      %v1177 = vpop.permute.xlu0 %1176
      %1178 = vrot.lane.b32.xlu0 %v536, 64
      %v1179 = vpop.permute.xlu0 %1178
      %1180 = vrot.lane.b32.xlu0 %v539, 64
      %v1181 = vpop.permute.xlu0 %1180
      %1182 = vrot.lane.b32.xlu0 %v541, 64
      %v1183 = vpop.permute.xlu0 %1182
      %1184 = vrot.lane.b32.xlu0 %v553, 64
      %v1185 = vpop.permute.xlu0 %1184
      %1186 = vrot.lane.b32.xlu0 %v555, 64
      %v1187 = vpop.permute.xlu0 %1186
      %1188 = vrot.lane.b32.xlu0 %v558, 64
      %v1189 = vpop.permute.xlu0 %1188
      %1190 = vrot.lane.b32.xlu0 %v560, 64
      %v1191 = vpop.permute.xlu0 %1190
      %v1192 = vsel %vm588, %v1177, 0
      %v1194 = vsel %vm588, %v1179, 0
      %v1196 = vsel %vm588, %v1181, 0
      %v1198 = vsel %vm588, %v1183, 0
      %v1200 = vsel %vm588, %v1185, 0
      %v1202 = vsel %vm588, %v1187, 0
      %v1204 = vsel %vm588, %v1189, 0
      %v1206 = vsel %vm588, %v1191, 0
      %1208 = vmatpush.xpose.msra.mxu0 0.0
      %1209 = vmatpush.xpose.msra.mxu0 0.0
      %1210 = vmatpush.xpose.msra.mxu0 0.0
      %1211 = vmatpush.xpose.msra.mxu0 0.0
      %1212 = vmatpush.xpose.msra.mxu0 0.0
      %1213 = vmatpush.xpose.msra.mxu0 0.0
      %1214 = vmatpush.xpose.msra.mxu0 0.0
      %1215 = vmatpush.xpose.msra.mxu0 0.0
      %1216 = vmatpush.xpose.msra.mxu0 0.0
      %1217 = vmatpush.xpose.msra.mxu0 0.0
      %1218 = vmatpush.xpose.msra.mxu0 0.0
      %1219 = vmatpush.xpose.msra.mxu0 0.0
      %1220 = vmatpush.xpose.msra.mxu0 %v1206
      %1221 = vmatpush.xpose.msra.mxu0 %v1204
      %1222 = vmatpush.xpose.msra.mxu0 %v1202
      %1223 = vmatpush.xpose.msra.mxu0 %v1200
      %1224 = vmatmul.f32.gmra.mxu0 %v1192
      %v1225 = vpop.f32.mrf.mxu0
      %v1226 = vadd.f32 0.0, %v1225
      %1227 = vmatmul.f32.gmra.mxu0 %v1194
      %v1228 = vpop.f32.mrf.mxu0
      %v1229 = vadd.f32 0.0, %v1228
      %1230 = vmatmul.f32.gmra.mxu0 %v1196
      %v1231 = vpop.f32.mrf.mxu0
      %v1232 = vadd.f32 0.0, %v1231
      %1233 = vmatmul.f32.gmra.mxu0 %v1198
      %v1234 = vpop.f32.mrf.mxu0
      %v1235 = vadd.f32 0.0, %v1234
      %1236 = vdwg.mxu0
      %v1237 = vperm.slane %v1174, 0
      %v1238 = vadd.f32 %v1130, %v1237
      %v1239 = vadd.f32 %v1133, %v1237
      %v1240 = vadd.f32 %v1136, %v1237
      %v1241 = vadd.f32 %v1139, %v1237
      %v1242 = vmul.f32 %v1226, 2.0
      %v1243 = vmul.f32 %v1229, 2.0
      %v1244 = vmul.f32 %v1232, 2.0
      %v1245 = vmul.f32 %v1235, 2.0
      %v1246 = vsub.f32 %v1238, %v1242
      %v1247 = vsub.f32 %v1239, %v1243
      %v1248 = vsub.f32 %v1240, %v1244
      %v1249 = vsub.f32 %v1241, %v1245
      %v1250 = vmax.f32 %v1246, 0.0
      %v1251 = vmax.f32 %v1247, 0.0
      %v1252 = vmax.f32 %v1248, 0.0
      %v1253 = vmax.f32 %v1249, 0.0
      %v1254 = vrsqrt.pop %v1250
      %v1255 = vmul.f32 %v1254, %v1250
      %v1256 = vmul.f32 %v1255, %v1254
      %v1257 = vmul.f32 0.5, %v1256
      %v1258 = vsub.f32 1.5, %v1257
      %v1259 = vmul.f32 %v1254, %v1258
      %v1260 = vmul.f32 %v1250, %v1259
      %vm1261 = vcmp.eq.f32.partialorder %v1250, inf
      %v1262 = vsel %vm1261, %v1250, %v1260
      %vm1263 = vcmp.eq.f32.partialorder %v1250, 0.0
      %v1264 = vand.u32 %v1250, 2147483648
      %v1265 = vsel %vm1263, %v1264, %v1262
      %v1266 = vrsqrt.pop %v1251
      %v1267 = vmul.f32 %v1266, %v1251
      %v1268 = vmul.f32 %v1267, %v1266
      %v1269 = vmul.f32 0.5, %v1268
      %v1270 = vsub.f32 1.5, %v1269
      %v1271 = vmul.f32 %v1266, %v1270
      %v1272 = vmul.f32 %v1251, %v1271
      %vm1273 = vcmp.eq.f32.partialorder %v1251, inf
      %v1274 = vsel %vm1273, %v1251, %v1272
      %vm1275 = vcmp.eq.f32.partialorder %v1251, 0.0
      %v1276 = vand.u32 %v1251, 2147483648
      %v1277 = vsel %vm1275, %v1276, %v1274
      %v1278 = vrsqrt.pop %v1252
      %v1279 = vmul.f32 %v1278, %v1252
      %v1280 = vmul.f32 %v1279, %v1278
      %v1281 = vmul.f32 0.5, %v1280
      %v1282 = vsub.f32 1.5, %v1281
      %v1283 = vmul.f32 %v1278, %v1282
      %v1284 = vmul.f32 %v1252, %v1283
      %vm1285 = vcmp.eq.f32.partialorder %v1252, inf
      %v1286 = vsel %vm1285, %v1252, %v1284
      %vm1287 = vcmp.eq.f32.partialorder %v1252, 0.0
      %v1288 = vand.u32 %v1252, 2147483648
      %v1289 = vsel %vm1287, %v1288, %v1286
      %v1290 = vrsqrt.pop %v1253
      %v1291 = vmul.f32 %v1290, %v1253
      %v1292 = vmul.f32 %v1291, %v1290
      %v1293 = vmul.f32 0.5, %v1292
      %v1294 = vsub.f32 1.5, %v1293
      %v1295 = vmul.f32 %v1290, %v1294
      %v1296 = vmul.f32 %v1253, %v1295
      %vm1297 = vcmp.eq.f32.partialorder %v1253, inf
      %v1298 = vsel %vm1297, %v1253, %v1296
      %vm1299 = vcmp.eq.f32.partialorder %v1253, 0.0
      %v1300 = vand.u32 %v1253, 2147483648
      %v1301 = vsel %vm1299, %v1300, %v1298
      %v1302 = vmul.f32 %v1265, 0.088388346
      %v1303 = vmul.f32 %v1277, 0.088388346
      %v1304 = vmul.f32 %v1289, 0.088388346
      %v1305 = vmul.f32 %v1301, 0.088388346
      %v1306 = vsel %vm583, %v1302, -1e+30
      %v1307 = vsel %vm583, %v1303, -1e+30
      %v1308 = vsel %vm583, %v1304, -1e+30
      %v1309 = vsel %vm583, %v1305, -1e+30
      %v1310 = vsel %vm588, %v1306, -inf
      %1311 = vmax.xlane.f32.xlu0 %v1310
      %v1312 = vpop.xlane.xlu0 %1311
      %v1313 = vsel %vm588, %v1307, -inf
      %1314 = vmax.xlane.f32.xlu0 %v1313
      %v1315 = vpop.xlane.xlu0 %1314
      %v1316 = vsel %vm588, %v1308, -inf
      %1317 = vmax.xlane.f32.xlu0 %v1316
      %v1318 = vpop.xlane.xlu0 %1317
      %v1319 = vsel %vm588, %v1309, -inf
      %1320 = vmax.xlane.f32.xlu0 %v1319
      %v1321 = vpop.xlane.xlu0 %1320
      %v1322 = vsub.f32 %v1306, %v1312
      %v1323 = vsub.f32 %v1307, %v1315
      %v1324 = vsub.f32 %v1308, %v1318
      %v1325 = vsub.f32 %v1309, %v1321
      %v1326 = vmul.f32 %v1322, 1.442695
      %v1327 = vpow.pop %v1326
      %v1328 = vmul.f32 %v1323, 1.442695
      %v1329 = vpow.pop %v1328
      %v1330 = vmul.f32 %v1324, 1.442695
      %v1331 = vpow.pop %v1330
      %v1332 = vmul.f32 %v1325, 1.442695
      %v1333 = vpow.pop %v1332
      %v1334 = vsel %vm588, %v1327, 0.0
      %1335 = vadd.xlane.f32.xlu0 %v1334
      %v1336 = vpop.xlane.xlu0 %1335
      %v1337 = vsel %vm588, %v1329, 0.0
      %1338 = vadd.xlane.f32.xlu0 %v1337
      %v1339 = vpop.xlane.xlu0 %1338
      %v1340 = vsel %vm588, %v1331, 0.0
      %1341 = vadd.xlane.f32.xlu0 %v1340
      %v1342 = vpop.xlane.xlu0 %1341
      %v1343 = vsel %vm588, %v1333, 0.0
      %1344 = vadd.xlane.f32.xlu0 %v1343
      %v1345 = vpop.xlane.xlu0 %1344
      %v1346 = vrcp.pop %v1336
      %v1347 = vrcp.pop %v1339
      %v1348 = vrcp.pop %v1342
      %v1349 = vrcp.pop %v1345
      %v1350 = vmul.f32 %v1327, %v1346
      %v1351 = vmul.f32 %v1329, %v1347
      %v1352 = vmul.f32 %v1331, %v1348
      %v1353 = vmul.f32 %v1333, %v1349
      %v1354 = vpack.c.bf16 %v1351, %v1350
      %v1355 = vpack.c.bf16 %v1353, %v1352
      %1356 = vrot.lane.b32.xlu0 %v812, 64
      %v1357 = vpop.permute.xlu0 %1356
      %1358 = vrot.lane.b32.xlu0 %v813, 64
      %v1359 = vpop.permute.xlu0 %1358
      %v1363 = vsel %vm588, %v1354, 0
      %v1366 = vsel %vm588, %v1355, 0
      %1368 = vmatpush.bf16.msra.mxu0 0
      %1369 = vmatpush.bf16.msra.mxu0 0
      %1370 = vmatpush.bf16.msra.mxu0 0
      %1371 = vmatpush.bf16.msra.mxu0 0
      %1372 = vmatpush.bf16.msra.mxu0 0
      %1373 = vmatpush.bf16.msra.mxu0 0
      %1374 = vmatpush.bf16.msra.mxu0 %v1359
      %1375 = vmatpush.bf16.msra.mxu0 %v1357
      %1376 = vmatmul.bf16.gmra.mxu0 %v1363
      %v1377 = vpop.f32.mrf.mxu0
      %v1378 = vadd.f32 0.0, %v1377
      %v1379 = vpop.f32.mrf.mxu0
      %v1380 = vadd.f32 0.0, %v1379
      %1381 = vmatmul.bf16.gmra.mxu0 %v1366
      %v1382 = vpop.f32.mrf.mxu0
      %v1383 = vadd.f32 0.0, %v1382
      %v1384 = vpop.f32.mrf.mxu0
      %v1385 = vadd.f32 0.0, %v1384
      %1386 = vdwg.mxu0
      %1387 = vrot.lane.b32.xlu0 %v584, 32
      %v1388 = vpop.permute.xlu0 %1387
      %1389 = vrot.lane.b32.xlu0 %v585, 32
      %v1390 = vpop.permute.xlu0 %1389
      %1391 = vrot.lane.b32.xlu0 %v586, 32
      %v1392 = vpop.permute.xlu0 %1391
      %1393 = vrot.lane.b32.xlu0 %v587, 32
      %v1394 = vpop.permute.xlu0 %1393
      %v1399 = vsel %vm588, %v1388, 0.0
      %1400 = vadd.xlane.f32.xlu0 %v1399
      %v1401 = vpop.xlane.xlu0 %1400
      %v1402 = vsel %vm588, %v1390, 0.0
      %1403 = vadd.xlane.f32.xlu0 %v1402
      %v1404 = vpop.xlane.xlu0 %1403
      %v1405 = vsel %vm588, %v1392, 0.0
      %1406 = vadd.xlane.f32.xlu0 %v1405
      %v1407 = vpop.xlane.xlu0 %1406
      %v1408 = vsel %vm588, %v1394, 0.0
      %1409 = vadd.xlane.f32.xlu0 %v1408
      %v1410 = vpop.xlane.xlu0 %1409
      %1411 = vrot.lane.b32.xlu0 %v601, 32
      %v1412 = vpop.permute.xlu0 %1411
      %1413 = vrot.lane.b32.xlu0 %v602, 32
      %v1414 = vpop.permute.xlu0 %1413
      %1415 = vrot.lane.b32.xlu0 %v603, 32
      %v1416 = vpop.permute.xlu0 %1415
      %1417 = vrot.lane.b32.xlu0 %v604, 32
      %v1418 = vpop.permute.xlu0 %1417
      %v1419 = vsel %vm588, %v1412, 0
      %v1421 = vsel %vm588, %v1414, 0
      %v1423 = vsel %vm588, %v1416, 0
      %v1425 = vsel %vm588, %v1418, 0
      %1427 = vmatpush.xpose.msra.mxu0 0.0
      %1428 = vmatpush.xpose.msra.mxu0 0.0
      %1429 = vmatpush.xpose.msra.mxu0 0.0
      %1430 = vmatpush.xpose.msra.mxu0 0.0
      %1431 = vmatpush.xpose.msra.mxu0 0.0
      %1432 = vmatpush.xpose.msra.mxu0 0.0
      %1433 = vmatpush.xpose.msra.mxu0 0.0
      %1434 = vmatpush.xpose.msra.mxu0 0.0
      %1435 = vmatpush.xpose.msra.mxu0 0.0
      %1436 = vmatpush.xpose.msra.mxu0 0.0
      %1437 = vmatpush.xpose.msra.mxu0 0.0
      %1438 = vmatpush.xpose.msra.mxu0 0.0
      %1439 = vmatpush.xpose.msra.mxu0 %v1425
      %1440 = vmatpush.xpose.msra.mxu0 %v1423
      %1441 = vmatpush.xpose.msra.mxu0 %v1421
      %1442 = vmatpush.xpose.msra.mxu0 %v1419
      %1443 = vmatmul.f32.gmra.mxu0 %v606
      %v1444 = vpop.f32.mrf.mxu0
      %v1445 = vadd.f32 0.0, %v1444
      %1446 = vdwg.mxu0
      %1447 = vrot.lane.b32.xlu0 %v534, 32
      %v1448 = vpop.permute.xlu0 %1447
      %1449 = vrot.lane.b32.xlu0 %v536, 32
      %v1450 = vpop.permute.xlu0 %1449
      %1451 = vrot.lane.b32.xlu0 %v539, 32
      %v1452 = vpop.permute.xlu0 %1451
      %1453 = vrot.lane.b32.xlu0 %v541, 32
      %v1454 = vpop.permute.xlu0 %1453
      %1455 = vrot.lane.b32.xlu0 %v553, 32
      %v1456 = vpop.permute.xlu0 %1455
      %1457 = vrot.lane.b32.xlu0 %v555, 32
      %v1458 = vpop.permute.xlu0 %1457
      %1459 = vrot.lane.b32.xlu0 %v558, 32
      %v1460 = vpop.permute.xlu0 %1459
      %1461 = vrot.lane.b32.xlu0 %v560, 32
      %v1462 = vpop.permute.xlu0 %1461
      %v1463 = vsel %vm588, %v1448, 0
      %v1465 = vsel %vm588, %v1450, 0
      %v1467 = vsel %vm588, %v1452, 0
      %v1469 = vsel %vm588, %v1454, 0
      %v1471 = vsel %vm588, %v1456, 0
      %v1473 = vsel %vm588, %v1458, 0
      %v1475 = vsel %vm588, %v1460, 0
      %v1477 = vsel %vm588, %v1462, 0
      %1479 = vmatpush.xpose.msra.mxu0 0.0
      %1480 = vmatpush.xpose.msra.mxu0 0.0
      %1481 = vmatpush.xpose.msra.mxu0 0.0
      %1482 = vmatpush.xpose.msra.mxu0 0.0
      %1483 = vmatpush.xpose.msra.mxu0 0.0
      %1484 = vmatpush.xpose.msra.mxu0 0.0
      %1485 = vmatpush.xpose.msra.mxu0 0.0
      %1486 = vmatpush.xpose.msra.mxu0 0.0
      %1487 = vmatpush.xpose.msra.mxu0 0.0
      %1488 = vmatpush.xpose.msra.mxu0 0.0
      %1489 = vmatpush.xpose.msra.mxu0 0.0
      %1490 = vmatpush.xpose.msra.mxu0 0.0
      %1491 = vmatpush.xpose.msra.mxu0 %v1477
      %1492 = vmatpush.xpose.msra.mxu0 %v1475
      %1493 = vmatpush.xpose.msra.mxu0 %v1473
      %1494 = vmatpush.xpose.msra.mxu0 %v1471
      %1495 = vmatmul.f32.gmra.mxu0 %v1463
      %v1496 = vpop.f32.mrf.mxu0
      %v1497 = vadd.f32 0.0, %v1496
      %1498 = vmatmul.f32.gmra.mxu0 %v1465
      %v1499 = vpop.f32.mrf.mxu0
      %v1500 = vadd.f32 0.0, %v1499
      %1501 = vmatmul.f32.gmra.mxu0 %v1467
      %v1502 = vpop.f32.mrf.mxu0
      %v1503 = vadd.f32 0.0, %v1502
      %1504 = vmatmul.f32.gmra.mxu0 %v1469
      %v1505 = vpop.f32.mrf.mxu0
      %v1506 = vadd.f32 0.0, %v1505
      %1507 = vdwg.mxu0
      %v1508 = vperm.slane %v1445, 0
      %v1509 = vadd.f32 %v1401, %v1508
      %v1510 = vadd.f32 %v1404, %v1508
      %v1511 = vadd.f32 %v1407, %v1508
      %v1512 = vadd.f32 %v1410, %v1508
      %v1513 = vmul.f32 %v1497, 2.0
      %v1514 = vmul.f32 %v1500, 2.0
      %v1515 = vmul.f32 %v1503, 2.0
      %v1516 = vmul.f32 %v1506, 2.0
      %v1517 = vsub.f32 %v1509, %v1513
      %v1518 = vsub.f32 %v1510, %v1514
      %v1519 = vsub.f32 %v1511, %v1515
      %v1520 = vsub.f32 %v1512, %v1516
      %v1521 = vmax.f32 %v1517, 0.0
      %v1522 = vmax.f32 %v1518, 0.0
      %v1523 = vmax.f32 %v1519, 0.0
      %v1524 = vmax.f32 %v1520, 0.0
      %v1525 = vrsqrt.pop %v1521
      %v1526 = vmul.f32 %v1525, %v1521
      %v1527 = vmul.f32 %v1526, %v1525
      %v1528 = vmul.f32 0.5, %v1527
      %v1529 = vsub.f32 1.5, %v1528
      %v1530 = vmul.f32 %v1525, %v1529
      %v1531 = vmul.f32 %v1521, %v1530
      %vm1532 = vcmp.eq.f32.partialorder %v1521, inf
      %v1533 = vsel %vm1532, %v1521, %v1531
      %vm1534 = vcmp.eq.f32.partialorder %v1521, 0.0
      %v1535 = vand.u32 %v1521, 2147483648
      %v1536 = vsel %vm1534, %v1535, %v1533
      %v1537 = vrsqrt.pop %v1522
      %v1538 = vmul.f32 %v1537, %v1522
      %v1539 = vmul.f32 %v1538, %v1537
      %v1540 = vmul.f32 0.5, %v1539
      %v1541 = vsub.f32 1.5, %v1540
      %v1542 = vmul.f32 %v1537, %v1541
      %v1543 = vmul.f32 %v1522, %v1542
      %vm1544 = vcmp.eq.f32.partialorder %v1522, inf
      %v1545 = vsel %vm1544, %v1522, %v1543
      %vm1546 = vcmp.eq.f32.partialorder %v1522, 0.0
      %v1547 = vand.u32 %v1522, 2147483648
      %v1548 = vsel %vm1546, %v1547, %v1545
      %v1549 = vrsqrt.pop %v1523
      %v1550 = vmul.f32 %v1549, %v1523
      %v1551 = vmul.f32 %v1550, %v1549
      %v1552 = vmul.f32 0.5, %v1551
      %v1553 = vsub.f32 1.5, %v1552
      %v1554 = vmul.f32 %v1549, %v1553
      %v1555 = vmul.f32 %v1523, %v1554
      %vm1556 = vcmp.eq.f32.partialorder %v1523, inf
      %v1557 = vsel %vm1556, %v1523, %v1555
      %vm1558 = vcmp.eq.f32.partialorder %v1523, 0.0
      %v1559 = vand.u32 %v1523, 2147483648
      %v1560 = vsel %vm1558, %v1559, %v1557
      %v1561 = vrsqrt.pop %v1524
      %v1562 = vmul.f32 %v1561, %v1524
      %v1563 = vmul.f32 %v1562, %v1561
      %v1564 = vmul.f32 0.5, %v1563
      %v1565 = vsub.f32 1.5, %v1564
      %v1566 = vmul.f32 %v1561, %v1565
      %v1567 = vmul.f32 %v1524, %v1566
      %vm1568 = vcmp.eq.f32.partialorder %v1524, inf
      %v1569 = vsel %vm1568, %v1524, %v1567
      %vm1570 = vcmp.eq.f32.partialorder %v1524, 0.0
      %v1571 = vand.u32 %v1524, 2147483648
      %v1572 = vsel %vm1570, %v1571, %v1569
      %v1573 = vmul.f32 %v1536, 0.088388346
      %v1574 = vmul.f32 %v1548, 0.088388346
      %v1575 = vmul.f32 %v1560, 0.088388346
      %v1576 = vmul.f32 %v1572, 0.088388346
      %v1577 = vsel %vm583, %v1573, -1e+30
      %v1578 = vsel %vm583, %v1574, -1e+30
      %v1579 = vsel %vm583, %v1575, -1e+30
      %v1580 = vsel %vm583, %v1576, -1e+30
      %v1581 = vsel %vm588, %v1577, -inf
      %1582 = vmax.xlane.f32.xlu0 %v1581
      %v1583 = vpop.xlane.xlu0 %1582
      %v1584 = vsel %vm588, %v1578, -inf
      %1585 = vmax.xlane.f32.xlu0 %v1584
      %v1586 = vpop.xlane.xlu0 %1585
      %v1587 = vsel %vm588, %v1579, -inf
      %1588 = vmax.xlane.f32.xlu0 %v1587
      %v1589 = vpop.xlane.xlu0 %1588
      %v1590 = vsel %vm588, %v1580, -inf
      %1591 = vmax.xlane.f32.xlu0 %v1590
      %v1592 = vpop.xlane.xlu0 %1591
      %v1593 = vsub.f32 %v1577, %v1583
      %v1594 = vsub.f32 %v1578, %v1586
      %v1595 = vsub.f32 %v1579, %v1589
      %v1596 = vsub.f32 %v1580, %v1592
      %v1597 = vmul.f32 %v1593, 1.442695
      %v1598 = vpow.pop %v1597
      %v1599 = vmul.f32 %v1594, 1.442695
      %v1600 = vpow.pop %v1599
      %v1601 = vmul.f32 %v1595, 1.442695
      %v1602 = vpow.pop %v1601
      %v1603 = vmul.f32 %v1596, 1.442695
      %v1604 = vpow.pop %v1603
      %v1605 = vsel %vm588, %v1598, 0.0
      %1606 = vadd.xlane.f32.xlu0 %v1605
      %v1607 = vpop.xlane.xlu0 %1606
      %v1608 = vsel %vm588, %v1600, 0.0
      %1609 = vadd.xlane.f32.xlu0 %v1608
      %v1610 = vpop.xlane.xlu0 %1609
      %v1611 = vsel %vm588, %v1602, 0.0
      %1612 = vadd.xlane.f32.xlu0 %v1611
      %v1613 = vpop.xlane.xlu0 %1612
      %v1614 = vsel %vm588, %v1604, 0.0
      %1615 = vadd.xlane.f32.xlu0 %v1614
      %v1616 = vpop.xlane.xlu0 %1615
      %v1617 = vrcp.pop %v1607
      %v1618 = vrcp.pop %v1610
      %v1619 = vrcp.pop %v1613
      %v1620 = vrcp.pop %v1616
      %v1621 = vmul.f32 %v1598, %v1617
      %v1622 = vmul.f32 %v1600, %v1618
      %v1623 = vmul.f32 %v1602, %v1619
      %v1624 = vmul.f32 %v1604, %v1620
      %v1625 = vpack.c.bf16 %v1622, %v1621
      %v1626 = vpack.c.bf16 %v1624, %v1623
      %1627 = vrot.lane.b32.xlu0 %v812, 32
      %v1628 = vpop.permute.xlu0 %1627
      %1629 = vrot.lane.b32.xlu0 %v813, 32
      %v1630 = vpop.permute.xlu0 %1629
      %v1634 = vsel %vm588, %v1625, 0
      %v1637 = vsel %vm588, %v1626, 0
      %1639 = vmatpush.bf16.msra.mxu0 0
      %1640 = vmatpush.bf16.msra.mxu0 0
      %1641 = vmatpush.bf16.msra.mxu0 0
      %1642 = vmatpush.bf16.msra.mxu0 0
      %1643 = vmatpush.bf16.msra.mxu0 0
      %1644 = vmatpush.bf16.msra.mxu0 0
      %1645 = vmatpush.bf16.msra.mxu0 %v1630
      %1646 = vmatpush.bf16.msra.mxu0 %v1628
      %1647 = vmatmul.bf16.gmra.mxu0 %v1634
      %v1648 = vpop.f32.mrf.mxu0
      %v1649 = vadd.f32 0.0, %v1648
      %v1650 = vpop.f32.mrf.mxu0
      %v1651 = vadd.f32 0.0, %v1650
      %1652 = vmatmul.bf16.gmra.mxu0 %v1637
      %v1653 = vpop.f32.mrf.mxu0
      %v1654 = vadd.f32 0.0, %v1653
      %v1655 = vpop.f32.mrf.mxu0
      %v1656 = vadd.f32 0.0, %v1655
      %1657 = vdwg.mxu0
      %1662 = vrot.lane.b32.xlu0 %v1107, 32
      %v1663 = vpop.permute.xlu0 %1662
      %1664 = vrot.lane.b32.xlu0 %v1109, 32
      %v1665 = vpop.permute.xlu0 %1664
      %1666 = vrot.lane.b32.xlu0 %v1112, 32
      %v1667 = vpop.permute.xlu0 %1666
      %1668 = vrot.lane.b32.xlu0 %v1114, 32
      %v1669 = vpop.permute.xlu0 %1668
      %1678 = vrot.lane.b32.xlu0 %v1378, 64
      %v1679 = vpop.permute.xlu0 %1678
      %1680 = vrot.lane.b32.xlu0 %v1380, 64
      %v1681 = vpop.permute.xlu0 %1680
      %1682 = vrot.lane.b32.xlu0 %v1383, 64
      %v1683 = vpop.permute.xlu0 %1682
      %1684 = vrot.lane.b32.xlu0 %v1385, 64
      %v1685 = vpop.permute.xlu0 %1684
      %1694 = vrot.lane.b32.xlu0 %v1649, 96
      %v1695 = vpop.permute.xlu0 %1694
      %1696 = vrot.lane.b32.xlu0 %v1651, 96
      %v1697 = vpop.permute.xlu0 %1696
      %1698 = vrot.lane.b32.xlu0 %v1654, 96
      %v1699 = vpop.permute.xlu0 %1698
      %1700 = vrot.lane.b32.xlu0 %v1656, 96
      %v1701 = vpop.permute.xlu0 %1700
      %v1706 = vsel %vm588, %v830, %v1663
      %v1707 = vsel %vm588, %v832, %v1665
      %v1708 = vsel %vm588, %v835, %v1667
      %v1709 = vsel %vm588, %v837, %v1669
      %vm1710 = vcmask 523264
      %v1711 = vsel %vm1710, %v1706, %v1679
      %v1712 = vsel %vm1710, %v1707, %v1681
      %v1713 = vsel %vm1710, %v1708, %v1683
      %v1714 = vsel %vm1710, %v1709, %v1685
      %vm1715 = vcmask 785408
      %v1716 = vsel %vm1715, %v1711, %v1695
      %v1717 = vsel %vm1715, %v1712, %v1697
      %v1718 = vsel %vm1715, %v1713, %v1699
      %v1719 = vsel %vm1715, %v1714, %v1701
      %v1720 = vpack.c.bf16 %v1717, %v1716
      %v1721 = vpack.c.bf16 %v1719, %v1718
      %v1722 = vld [vmem:[%s4] sm:$0xf]
      %v1723 = vld [vmem:[%s4 + $0x4] sm:$0xf]
      %v1724 = vld [vmem:[%s4 + $0x8] sm:$0xf]
      %v1725 = vld [vmem:[%s4 + $0xc] sm:$0xf]
      %v1726 = vld [vmem:[%s4 + $0x10] sm:$0xf]
      %v1727 = vld [vmem:[%s4 + $0x14] sm:$0xf]
      %v1728 = vld [vmem:[%s4 + $0x18] sm:$0xf]
      %v1729 = vld [vmem:[%s4 + $0x1c] sm:$0xf]
      %v1730 = vld [vmem:[%s4 + $0x20] sm:$0xf]
      %v1731 = vld [vmem:[%s4 + $0x24] sm:$0xf]
      %v1732 = vld [vmem:[%s4 + $0x28] sm:$0xf]
      %v1733 = vld [vmem:[%s4 + $0x2c] sm:$0xf]
      %v1734 = vld [vmem:[%s4 + $0x30] sm:$0xf]
      %v1735 = vld [vmem:[%s4 + $0x34] sm:$0xf]
      %v1736 = vld [vmem:[%s4 + $0x38] sm:$0xf]
      %v1737 = vld [vmem:[%s4 + $0x3c] sm:$0xf]
      %v1738 = vld [vmem:[%s5] sm:$0x1]
      %v1739 = vunpack.c.l.bf16 %v1738
      %v1740 = vperm.slane %v1739, 0
      %v1757 = vunpack.c.l.b16 %v1722
      %v1758 = vunpack.c.l.b16 %v1723
      %v1759 = vunpack.c.l.b16 %v1724
      %v1760 = vunpack.c.l.b16 %v1725
      %v1761 = vunpack.c.l.b16 %v1726
      %v1762 = vunpack.c.l.b16 %v1727
      %v1763 = vunpack.c.l.b16 %v1728
      %v1764 = vunpack.c.l.b16 %v1729
      %v1765 = vunpack.c.l.b16 %v1730
      %v1766 = vunpack.c.l.b16 %v1731
      %v1767 = vunpack.c.l.b16 %v1732
      %v1768 = vunpack.c.l.b16 %v1733
      %v1769 = vunpack.c.l.b16 %v1734
      %v1770 = vunpack.c.l.b16 %v1735
      %v1771 = vunpack.c.l.b16 %v1736
      %v1772 = vunpack.c.l.b16 %v1737
      %v1773 = vpack.c.b16 %v1758, %v1757
      %v1774 = vpack.c.b16 %v1760, %v1759
      %v1775 = vpack.c.b16 %v1762, %v1761
      %v1776 = vpack.c.b16 %v1764, %v1763
      %v1777 = vpack.c.b16 %v1766, %v1765
      %v1778 = vpack.c.b16 %v1768, %v1767
      %v1779 = vpack.c.b16 %v1770, %v1769
      %v1780 = vpack.c.b16 %v1772, %v1771
      %1789 = vmatpush.bf16.msra.mxu0 %v1780
      %1790 = vmatpush.bf16.msra.mxu0 %v1779
      %1791 = vmatpush.bf16.msra.mxu0 %v1778
      %1792 = vmatpush.bf16.msra.mxu0 %v1777
      %1793 = vmatpush.bf16.msra.mxu0 %v1776
      %1794 = vmatpush.bf16.msra.mxu0 %v1775
      %1795 = vmatpush.bf16.msra.mxu0 %v1774
      %1796 = vmatpush.bf16.msra.mxu0 %v1773
      %1797 = vmatmul.bf16.gmra.mxu0 %v1720
      %v1798 = vpop.f32.mrf.mxu0
      %v1799 = vadd.f32 %v1740, %v1798
      %v1800 = vpop.f32.mrf.mxu0
      %v1801 = vadd.f32 %v1740, %v1800
      %1802 = vmatmul.bf16.gmra.mxu0 %v1721
      %v1803 = vpop.f32.mrf.mxu0
      %v1804 = vadd.f32 %v1740, %v1803
      %v1805 = vpop.f32.mrf.mxu0
      %v1806 = vadd.f32 %v1740, %v1805
      %1807 = vdwg.mxu0
      %v1808 = vadd.f32 %v257, %v1799
      %v1809 = vadd.f32 %v258, %v1801
      %v1810 = vadd.f32 %v259, %v1804
      %v1811 = vadd.f32 %v260, %v1806
      %v1812 = vpack.c.bf16 %v1808, %v1808
      %v1813 = vpack.c.bf16 %v1809, %v1809
      %v1814 = vpack.c.bf16 %v1810, %v1810
      %v1815 = vpack.c.bf16 %v1811, %v1811
      %1816 = vst [vmem:[%s251] sm:$0xf] %v1812
      %1817 = vst [vmem:[%s251 + $0x4] sm:$0xf] %v1813
      %1818 = vst [vmem:[%s251 + $0x8] sm:$0xf] %v1814
      %1819 = vst [vmem:[%s251 + $0xc] sm:$0xf] %v1815
      %p1820 = scmp.lt.s32.totalorder %s17, 1
      %s1821 = scalar_select %p1820, %s17, 1
      %s1822 = smul.addr %s1821, 4
      %s1823 = smul.addr %s1822, 4
      %s1824 = scalar_lea.vmem %s6, %s1823
      // Predicated region
      $region45: #{discriminator_forward.7} parent=43 // pred_check
        %p1825 = pneg %p166
      $region46: #{discriminator_forward.7} parent=43 // pred_check_branch
        %1827 = sbr.rel (%p1825) target = $region48
      $region47: #{discriminator_forward.7} parent=43 // pred_region
        _
      $region48: #{discriminator_forward.7} parent=43 // pred_fallthru
        _
    $region44: #{discriminator_forward.7} parent=5 // pred_fallthru
      _
    %p1828 = scmp.le.s32.totalorder 2, %s12
    // Predicated region
    $region49: #{discriminator_forward.7} parent=5 // pred_check
      %p1829 = pneg %p1828
    $region50: #{discriminator_forward.7} parent=5 // pred_check_branch
      %1831 = sbr.rel (%p1829) target = $region52
    $region51: #{discriminator_forward.7} parent=5 // pred_region
      %s1832 = ssub.s32 %s12, 2
      // Predicated region
      $region53: #{discriminator_forward.7} parent=51 // pred_check
        %p1833 = pneg %p172
      $region54: #{discriminator_forward.7} parent=51 // pred_check_branch
        %1835 = sbr.rel (%p1833) target = $region56
      $region55: #{discriminator_forward.7} parent=51 // pred_region
        %p1836 = scmp.lt.s32.totalorder %s18, 1
        %s1837 = scalar_select %p1836, %s18, 1
        %s1838 = smul.addr %s1837, 4
        %s1839 = smul.addr %s1838, 4
        %s1840 = scalar_lea.vmem %s6, %s1839
      $region56: #{discriminator_forward.7} parent=51 // pred_fallthru
        _
    $region52: #{discriminator_forward.7} parent=5 // pred_fallthru
      _
  $region6: #{discriminator_forward.7} parent=0 // loop_footer
    %s16 = sadd.s32 1, %s12
  $region7: #{discriminator_forward.7} parent=0 // loop_footer_branch
    %11 = sbr.rel target = $region3
  $region8: #{discriminator_forward.7} parent=0 // loop_exit
    _

// kernel: discriminator_forward.11
$region0: #{discriminator_forward.11}
  #allocation0 [shape = 'u32[]', space=smem, size = 0x4, offset = 0x4, fixed_abs, tag = 'smem constant byte address 0x4 - core index']
  #allocation1 [shape = 'u32[72,128]{1,0:T(1,128)}', space=vmem, size = 0x9000, scoped, tag = 'internal scratch']
  #allocation2 [shape = 'bf16[1,1]{1,0:T(2,128)S(1)}', space=vmem, size = 0x200, scoped, tag = 'scoped memory for discriminator_forward.11']
  %s0 = inlined_call_operand.vmem [shape: bf16[16,128], index: 0, kind: input, shape index: {}]
  %s1 = inlined_call_operand.vmem [shape: bf16[1,128], index: 1, kind: input, shape index: {}]
  %s2 = inlined_call_operand.vmem [shape: bf16[1,128], index: 2, kind: input, shape index: {}]
  %s3 = inlined_call_operand.vmem [shape: bf16[128,1], index: 3, kind: input, shape index: {}]
  %s4 = inlined_call_operand.<no memory space> [shape: bf16[1,1], index: 4, kind: input, shape index: {}]
  %s5 = inlined_call_operand.vmem [shape: f32[16,1], index: 5, kind: output, shape index: {}]
  %s6 = sld [smem:[#allocation0]]
  $region30: #{discriminator_forward.11} parent=0
    _
  %s8 = ssub.s32 1, %s6
  %s9 = scalar_select 0, %s8, %s6
  %v10 = vstv %s4
  %11 = vst [vmem:[#allocation2] sm:$0x1] %v10
  // Predicated region
  $region2: #{discriminator_forward.11} parent=0 // pred_check
    _
  $region3: #{discriminator_forward.11} parent=0 // pred_check_branch
    %13 = sbr.rel (0) target = $region5
  $region4: #{discriminator_forward.11} parent=0 // pred_region
    _
  $region5: #{discriminator_forward.11} parent=0 // pred_fallthru
    _
  // Predicated region
  $region6: #{discriminator_forward.11} parent=0 // pred_check
    _
  $region7: #{discriminator_forward.11} parent=0 // pred_check_branch
    %15 = sbr.rel (0) target = $region9
  $region8: #{discriminator_forward.11} parent=0 // pred_region
    _
  $region9: #{discriminator_forward.11} parent=0 // pred_fallthru
    _
  // Predicated region
  $region10: #{discriminator_forward.11} parent=0 // pred_check
    _
  $region11: #{discriminator_forward.11} parent=0 // pred_check_branch
    %17 = sbr.rel (0) target = $region13
  $region12: #{discriminator_forward.11} parent=0 // pred_region
    _
  $region13: #{discriminator_forward.11} parent=0 // pred_fallthru
    _
  // Predicated region
  $region14: #{discriminator_forward.11} parent=0 // pred_check
    _
  $region15: #{discriminator_forward.11} parent=0 // pred_check_branch
    %19 = sbr.rel (0) target = $region17
  $region16: #{discriminator_forward.11} parent=0 // pred_region
    _
  $region17: #{discriminator_forward.11} parent=0 // pred_fallthru
    _
  // Predicated region
  $region18: #{discriminator_forward.11} parent=0 // pred_check
    _
  $region19: #{discriminator_forward.11} parent=0 // pred_check_branch
    %21 = sbr.rel (0) target = $region21
  $region20: #{discriminator_forward.11} parent=0 // pred_region
    _
  $region21: #{discriminator_forward.11} parent=0 // pred_fallthru
    _
  %v22 = vld [vmem:[%s0] sm:$0xf]
  %v23 = vld [vmem:[%s0 + $0x4] sm:$0xf]
  %v24 = vunpack.c.l.bf16 %v22
  %v25 = vunpack.c.l.bf16 %v23
  %26 = vadd.xlane.f32.xlu0 %v24
  %v27 = vpop.xlane.xlu0 %26
  %28 = vadd.xlane.f32.xlu0 %v25
  %v29 = vpop.xlane.xlu0 %28
  %v30 = vrcp.pop 128.0
  %v31 = vmul.f32 128.0, %v30
  %v32 = vsub.f32 1.0, %v31
  %v33 = vmul.f32 %v30, %v32
  %v34 = vadd.f32 %v30, %v33
  %vm35 = vweird.f32 %v30
  %v36 = vsel %vm35, %v30, %v34
  %v37 = vmul.f32 %v27, %v36
  %v38 = vmul.f32 %v29, %v36
  %v39 = vsub.f32 %v24, %v37
  %v40 = vsub.f32 %v25, %v38
  %v41 = vmul.f32 %v39, %v39
  %v42 = vmul.f32 %v40, %v40
  %43 = vadd.xlane.f32.xlu0 %v41
  %v44 = vpop.xlane.xlu0 %43
  %45 = vadd.xlane.f32.xlu0 %v42
  %v46 = vpop.xlane.xlu0 %45
  %v47 = vmul.f32 %v44, %v36
  %v48 = vmul.f32 %v46, %v36
  %v49 = vadd.f32 %v47, 1e-05
  %v50 = vadd.f32 %v48, 1e-05
  %v51 = vrsqrt.pop %v49
  %v52 = vmul.f32 %v51, %v49
  %v53 = vmul.f32 %v52, %v51
  %v54 = vmul.f32 0.5, %v53
  %v55 = vsub.f32 1.5, %v54
  %v56 = vmul.f32 %v51, %v55
  %vm57 = vweird.f32 %v49
  %vm58 = vweird.f32 %v51
  %vm59 = vmor %vm57, %vm58
  %v60 = vsel %vm59, %v51, %v56
  %v61 = vrsqrt.pop %v50
  %v62 = vmul.f32 %v61, %v50
  %v63 = vmul.f32 %v62, %v61
  %v64 = vmul.f32 0.5, %v63
  %v65 = vsub.f32 1.5, %v64
  %v66 = vmul.f32 %v61, %v65
  %vm67 = vweird.f32 %v50
  %vm68 = vweird.f32 %v61
  %vm69 = vmor %vm67, %vm68
  %v70 = vsel %vm69, %v61, %v66
  %v71 = vmul.f32 %v39, %v60
  %v72 = vmul.f32 %v40, %v70
  %v73 = vld [vmem:[%s1] sm:$0x1]
  %v74 = vunpack.c.l.bf16 %v73
  %v75 = vperm.slane %v74, 0
  %v76 = vmul.f32 %v71, %v75
  %v77 = vmul.f32 %v72, %v75
  %v78 = vld [vmem:[%s2] sm:$0x1]
  %v79 = vunpack.c.l.bf16 %v78
  %v80 = vperm.slane %v79, 0
  %v81 = vadd.f32 %v76, %v80
  %v82 = vadd.f32 %v77, %v80
  %v83 = vpack.c.bf16 %v82, %v81
  %v84 = vld [vmem:[%s3] sm:$0xf]
  %v85 = vld [vmem:[%s3 + $0x4] sm:$0xf]
  %v86 = vld [vmem:[%s3 + $0x8] sm:$0xf]
  %v87 = vld [vmem:[%s3 + $0xc] sm:$0xf]
  %v88 = vld [vmem:[%s3 + $0x10] sm:$0xf]
  %v89 = vld [vmem:[%s3 + $0x14] sm:$0xf]
  %v90 = vld [vmem:[%s3 + $0x18] sm:$0xf]
  %v91 = vld [vmem:[%s3 + $0x1c] sm:$0xf]
  %v92 = vld [vmem:[%s3 + $0x20] sm:$0xf]
  %v93 = vld [vmem:[%s3 + $0x24] sm:$0xf]
  %v94 = vld [vmem:[%s3 + $0x28] sm:$0xf]
  %v95 = vld [vmem:[%s3 + $0x2c] sm:$0xf]
  %v96 = vld [vmem:[%s3 + $0x30] sm:$0xf]
  %v97 = vld [vmem:[%s3 + $0x34] sm:$0xf]
  %v98 = vld [vmem:[%s3 + $0x38] sm:$0xf]
  %v99 = vld [vmem:[%s3 + $0x3c] sm:$0xf]
  %v100 = vld [vmem:[#allocation2] sm:$0x1]
  %v101 = vunpack.c.l.bf16 %v100
  %v102 = vperm.slane %v101, 0
  %v119 = vunpack.c.l.b16 %v84
  %v120 = vunpack.c.l.b16 %v85
  %v121 = vunpack.c.l.b16 %v86
  %v122 = vunpack.c.l.b16 %v87
  %v123 = vunpack.c.l.b16 %v88
  %v124 = vunpack.c.l.b16 %v89
  %v125 = vunpack.c.l.b16 %v90
  %v126 = vunpack.c.l.b16 %v91
  %v127 = vunpack.c.l.b16 %v92
  %v128 = vunpack.c.l.b16 %v93
  %v129 = vunpack.c.l.b16 %v94
  %v130 = vunpack.c.l.b16 %v95
  %v131 = vunpack.c.l.b16 %v96
  %v132 = vunpack.c.l.b16 %v97
  %v133 = vunpack.c.l.b16 %v98
  %v134 = vunpack.c.l.b16 %v99
  %v135 = vpack.c.b16 %v120, %v119
  %v136 = vpack.c.b16 %v122, %v121
  %v137 = vpack.c.b16 %v124, %v123
  %v138 = vpack.c.b16 %v126, %v125
  %v139 = vpack.c.b16 %v128, %v127
  %v140 = vpack.c.b16 %v130, %v129
  %v141 = vpack.c.b16 %v132, %v131
  %v142 = vpack.c.b16 %v134, %v133
  %151 = vmatpush.bf16.msra.mxu0 %v142
  %152 = vmatpush.bf16.msra.mxu0 %v141
  %153 = vmatpush.bf16.msra.mxu0 %v140
  %154 = vmatpush.bf16.msra.mxu0 %v139
  %155 = vmatpush.bf16.msra.mxu0 %v138
  %156 = vmatpush.bf16.msra.mxu0 %v137
  %157 = vmatpush.bf16.msra.mxu0 %v136
  %158 = vmatpush.bf16.msra.mxu0 %v135
  %159 = vmatmul.bf16.gmra.mxu0 %v83
  %v160 = vpop.f32.mrf.mxu0
  %v161 = vadd.f32 %v102, %v160
  %v162 = vpop.f32.mrf.mxu0
  %v163 = vadd.f32 %v102, %v162
  %164 = vdwg.mxu0
  %vm165 = vcmask 7168
  %166 = vst.msk [vmem:[%s5] sm:$0xff] %vm165, %v161
  %167 = vst.msk [vmem:[%s5 + $0x8] sm:$0xff] %vm165, %v163
  // Predicated region
  $region22: #{discriminator_forward.11} parent=0 // pred_check
    _
  $region23: #{discriminator_forward.11} parent=0 // pred_check_branch
    %169 = sbr.rel (0) target = $region25
  $region24: #{discriminator_forward.11} parent=0 // pred_region
    _
  $region25: #{discriminator_forward.11} parent=0 // pred_fallthru
    _
  // Predicated region
  $region26: #{discriminator_forward.11} parent=0 // pred_check
    _
  $region27: #{discriminator_forward.11} parent=0 // pred_check_branch
    %171 = sbr.rel (0) target = $region29
  $region28: #{discriminator_forward.11} parent=0 // pred_region
    _
  $region29: #{discriminator_forward.11} parent=0 // pred_fallthru
    _

// kernel: discriminator_forward.8
$region0: #{discriminator_forward.8}
  #allocation0 [shape = 'u32[]', space=smem, size = 0x4, offset = 0x4, fixed_abs, tag = 'smem constant byte address 0x4 - core index']
  #allocation1 [shape = 'u32[72,128]{1,0:T(1,128)}', space=vmem, size = 0x9000, scoped, tag = 'internal scratch']
  %s0 = inlined_call_operand.vmem [shape: bf16[64,128], index: 0, kind: input, shape index: {}]
  %s1 = inlined_call_operand.vmem [shape: bf16[1,128], index: 1, kind: input, shape index: {}]
  %s2 = inlined_call_operand.vmem [shape: bf16[1,128], index: 2, kind: input, shape index: {}]
  %s3 = inlined_call_operand.vmem [shape: bf16[128,512], index: 3, kind: input, shape index: {}]
  %s4 = inlined_call_operand.vmem [shape: bf16[1,512], index: 4, kind: input, shape index: {}]
  %s5 = inlined_call_operand.vmem [shape: bf16[512,128], index: 5, kind: input, shape index: {}]
  %s6 = inlined_call_operand.vmem [shape: bf16[1,128], index: 6, kind: input, shape index: {}]
  %s7 = inlined_call_operand.vmem [shape: bf16[64,128], index: 7, kind: output, shape index: {}]
  %s8 = sld [smem:[#allocation0]]
  $region61: #{discriminator_forward.8} parent=0
    _
  %s10 = ssub.s32 1, %s8
  %s11 = scalar_select 0, %s10, %s8
  loop: start=0, step=1, limit=4
  $region2: #{discriminator_forward.8} parent=0 // loop_pre_header
    _
  $region3: #{discriminator_forward.8} parent=0 // loop_header
    %s13 = sphi 0, %s17
    %p14 = scmp.ge.s32.totalorder %s13, 4
    %s23 = sphi 0, %s25
    %s26 = sphi 0, %s23
    %s27 = sphi 0, %s26
    %s43 = sphi 0, %s27
    %s47 = sphi 0, %s47
    %s49 = sphi 0, %s47
    %s50 = sphi 0, %s49
    %s64 = sphi 0, %s50
    %s68 = sphi 0, %s68
    %s70 = sphi 0, %s68
    %s71 = sphi 0, %s70
    %s85 = sphi 0, %s71
    %s89 = sphi 0, %s89
    %s91 = sphi 0, %s89
    %s92 = sphi 0, %s91
    %s106 = sphi 0, %s92
    %s110 = sphi 0, %s110
    %s112 = sphi 0, %s110
    %s113 = sphi 0, %s112
    %s127 = sphi 0, %s113
    %s131 = sphi 0, %s131
    %s133 = sphi 0, %s131
    %s134 = sphi 0, %s133
    %s148 = sphi 0, %s134
    %s152 = sphi 0, %s152
    %s154 = sphi 0, %s152
    %s155 = sphi 0, %s154
    %s169 = sphi 0, %s155
    %s175 = sphi 0, %s177
    %s178 = sphi 0, %s175
    %s179 = sphi 0, %s178
    %s195 = sphi 0, %s179
  $region4: #{discriminator_forward.8} parent=0 // loop_header_branch
    %16 = sbr.rel (%p14) target = $region8
  $region5: #{discriminator_forward.8} parent=0 // loop_body
    %s18 = ssub.s32 %s13, 1
    %s19 = ssub.s32 %s13, 2
    %s20 = sadd.s32 %s13, 1
    %s21 = ssub.s32 %s13, %s20
    %p22 = scmp.eq.s32.totalorder %s21, 0
    %s24 = sadd.s32 %s23, 1
    %s25 = scalar_select %p22, %s23, %s24
    %p28 = pneg %p22
    %p29 = scmp.eq.s32.totalorder %s13, 1
    %p30 = por %p28, %p29
    %p31 = scmp.ne.s32.totalorder %s23, %s26
    %p32 = scmp.eq.s32.totalorder %s13, 0
    %p33 = por %p31, %p32
    %p34 = scmp.ne.s32.totalorder %s23, %s26
    %p35 = scmp.eq.s32.totalorder %s18, 1
    %p36 = por %p34, %p35
    %p37 = scmp.ne.s32.totalorder %s26, %s27
    %p38 = scmp.eq.s32.totalorder %s18, 0
    %p39 = por %p37, %p38
    %p40 = scmp.ne.s32.totalorder %s26, %s27
    %p41 = scmp.eq.s32.totalorder %s19, 1
    %p42 = por %p40, %p41
    %p44 = scmp.ne.s32.totalorder %s27, %s43
    %p45 = scmp.eq.s32.totalorder %s19, 0
    %p46 = por %p44, %p45
    %s48 = sadd.s32 %s47, 1
    %p51 = scmp.eq.s32.totalorder %s13, 1
    %p52 = scmp.ne.s32.totalorder %s47, %s49
    %p53 = scmp.eq.s32.totalorder %s13, 0
    %p54 = por %p52, %p53
    %p55 = scmp.ne.s32.totalorder %s47, %s49
    %p56 = scmp.eq.s32.totalorder %s18, 1
    %p57 = por %p55, %p56
    %p58 = scmp.ne.s32.totalorder %s49, %s50
    %p59 = scmp.eq.s32.totalorder %s18, 0
    %p60 = por %p58, %p59
    %p61 = scmp.ne.s32.totalorder %s49, %s50
    %p62 = scmp.eq.s32.totalorder %s19, 1
    %p63 = por %p61, %p62
    %p65 = scmp.ne.s32.totalorder %s50, %s64
    %p66 = scmp.eq.s32.totalorder %s19, 0
    %p67 = por %p65, %p66
    %s69 = sadd.s32 %s68, 1
    %p72 = scmp.eq.s32.totalorder %s13, 1
    %p73 = scmp.ne.s32.totalorder %s68, %s70
    %p74 = scmp.eq.s32.totalorder %s13, 0
    %p75 = por %p73, %p74
    %p76 = scmp.ne.s32.totalorder %s68, %s70
    %p77 = scmp.eq.s32.totalorder %s18, 1
    %p78 = por %p76, %p77
    %p79 = scmp.ne.s32.totalorder %s70, %s71
    %p80 = scmp.eq.s32.totalorder %s18, 0
    %p81 = por %p79, %p80
    %p82 = scmp.ne.s32.totalorder %s70, %s71
    %p83 = scmp.eq.s32.totalorder %s19, 1
    %p84 = por %p82, %p83
    %p86 = scmp.ne.s32.totalorder %s71, %s85
    %p87 = scmp.eq.s32.totalorder %s19, 0
    %p88 = por %p86, %p87
    %s90 = sadd.s32 %s89, 1
    %p93 = scmp.eq.s32.totalorder %s13, 1
    %p94 = scmp.ne.s32.totalorder %s89, %s91
    %p95 = scmp.eq.s32.totalorder %s13, 0
    %p96 = por %p94, %p95
    %p97 = scmp.ne.s32.totalorder %s89, %s91
    %p98 = scmp.eq.s32.totalorder %s18, 1
    %p99 = por %p97, %p98
    %p100 = scmp.ne.s32.totalorder %s91, %s92
    %p101 = scmp.eq.s32.totalorder %s18, 0
    %p102 = por %p100, %p101
    %p103 = scmp.ne.s32.totalorder %s91, %s92
    %p104 = scmp.eq.s32.totalorder %s19, 1
    %p105 = por %p103, %p104
    %p107 = scmp.ne.s32.totalorder %s92, %s106
    %p108 = scmp.eq.s32.totalorder %s19, 0
    %p109 = por %p107, %p108
    %s111 = sadd.s32 %s110, 1
    %p114 = scmp.eq.s32.totalorder %s13, 1
    %p115 = scmp.ne.s32.totalorder %s110, %s112
    %p116 = scmp.eq.s32.totalorder %s13, 0
    %p117 = por %p115, %p116
    %p118 = scmp.ne.s32.totalorder %s110, %s112
    %p119 = scmp.eq.s32.totalorder %s18, 1
    %p120 = por %p118, %p119
    %p121 = scmp.ne.s32.totalorder %s112, %s113
    %p122 = scmp.eq.s32.totalorder %s18, 0
    %p123 = por %p121, %p122
    %p124 = scmp.ne.s32.totalorder %s112, %s113
    %p125 = scmp.eq.s32.totalorder %s19, 1
    %p126 = por %p124, %p125
    %p128 = scmp.ne.s32.totalorder %s113, %s127
    %p129 = scmp.eq.s32.totalorder %s19, 0
    %p130 = por %p128, %p129
    %s132 = sadd.s32 %s131, 1
    %p135 = scmp.eq.s32.totalorder %s13, 1
    %p136 = scmp.ne.s32.totalorder %s131, %s133
    %p137 = scmp.eq.s32.totalorder %s13, 0
    %p138 = por %p136, %p137
    %p139 = scmp.ne.s32.totalorder %s131, %s133
    %p140 = scmp.eq.s32.totalorder %s18, 1
    %p141 = por %p139, %p140
    %p142 = scmp.ne.s32.totalorder %s133, %s134
    %p143 = scmp.eq.s32.totalorder %s18, 0
    %p144 = por %p142, %p143
    %p145 = scmp.ne.s32.totalorder %s133, %s134
    %p146 = scmp.eq.s32.totalorder %s19, 1
    %p147 = por %p145, %p146
    %p149 = scmp.ne.s32.totalorder %s134, %s148
    %p150 = scmp.eq.s32.totalorder %s19, 0
    %p151 = por %p149, %p150
    %s153 = sadd.s32 %s152, 1
    %p156 = scmp.eq.s32.totalorder %s13, 1
    %p157 = scmp.ne.s32.totalorder %s152, %s154
    %p158 = scmp.eq.s32.totalorder %s13, 0
    %p159 = por %p157, %p158
    %p160 = scmp.ne.s32.totalorder %s152, %s154
    %p161 = scmp.eq.s32.totalorder %s18, 1
    %p162 = por %p160, %p161
    %p163 = scmp.ne.s32.totalorder %s154, %s155
    %p164 = scmp.eq.s32.totalorder %s18, 0
    %p165 = por %p163, %p164
    %p166 = scmp.ne.s32.totalorder %s154, %s155
    %p167 = scmp.eq.s32.totalorder %s19, 1
    %p168 = por %p166, %p167
    %p170 = scmp.ne.s32.totalorder %s155, %s169
    %p171 = scmp.eq.s32.totalorder %s19, 0
    %p172 = por %p170, %p171
    %s173 = ssub.s32 %s13, %s20
    %p174 = scmp.eq.s32.totalorder %s173, 0
    %s176 = sadd.s32 %s175, 1
    %s177 = scalar_select %p174, %s175, %s176
    %p180 = pneg %p174
    %p181 = scmp.eq.s32.totalorder %s13, 1
    %p182 = por %p180, %p181
    %p183 = scmp.ne.s32.totalorder %s175, %s178
    %p184 = scmp.eq.s32.totalorder %s13, 0
    %p185 = por %p183, %p184
    %p186 = scmp.ne.s32.totalorder %s175, %s178
    %p187 = scmp.eq.s32.totalorder %s18, 1
    %p188 = por %p186, %p187
    %p189 = scmp.ne.s32.totalorder %s178, %s179
    %p190 = scmp.eq.s32.totalorder %s18, 0
    %p191 = por %p189, %p190
    %p192 = scmp.ne.s32.totalorder %s178, %s179
    %p193 = scmp.eq.s32.totalorder %s19, 1
    %p194 = por %p192, %p193
    %p196 = scmp.ne.s32.totalorder %s179, %s195
    %p197 = scmp.eq.s32.totalorder %s19, 0
    %p198 = por %p196, %p197
    %p199 = scmp.le.s32.totalorder 1, %s13
    %p200 = scmp.lt.s32.totalorder %s13, 3
    %p201 = pnand %p199, %p200
    %p202 = pneg %p201
    // Predicated region
    $region9: #{discriminator_forward.8} parent=5 // pred_check
      _
    $region10: #{discriminator_forward.8} parent=5 // pred_check_branch
      %204 = sbr.rel (%p201) target = $region12
    $region11: #{discriminator_forward.8} parent=5 // pred_region
      %s205 = ssub.s32 %s13, 1
      // Predicated region
      $region13: #{discriminator_forward.8} parent=11 // pred_check
        %p206 = pneg %p60
      $region14: #{discriminator_forward.8} parent=11 // pred_check_branch
        %208 = sbr.rel (%p206) target = $region16
      $region15: #{discriminator_forward.8} parent=11 // pred_region
        _
      $region16: #{discriminator_forward.8} parent=11 // pred_fallthru
        _
      // Predicated region
      $region17: #{discriminator_forward.8} parent=11 // pred_check
        %p209 = pneg %p81
      $region18: #{discriminator_forward.8} parent=11 // pred_check_branch
        %211 = sbr.rel (%p209) target = $region20
      $region19: #{discriminator_forward.8} parent=11 // pred_region
        _
      $region20: #{discriminator_forward.8} parent=11 // pred_fallthru
        _
      // Predicated region
      $region21: #{discriminator_forward.8} parent=11 // pred_check
        %p212 = pneg %p102
      $region22: #{discriminator_forward.8} parent=11 // pred_check_branch
        %214 = sbr.rel (%p212) target = $region24
      $region23: #{discriminator_forward.8} parent=11 // pred_region
        _
      $region24: #{discriminator_forward.8} parent=11 // pred_fallthru
        _
      // Predicated region
      $region25: #{discriminator_forward.8} parent=11 // pred_check
        %p215 = pneg %p123
      $region26: #{discriminator_forward.8} parent=11 // pred_check_branch
        %217 = sbr.rel (%p215) target = $region28
      $region27: #{discriminator_forward.8} parent=11 // pred_region
        _
      $region28: #{discriminator_forward.8} parent=11 // pred_fallthru
        _
      // Predicated region
      $region29: #{discriminator_forward.8} parent=11 // pred_check
        %p218 = pneg %p144
      $region30: #{discriminator_forward.8} parent=11 // pred_check_branch
        %220 = sbr.rel (%p218) target = $region32
      $region31: #{discriminator_forward.8} parent=11 // pred_region
        _
      $region32: #{discriminator_forward.8} parent=11 // pred_fallthru
        _
      // Predicated region
      $region33: #{discriminator_forward.8} parent=11 // pred_check
        %p221 = pneg %p165
      $region34: #{discriminator_forward.8} parent=11 // pred_check_branch
        %223 = sbr.rel (%p221) target = $region36
      $region35: #{discriminator_forward.8} parent=11 // pred_region
        _
      $region36: #{discriminator_forward.8} parent=11 // pred_fallthru
        _
    $region12: #{discriminator_forward.8} parent=5 // pred_fallthru
      _
    %p224 = scmp.lt.s32.totalorder %s13, 2
    // Predicated region
    $region37: #{discriminator_forward.8} parent=5 // pred_check
      %p225 = pneg %p224
    $region38: #{discriminator_forward.8} parent=5 // pred_check_branch
      %227 = sbr.rel (%p225) target = $region40
    $region39: #{discriminator_forward.8} parent=5 // pred_region
      // Predicated region
      $region41: #{discriminator_forward.8} parent=39 // pred_check
        %p228 = pneg %p33
      $region42: #{discriminator_forward.8} parent=39 // pred_check_branch
        %230 = sbr.rel (%p228) target = $region44
      $region43: #{discriminator_forward.8} parent=39 // pred_region
        %s231 = smul.u32 4, %s13
        %p232 = scmp.lt.s32.totalorder %s231, 7
        %s233 = scalar_select %p232, %s231, 7
        %s234 = smul.addr %s233, 4
        %s235 = scalar_lea.vmem %s0, %s234
        %s236 = smul.u32 4, %s13
      $region44: #{discriminator_forward.8} parent=39 // pred_fallthru
        _
    $region40: #{discriminator_forward.8} parent=5 // pred_fallthru
      _
    %p237 = scmp.le.s32.totalorder 1, %s13
    %p238 = scmp.lt.s32.totalorder %s13, 3
    %p239 = pnand %p237, %p238
    %p240 = pneg %p239
    // Predicated region
    $region45: #{discriminator_forward.8} parent=5 // pred_check
      _
    $region46: #{discriminator_forward.8} parent=5 // pred_check_branch
      %242 = sbr.rel (%p239) target = $region48
    $region47: #{discriminator_forward.8} parent=5 // pred_region
      %s243 = ssub.s32 %s13, 1
      %s244 = smul.u32 4, %s18
      %p245 = scmp.lt.s32.totalorder %s244, 7
      %s246 = scalar_select %p245, %s244, 7
      %s247 = smul.addr %s246, 4
      %s248 = scalar_lea.vmem %s0, %s247
      %p249 = pneg %p39
      %p250 = pneg %p36
      %p251 = pneg %p60
      %p252 = pneg %p57
      %p253 = pneg %p81
      %p254 = pneg %p78
      %p255 = pneg %p102
      %p256 = pneg %p99
      %p257 = pneg %p123
      %p258 = pneg %p120
      %p259 = pneg %p144
      %p260 = pneg %p141
      %p261 = pneg %p165
      %p262 = pneg %p162
      %p263 = pneg %p191
      %p264 = pneg %p188
      %s265 = smul.u32 4, %s18
      %p266 = scmp.lt.s32.totalorder %s265, 7
      %s267 = scalar_select %p266, %s265, 7
      %s268 = smul.addr %s267, 4
      %s269 = scalar_lea.vmem %s7, %s268
      %s270 = smul.u32 4, %s18
      %p271 = scmp.lt.s32.totalorder %s270, 7
      %s272 = scalar_select %p271, %s270, 7
      %s273 = smul.addr %s272, 4
      %s274 = scalar_lea.vmem %s0, %s273
      %s275 = smul.u32 4, %s18
      %s276 = smul.u32 4, %s18
      %p277 = scmp.lt.s32.totalorder %s276, 7
      %s278 = scalar_select %p277, %s276, 7
      %s279 = smul.addr %s278, 4
      %s280 = scalar_lea.vmem %s7, %s279
      %s281 = smul.u32 4, %s18
      %v282 = vld [vmem:[%s274] sm:$0xf]
      %v283 = vld [vmem:[%s274 + $0x4] sm:$0xf]
      %v284 = vld [vmem:[%s274 + $0x8] sm:$0xf]
      %v285 = vld [vmem:[%s274 + $0xc] sm:$0xf]
      %v286 = vunpack.c.l.bf16 %v282
      %v287 = vunpack.c.l.bf16 %v283
      %v288 = vunpack.c.l.bf16 %v284
      %v289 = vunpack.c.l.bf16 %v285
      %290 = vadd.xlane.f32.xlu0 %v286
      %v291 = vpop.xlane.xlu0 %290
      %292 = vadd.xlane.f32.xlu0 %v287
      %v293 = vpop.xlane.xlu0 %292
      %294 = vadd.xlane.f32.xlu0 %v288
      %v295 = vpop.xlane.xlu0 %294
      %296 = vadd.xlane.f32.xlu0 %v289
      %v297 = vpop.xlane.xlu0 %296
      %v298 = vrcp.pop 128.0
      %v299 = vmul.f32 128.0, %v298
      %v300 = vsub.f32 1.0, %v299
      %v301 = vmul.f32 %v298, %v300
      %v302 = vadd.f32 %v298, %v301
      %vm303 = vweird.f32 %v298
      %v304 = vsel %vm303, %v298, %v302
      %v305 = vmul.f32 %v291, %v304
      %v306 = vmul.f32 %v293, %v304
      %v307 = vmul.f32 %v295, %v304
      %v308 = vmul.f32 %v297, %v304
      %v309 = vsub.f32 %v286, %v305
      %v310 = vsub.f32 %v287, %v306
      %v311 = vsub.f32 %v288, %v307
      %v312 = vsub.f32 %v289, %v308
      %v313 = vmul.f32 %v309, %v309
      %v314 = vmul.f32 %v310, %v310
      %v315 = vmul.f32 %v311, %v311
      %v316 = vmul.f32 %v312, %v312
      %317 = vadd.xlane.f32.xlu0 %v313
      %v318 = vpop.xlane.xlu0 %317
      %319 = vadd.xlane.f32.xlu0 %v314
      %v320 = vpop.xlane.xlu0 %319
      %321 = vadd.xlane.f32.xlu0 %v315
      %v322 = vpop.xlane.xlu0 %321
      %323 = vadd.xlane.f32.xlu0 %v316
      %v324 = vpop.xlane.xlu0 %323
      %v325 = vmul.f32 %v318, %v304
      %v326 = vmul.f32 %v320, %v304
      %v327 = vmul.f32 %v322, %v304
      %v328 = vmul.f32 %v324, %v304
      %v329 = vadd.f32 %v325, 1e-05
      %v330 = vadd.f32 %v326, 1e-05
      %v331 = vadd.f32 %v327, 1e-05
      %v332 = vadd.f32 %v328, 1e-05
      %v333 = vrsqrt.pop %v329
      %v334 = vmul.f32 %v333, %v329
      %v335 = vmul.f32 %v334, %v333
      %v336 = vmul.f32 0.5, %v335
      %v337 = vsub.f32 1.5, %v336
      %v338 = vmul.f32 %v333, %v337
      %vm339 = vweird.f32 %v329
      %vm340 = vweird.f32 %v333
      %vm341 = vmor %vm339, %vm340
      %v342 = vsel %vm341, %v333, %v338
      %v343 = vrsqrt.pop %v330
      %v344 = vmul.f32 %v343, %v330
      %v345 = vmul.f32 %v344, %v343
      %v346 = vmul.f32 0.5, %v345
      %v347 = vsub.f32 1.5, %v346
      %v348 = vmul.f32 %v343, %v347
      %vm349 = vweird.f32 %v330
      %vm350 = vweird.f32 %v343
      %vm351 = vmor %vm349, %vm350
      %v352 = vsel %vm351, %v343, %v348
      %v353 = vrsqrt.pop %v331
      %v354 = vmul.f32 %v353, %v331
      %v355 = vmul.f32 %v354, %v353
      %v356 = vmul.f32 0.5, %v355
      %v357 = vsub.f32 1.5, %v356
      %v358 = vmul.f32 %v353, %v357
      %vm359 = vweird.f32 %v331
      %vm360 = vweird.f32 %v353
      %vm361 = vmor %vm359, %vm360
      %v362 = vsel %vm361, %v353, %v358
      %v363 = vrsqrt.pop %v332
      %v364 = vmul.f32 %v363, %v332
      %v365 = vmul.f32 %v364, %v363
      %v366 = vmul.f32 0.5, %v365
      %v367 = vsub.f32 1.5, %v366
      %v368 = vmul.f32 %v363, %v367
      %vm369 = vweird.f32 %v332
      %vm370 = vweird.f32 %v363
      %vm371 = vmor %vm369, %vm370
      %v372 = vsel %vm371, %v363, %v368
      %v373 = vmul.f32 %v309, %v342
      %v374 = vmul.f32 %v310, %v352
      %v375 = vmul.f32 %v311, %v362
      %v376 = vmul.f32 %v312, %v372
      %v377 = vld [vmem:[%s1] sm:$0x1]
      %v378 = vunpack.c.l.bf16 %v377
      %v379 = vperm.slane %v378, 0
      %v380 = vmul.f32 %v373, %v379
      %v381 = vmul.f32 %v374, %v379
      %v382 = vmul.f32 %v375, %v379
      %v383 = vmul.f32 %v376, %v379
      %v384 = vld [vmem:[%s2] sm:$0x1]
      %v385 = vunpack.c.l.bf16 %v384
      %v386 = vperm.slane %v385, 0
      %v387 = vadd.f32 %v380, %v386
      %v388 = vadd.f32 %v381, %v386
      %v389 = vadd.f32 %v382, %v386
      %v390 = vadd.f32 %v383, %v386
      %v391 = vpack.c.bf16 %v388, %v387
      %v392 = vpack.c.bf16 %v390, %v389
      %v393 = vld [vmem:[%s3] sm:$0xff]
      %v394 = vld [vmem:[%s3 + $0x8] sm:$0xff]
      %v395 = vld [vmem:[%s3 + $0x10] sm:$0xff]
      %v396 = vld [vmem:[%s3 + $0x18] sm:$0xff]
      %v397 = vld [vmem:[%s3 + $0x20] sm:$0xff]
      %v398 = vld [vmem:[%s3 + $0x28] sm:$0xff]
      %v399 = vld [vmem:[%s3 + $0x30] sm:$0xff]
      %v400 = vld [vmem:[%s3 + $0x38] sm:$0xff]
      %v401 = vld [vmem:[%s3 + $0x40] sm:$0xff]
      %v402 = vld [vmem:[%s3 + $0x48] sm:$0xff]
      %v403 = vld [vmem:[%s3 + $0x50] sm:$0xff]
      %v404 = vld [vmem:[%s3 + $0x58] sm:$0xff]
      %v405 = vld [vmem:[%s3 + $0x60] sm:$0xff]
      %v406 = vld [vmem:[%s3 + $0x68] sm:$0xff]
      %v407 = vld [vmem:[%s3 + $0x70] sm:$0xff]
      %v408 = vld [vmem:[%s3 + $0x78] sm:$0xff]
      %v409 = vld [vmem:[%s3 + $0x80] sm:$0xff]
      %v410 = vld [vmem:[%s3 + $0x88] sm:$0xff]
      %v411 = vld [vmem:[%s3 + $0x90] sm:$0xff]
      %v412 = vld [vmem:[%s3 + $0x98] sm:$0xff]
      %v413 = vld [vmem:[%s3 + $0xa0] sm:$0xff]
      %v414 = vld [vmem:[%s3 + $0xa8] sm:$0xff]
      %v415 = vld [vmem:[%s3 + $0xb0] sm:$0xff]
      %v416 = vld [vmem:[%s3 + $0xb8] sm:$0xff]
      %v417 = vld [vmem:[%s3 + $0xc0] sm:$0xff]
      %v418 = vld [vmem:[%s3 + $0xc8] sm:$0xff]
      %v419 = vld [vmem:[%s3 + $0xd0] sm:$0xff]
      %v420 = vld [vmem:[%s3 + $0xd8] sm:$0xff]
      %v421 = vld [vmem:[%s3 + $0xe0] sm:$0xff]
      %v422 = vld [vmem:[%s3 + $0xe8] sm:$0xff]
      %v423 = vld [vmem:[%s3 + $0xf0] sm:$0xff]
      %v424 = vld [vmem:[%s3 + $0xf8] sm:$0xff]
      %v425 = vld [vmem:[%s4] sm:$0xf]
      %v426 = vunpack.c.l.bf16 %v425
      %v428 = vperm.slane %v426, 0
      %v429 = vperm.slane %v426, 2
      %v430 = vperm.slane %v426, 4
      %v431 = vperm.slane %v426, 6
      %v436 = vperm.slane %v428, 0
      %v437 = vperm.slane %v429, 0
      %v438 = vperm.slane %v430, 0
      %v439 = vperm.slane %v431, 0
      %v472 = vunpack.c.l.b16 %v393
      %v473 = vunpack.c.h.b16 %v393
      %v474 = vunpack.c.l.b16 %v394
      %v475 = vunpack.c.h.b16 %v394
      %v476 = vunpack.c.l.b16 %v395
      %v477 = vunpack.c.h.b16 %v395
      %v478 = vunpack.c.l.b16 %v396
      %v479 = vunpack.c.h.b16 %v396
      %v480 = vunpack.c.l.b16 %v397
      %v481 = vunpack.c.h.b16 %v397
      %v482 = vunpack.c.l.b16 %v398
      %v483 = vunpack.c.h.b16 %v398
      %v484 = vunpack.c.l.b16 %v399
      %v485 = vunpack.c.h.b16 %v399
      %v486 = vunpack.c.l.b16 %v400
      %v487 = vunpack.c.h.b16 %v400
      %v488 = vunpack.c.l.b16 %v401
      %v489 = vunpack.c.h.b16 %v401
      %v490 = vunpack.c.l.b16 %v402
      %v491 = vunpack.c.h.b16 %v402
      %v492 = vunpack.c.l.b16 %v403
      %v493 = vunpack.c.h.b16 %v403
      %v494 = vunpack.c.l.b16 %v404
      %v495 = vunpack.c.h.b16 %v404
      %v496 = vunpack.c.l.b16 %v405
      %v497 = vunpack.c.h.b16 %v405
      %v498 = vunpack.c.l.b16 %v406
      %v499 = vunpack.c.h.b16 %v406
      %v500 = vunpack.c.l.b16 %v407
      %v501 = vunpack.c.h.b16 %v407
      %v502 = vunpack.c.l.b16 %v408
      %v503 = vunpack.c.h.b16 %v408
      %v504 = vunpack.c.l.b16 %v409
      %v505 = vunpack.c.h.b16 %v409
      %v506 = vunpack.c.l.b16 %v410
      %v507 = vunpack.c.h.b16 %v410
      %v508 = vunpack.c.l.b16 %v411
      %v509 = vunpack.c.h.b16 %v411
      %v510 = vunpack.c.l.b16 %v412
      %v511 = vunpack.c.h.b16 %v412
      %v512 = vunpack.c.l.b16 %v413
      %v513 = vunpack.c.h.b16 %v413
      %v514 = vunpack.c.l.b16 %v414
      %v515 = vunpack.c.h.b16 %v414
      %v516 = vunpack.c.l.b16 %v415
      %v517 = vunpack.c.h.b16 %v415
      %v518 = vunpack.c.l.b16 %v416
      %v519 = vunpack.c.h.b16 %v416
      %v520 = vunpack.c.l.b16 %v417
      %v521 = vunpack.c.h.b16 %v417
      %v522 = vunpack.c.l.b16 %v418
      %v523 = vunpack.c.h.b16 %v418
      %v524 = vunpack.c.l.b16 %v419
      %v525 = vunpack.c.h.b16 %v419
      %v526 = vunpack.c.l.b16 %v420
      %v527 = vunpack.c.h.b16 %v420
      %v528 = vunpack.c.l.b16 %v421
      %v529 = vunpack.c.h.b16 %v421
      %v530 = vunpack.c.l.b16 %v422
      %v531 = vunpack.c.h.b16 %v422
      %v532 = vunpack.c.l.b16 %v423
      %v533 = vunpack.c.h.b16 %v423
      %v534 = vunpack.c.l.b16 %v424
      %v535 = vunpack.c.h.b16 %v424
      %v536 = vpack.c.b16 %v476, %v472
      %v537 = vpack.c.b16 %v477, %v473
      %v538 = vpack.c.b16 %v478, %v474
      %v539 = vpack.c.b16 %v479, %v475
      %v540 = vpack.c.b16 %v484, %v480
      %v541 = vpack.c.b16 %v485, %v481
      %v542 = vpack.c.b16 %v486, %v482
      %v543 = vpack.c.b16 %v487, %v483
      %v544 = vpack.c.b16 %v492, %v488
      %v545 = vpack.c.b16 %v493, %v489
      %v546 = vpack.c.b16 %v494, %v490
      %v547 = vpack.c.b16 %v495, %v491
      %v548 = vpack.c.b16 %v500, %v496
      %v549 = vpack.c.b16 %v501, %v497
      %v550 = vpack.c.b16 %v502, %v498
      %v551 = vpack.c.b16 %v503, %v499
      %v552 = vpack.c.b16 %v508, %v504
      %v553 = vpack.c.b16 %v509, %v505
      %v554 = vpack.c.b16 %v510, %v506
      %v555 = vpack.c.b16 %v511, %v507
      %v556 = vpack.c.b16 %v516, %v512
      %v557 = vpack.c.b16 %v517, %v513
      %v558 = vpack.c.b16 %v518, %v514
      %v559 = vpack.c.b16 %v519, %v515
      %v560 = vpack.c.b16 %v524, %v520
      %v561 = vpack.c.b16 %v525, %v521
      %v562 = vpack.c.b16 %v526, %v522
      %v563 = vpack.c.b16 %v527, %v523
      %v564 = vpack.c.b16 %v532, %v528
      %v565 = vpack.c.b16 %v533, %v529
      %v566 = vpack.c.b16 %v534, %v530
      %v567 = vpack.c.b16 %v535, %v531
      %600 = vmatpush.bf16.msra.mxu0 %v564
      %601 = vmatpush.bf16.msra.mxu0 %v560
      %602 = vmatpush.bf16.msra.mxu0 %v556
      %603 = vmatpush.bf16.msra.mxu0 %v552
      %604 = vmatpush.bf16.msra.mxu0 %v548
      %605 = vmatpush.bf16.msra.mxu0 %v544
      %606 = vmatpush.bf16.msra.mxu0 %v540
      %607 = vmatpush.bf16.msra.mxu0 %v536
      %608 = vmatmul.bf16.gmra.mxu0 %v391
      %v609 = vpop.f32.mrf.mxu0
      %v610 = vadd.f32 %v436, %v609
      %v611 = vpop.f32.mrf.mxu0
      %v612 = vadd.f32 %v436, %v611
      %613 = vmatmul.bf16.gmra.mxu0 %v392
      %v614 = vpop.f32.mrf.mxu0
      %v615 = vadd.f32 %v436, %v614
      %v616 = vpop.f32.mrf.mxu0
      %v617 = vadd.f32 %v436, %v616
      %618 = vdwg.mxu0
      %619 = vmatpush.bf16.msra.mxu0 %v565
      %620 = vmatpush.bf16.msra.mxu0 %v561
      %621 = vmatpush.bf16.msra.mxu0 %v557
      %622 = vmatpush.bf16.msra.mxu0 %v553
      %623 = vmatpush.bf16.msra.mxu0 %v549
      %624 = vmatpush.bf16.msra.mxu0 %v545
      %625 = vmatpush.bf16.msra.mxu0 %v541
      %626 = vmatpush.bf16.msra.mxu0 %v537
      %627 = vmatmul.bf16.gmra.mxu0 %v391
      %v628 = vpop.f32.mrf.mxu0
      %v629 = vadd.f32 %v437, %v628
      %v630 = vpop.f32.mrf.mxu0
      %v631 = vadd.f32 %v437, %v630
      %632 = vmatmul.bf16.gmra.mxu0 %v392
      %v633 = vpop.f32.mrf.mxu0
      %v634 = vadd.f32 %v437, %v633
      %v635 = vpop.f32.mrf.mxu0
      %v636 = vadd.f32 %v437, %v635
      %637 = vdwg.mxu0
      %638 = vmatpush.bf16.msra.mxu0 %v566
      %639 = vmatpush.bf16.msra.mxu0 %v562
      %640 = vmatpush.bf16.msra.mxu0 %v558
      %641 = vmatpush.bf16.msra.mxu0 %v554
      %642 = vmatpush.bf16.msra.mxu0 %v550
      %643 = vmatpush.bf16.msra.mxu0 %v546
      %644 = vmatpush.bf16.msra.mxu0 %v542
      %645 = vmatpush.bf16.msra.mxu0 %v538
      %646 = vmatmul.bf16.gmra.mxu0 %v391
      %v647 = vpop.f32.mrf.mxu0
      %v648 = vadd.f32 %v438, %v647
      %v649 = vpop.f32.mrf.mxu0
      %v650 = vadd.f32 %v438, %v649
      %651 = vmatmul.bf16.gmra.mxu0 %v392
      %v652 = vpop.f32.mrf.mxu0
      %v653 = vadd.f32 %v438, %v652
      %v654 = vpop.f32.mrf.mxu0
      %v655 = vadd.f32 %v438, %v654
      %656 = vdwg.mxu0
      %657 = vmatpush.bf16.msra.mxu0 %v567
      %658 = vmatpush.bf16.msra.mxu0 %v563
      %659 = vmatpush.bf16.msra.mxu0 %v559
      %660 = vmatpush.bf16.msra.mxu0 %v555
      %661 = vmatpush.bf16.msra.mxu0 %v551
      %662 = vmatpush.bf16.msra.mxu0 %v547
      %663 = vmatpush.bf16.msra.mxu0 %v543
      %664 = vmatpush.bf16.msra.mxu0 %v539
      %665 = vmatmul.bf16.gmra.mxu0 %v391
      %v666 = vpop.f32.mrf.mxu0
      %v667 = vadd.f32 %v439, %v666
      %v668 = vpop.f32.mrf.mxu0
      %v669 = vadd.f32 %v439, %v668
      %670 = vmatmul.bf16.gmra.mxu0 %v392
      %v671 = vpop.f32.mrf.mxu0
      %v672 = vadd.f32 %v439, %v671
      %v673 = vpop.f32.mrf.mxu0
      %v674 = vadd.f32 %v439, %v673
      %675 = vdwg.mxu0
      %v676 = vmul.f32 %v610, 0.5
      %v677 = vmul.f32 %v629, 0.5
      %v678 = vmul.f32 %v648, 0.5
      %v679 = vmul.f32 %v667, 0.5
      %v680 = vmul.f32 %v612, 0.5
      %v681 = vmul.f32 %v631, 0.5
      %v682 = vmul.f32 %v650, 0.5
      %v683 = vmul.f32 %v669, 0.5
      %v684 = vmul.f32 %v615, 0.5
      %v685 = vmul.f32 %v634, 0.5
      %v686 = vmul.f32 %v653, 0.5
      %v687 = vmul.f32 %v672, 0.5
      %v688 = vmul.f32 %v617, 0.5
      %v689 = vmul.f32 %v636, 0.5
      %v690 = vmul.f32 %v655, 0.5
      %v691 = vmul.f32 %v674, 0.5
      %v692 = vmul.f32 %v610, 0.70710677
      %v693 = vmul.f32 %v629, 0.70710677
      %v694 = vmul.f32 %v648, 0.70710677
      %v695 = vmul.f32 %v667, 0.70710677
      %v696 = vmul.f32 %v612, 0.70710677
      %v697 = vmul.f32 %v631, 0.70710677
      %v698 = vmul.f32 %v650, 0.70710677
      %v699 = vmul.f32 %v669, 0.70710677
      %v700 = vmul.f32 %v615, 0.70710677
      %v701 = vmul.f32 %v634, 0.70710677
      %v702 = vmul.f32 %v653, 0.70710677
      %v703 = vmul.f32 %v672, 0.70710677
      %v704 = vmul.f32 %v617, 0.70710677
      %v705 = vmul.f32 %v636, 0.70710677
      %v706 = vmul.f32 %v655, 0.70710677
      %v707 = vmul.f32 %v674, 0.70710677
      %v708 = vmul.f32 %v692, %v692
      %v709 = vmin.f32 16.0, %v708
      %v710 = vmul.f32 %v709, 2.1237322e-06
      %v711 = vadd.f32 %v710, 0.00028619796
      %v712 = vmul.f32 %v709, %v711
      %v713 = vadd.f32 %v712, 0.0036580483
      %v714 = vmul.f32 %v709, %v713
      %v715 = vadd.f32 %v714, 0.05243302
      %v716 = vmul.f32 %v709, %v715
      %v717 = vadd.f32 %v716, 0.18741608
      %v718 = vmul.f32 %v709, %v717
      %v719 = vadd.f32 %v718, 1.1283791
      %v720 = vmul.f32 %v692, %v719
      %v721 = vmul.f32 %v709, 3.8918573e-05
      %v722 = vadd.f32 %v721, 0.001143296
      %v723 = vmul.f32 %v709, %v722
      %v724 = vadd.f32 %v723, 0.014752088
      %v725 = vmul.f32 %v709, %v724
      %v726 = vadd.f32 %v725, 0.112945676
      %v727 = vmul.f32 %v709, %v726
      %v728 = vadd.f32 %v727, 0.4994258
      %v729 = vmul.f32 %v709, %v728
      %v730 = vadd.f32 %v729, 1.0
      %v731 = vrcp.pop %v730
      %v732 = vmul.f32 %v730, %v731
      %v733 = vsub.f32 1.0, %v732
      %v734 = vmul.f32 %v731, %v733
      %v735 = vadd.f32 %v731, %v734
      %vm736 = vweird.f32 %v730
      %vm737 = vweird.f32 %v731
      %vm738 = vmor %vm736, %vm737
      %v739 = vsel %vm738, %v731, %v735
      %v740 = vand.u32 2147483647, %v730
      %vm741 = vcmp.eq.f32.partialorder %v740, 8.507059e+37
      %v742 = vand.u32 %v730, 2147483648
      %v743 = vor.u32 1.1754944e-38, %v742
      %v744 = vsel %vm741, %v743, %v739
      %v745 = vmul.f32 %v720, %v744
      %v746 = vmin.f32 %v745, 1.0
      %v747 = vmax.f32 %v746, -1.0
      %v748 = vmul.f32 %v693, %v693
      %v749 = vmin.f32 16.0, %v748
      %v750 = vmul.f32 %v749, 2.1237322e-06
      %v751 = vadd.f32 %v750, 0.00028619796
      %v752 = vmul.f32 %v749, %v751
      %v753 = vadd.f32 %v752, 0.0036580483
      %v754 = vmul.f32 %v749, %v753
      %v755 = vadd.f32 %v754, 0.05243302
      %v756 = vmul.f32 %v749, %v755
      %v757 = vadd.f32 %v756, 0.18741608
      %v758 = vmul.f32 %v749, %v757
      %v759 = vadd.f32 %v758, 1.1283791
      %v760 = vmul.f32 %v693, %v759
      %v761 = vmul.f32 %v749, 3.8918573e-05
      %v762 = vadd.f32 %v761, 0.001143296
      %v763 = vmul.f32 %v749, %v762
      %v764 = vadd.f32 %v763, 0.014752088
      %v765 = vmul.f32 %v749, %v764
      %v766 = vadd.f32 %v765, 0.112945676
      %v767 = vmul.f32 %v749, %v766
      %v768 = vadd.f32 %v767, 0.4994258
      %v769 = vmul.f32 %v749, %v768
      %v770 = vadd.f32 %v769, 1.0
      %v771 = vrcp.pop %v770
      %v772 = vmul.f32 %v770, %v771
      %v773 = vsub.f32 1.0, %v772
      %v774 = vmul.f32 %v771, %v773
      %v775 = vadd.f32 %v771, %v774
      %vm776 = vweird.f32 %v770
      %vm777 = vweird.f32 %v771
      %vm778 = vmor %vm776, %vm777
      %v779 = vsel %vm778, %v771, %v775
      %v780 = vand.u32 2147483647, %v770
      %vm781 = vcmp.eq.f32.partialorder %v780, 8.507059e+37
      %v782 = vand.u32 %v770, 2147483648
      %v783 = vor.u32 1.1754944e-38, %v782
      %v784 = vsel %vm781, %v783, %v779
      %v785 = vmul.f32 %v760, %v784
      %v786 = vmin.f32 %v785, 1.0
      %v787 = vmax.f32 %v786, -1.0
      %v788 = vmul.f32 %v694, %v694
      %v789 = vmin.f32 16.0, %v788
      %v790 = vmul.f32 %v789, 2.1237322e-06
      %v791 = vadd.f32 %v790, 0.00028619796
      %v792 = vmul.f32 %v789, %v791
      %v793 = vadd.f32 %v792, 0.0036580483
      %v794 = vmul.f32 %v789, %v793
      %v795 = vadd.f32 %v794, 0.05243302
      %v796 = vmul.f32 %v789, %v795
      %v797 = vadd.f32 %v796, 0.18741608
      %v798 = vmul.f32 %v789, %v797
      %v799 = vadd.f32 %v798, 1.1283791
      %v800 = vmul.f32 %v694, %v799
      %v801 = vmul.f32 %v789, 3.8918573e-05
      %v802 = vadd.f32 %v801, 0.001143296
      %v803 = vmul.f32 %v789, %v802
      %v804 = vadd.f32 %v803, 0.014752088
      %v805 = vmul.f32 %v789, %v804
      %v806 = vadd.f32 %v805, 0.112945676
      %v807 = vmul.f32 %v789, %v806
      %v808 = vadd.f32 %v807, 0.4994258
      %v809 = vmul.f32 %v789, %v808
      %v810 = vadd.f32 %v809, 1.0
      %v811 = vrcp.pop %v810
      %v812 = vmul.f32 %v810, %v811
      %v813 = vsub.f32 1.0, %v812
      %v814 = vmul.f32 %v811, %v813
      %v815 = vadd.f32 %v811, %v814
      %vm816 = vweird.f32 %v810
      %vm817 = vweird.f32 %v811
      %vm818 = vmor %vm816, %vm817
      %v819 = vsel %vm818, %v811, %v815
      %v820 = vand.u32 2147483647, %v810
      %vm821 = vcmp.eq.f32.partialorder %v820, 8.507059e+37
      %v822 = vand.u32 %v810, 2147483648
      %v823 = vor.u32 1.1754944e-38, %v822
      %v824 = vsel %vm821, %v823, %v819
      %v825 = vmul.f32 %v800, %v824
      %v826 = vmin.f32 %v825, 1.0
      %v827 = vmax.f32 %v826, -1.0
      %v828 = vmul.f32 %v695, %v695
      %v829 = vmin.f32 16.0, %v828
      %v830 = vmul.f32 %v829, 2.1237322e-06
      %v831 = vadd.f32 %v830, 0.00028619796
      %v832 = vmul.f32 %v829, %v831
      %v833 = vadd.f32 %v832, 0.0036580483
      %v834 = vmul.f32 %v829, %v833
      %v835 = vadd.f32 %v834, 0.05243302
      %v836 = vmul.f32 %v829, %v835
      %v837 = vadd.f32 %v836, 0.18741608
      %v838 = vmul.f32 %v829, %v837
      %v839 = vadd.f32 %v838, 1.1283791
      %v840 = vmul.f32 %v695, %v839
      %v841 = vmul.f32 %v829, 3.8918573e-05
      %v842 = vadd.f32 %v841, 0.001143296
      %v843 = vmul.f32 %v829, %v842
      %v844 = vadd.f32 %v843, 0.014752088
      %v845 = vmul.f32 %v829, %v844
      %v846 = vadd.f32 %v845, 0.112945676
      %v847 = vmul.f32 %v829, %v846
      %v848 = vadd.f32 %v847, 0.4994258
      %v849 = vmul.f32 %v829, %v848
      %v850 = vadd.f32 %v849, 1.0
      %v851 = vrcp.pop %v850
      %v852 = vmul.f32 %v850, %v851
      %v853 = vsub.f32 1.0, %v852
      %v854 = vmul.f32 %v851, %v853
      %v855 = vadd.f32 %v851, %v854
      %vm856 = vweird.f32 %v850
      %vm857 = vweird.f32 %v851
      %vm858 = vmor %vm856, %vm857
      %v859 = vsel %vm858, %v851, %v855
      %v860 = vand.u32 2147483647, %v850
      %vm861 = vcmp.eq.f32.partialorder %v860, 8.507059e+37
      %v862 = vand.u32 %v850, 2147483648
      %v863 = vor.u32 1.1754944e-38, %v862
      %v864 = vsel %vm861, %v863, %v859
      %v865 = vmul.f32 %v840, %v864
      %v866 = vmin.f32 %v865, 1.0
      %v867 = vmax.f32 %v866, -1.0
      %v868 = vmul.f32 %v696, %v696
      %v869 = vmin.f32 16.0, %v868
      %v870 = vmul.f32 %v869, 2.1237322e-06
      %v871 = vadd.f32 %v870, 0.00028619796
      %v872 = vmul.f32 %v869, %v871
      %v873 = vadd.f32 %v872, 0.0036580483
      %v874 = vmul.f32 %v869, %v873
      %v875 = vadd.f32 %v874, 0.05243302
      %v876 = vmul.f32 %v869, %v875
      %v877 = vadd.f32 %v876, 0.18741608
      %v878 = vmul.f32 %v869, %v877
      %v879 = vadd.f32 %v878, 1.1283791
      %v880 = vmul.f32 %v696, %v879
      %v881 = vmul.f32 %v869, 3.8918573e-05
      %v882 = vadd.f32 %v881, 0.001143296
      %v883 = vmul.f32 %v869, %v882
      %v884 = vadd.f32 %v883, 0.014752088
      %v885 = vmul.f32 %v869, %v884
      %v886 = vadd.f32 %v885, 0.112945676
      %v887 = vmul.f32 %v869, %v886
      %v888 = vadd.f32 %v887, 0.4994258
      %v889 = vmul.f32 %v869, %v888
      %v890 = vadd.f32 %v889, 1.0
      %v891 = vrcp.pop %v890
      %v892 = vmul.f32 %v890, %v891
      %v893 = vsub.f32 1.0, %v892
      %v894 = vmul.f32 %v891, %v893
      %v895 = vadd.f32 %v891, %v894
      %vm896 = vweird.f32 %v890
      %vm897 = vweird.f32 %v891
      %vm898 = vmor %vm896, %vm897
      %v899 = vsel %vm898, %v891, %v895
      %v900 = vand.u32 2147483647, %v890
      %vm901 = vcmp.eq.f32.partialorder %v900, 8.507059e+37
      %v902 = vand.u32 %v890, 2147483648
      %v903 = vor.u32 1.1754944e-38, %v902
      %v904 = vsel %vm901, %v903, %v899
      %v905 = vmul.f32 %v880, %v904
      %v906 = vmin.f32 %v905, 1.0
      %v907 = vmax.f32 %v906, -1.0
      %v908 = vmul.f32 %v697, %v697
      %v909 = vmin.f32 16.0, %v908
      %v910 = vmul.f32 %v909, 2.1237322e-06
      %v911 = vadd.f32 %v910, 0.00028619796
      %v912 = vmul.f32 %v909, %v911
      %v913 = vadd.f32 %v912, 0.0036580483
      %v914 = vmul.f32 %v909, %v913
      %v915 = vadd.f32 %v914, 0.05243302
      %v916 = vmul.f32 %v909, %v915
      %v917 = vadd.f32 %v916, 0.18741608
      %v918 = vmul.f32 %v909, %v917
      %v919 = vadd.f32 %v918, 1.1283791
      %v920 = vmul.f32 %v697, %v919
      %v921 = vmul.f32 %v909, 3.8918573e-05
      %v922 = vadd.f32 %v921, 0.001143296
      %v923 = vmul.f32 %v909, %v922
      %v924 = vadd.f32 %v923, 0.014752088
      %v925 = vmul.f32 %v909, %v924
      %v926 = vadd.f32 %v925, 0.112945676
      %v927 = vmul.f32 %v909, %v926
      %v928 = vadd.f32 %v927, 0.4994258
      %v929 = vmul.f32 %v909, %v928
      %v930 = vadd.f32 %v929, 1.0
      %v931 = vrcp.pop %v930
      %v932 = vmul.f32 %v930, %v931
      %v933 = vsub.f32 1.0, %v932
      %v934 = vmul.f32 %v931, %v933
      %v935 = vadd.f32 %v931, %v934
      %vm936 = vweird.f32 %v930
      %vm937 = vweird.f32 %v931
      %vm938 = vmor %vm936, %vm937
      %v939 = vsel %vm938, %v931, %v935
      %v940 = vand.u32 2147483647, %v930
      %vm941 = vcmp.eq.f32.partialorder %v940, 8.507059e+37
      %v942 = vand.u32 %v930, 2147483648
      %v943 = vor.u32 1.1754944e-38, %v942
      %v944 = vsel %vm941, %v943, %v939
      %v945 = vmul.f32 %v920, %v944
      %v946 = vmin.f32 %v945, 1.0
      %v947 = vmax.f32 %v946, -1.0
      %v948 = vmul.f32 %v698, %v698
      %v949 = vmin.f32 16.0, %v948
      %v950 = vmul.f32 %v949, 2.1237322e-06
      %v951 = vadd.f32 %v950, 0.00028619796
      %v952 = vmul.f32 %v949, %v951
      %v953 = vadd.f32 %v952, 0.0036580483
      %v954 = vmul.f32 %v949, %v953
      %v955 = vadd.f32 %v954, 0.05243302
      %v956 = vmul.f32 %v949, %v955
      %v957 = vadd.f32 %v956, 0.18741608
      %v958 = vmul.f32 %v949, %v957
      %v959 = vadd.f32 %v958, 1.1283791
      %v960 = vmul.f32 %v698, %v959
      %v961 = vmul.f32 %v949, 3.8918573e-05
      %v962 = vadd.f32 %v961, 0.001143296
      %v963 = vmul.f32 %v949, %v962
      %v964 = vadd.f32 %v963, 0.014752088
      %v965 = vmul.f32 %v949, %v964
      %v966 = vadd.f32 %v965, 0.112945676
      %v967 = vmul.f32 %v949, %v966
      %v968 = vadd.f32 %v967, 0.4994258
      %v969 = vmul.f32 %v949, %v968
      %v970 = vadd.f32 %v969, 1.0
      %v971 = vrcp.pop %v970
      %v972 = vmul.f32 %v970, %v971
      %v973 = vsub.f32 1.0, %v972
      %v974 = vmul.f32 %v971, %v973
      %v975 = vadd.f32 %v971, %v974
      %vm976 = vweird.f32 %v970
      %vm977 = vweird.f32 %v971
      %vm978 = vmor %vm976, %vm977
      %v979 = vsel %vm978, %v971, %v975
      %v980 = vand.u32 2147483647, %v970
      %vm981 = vcmp.eq.f32.partialorder %v980, 8.507059e+37
      %v982 = vand.u32 %v970, 2147483648
      %v983 = vor.u32 1.1754944e-38, %v982
      %v984 = vsel %vm981, %v983, %v979
      %v985 = vmul.f32 %v960, %v984
      %v986 = vmin.f32 %v985, 1.0
      %v987 = vmax.f32 %v986, -1.0
      %v988 = vmul.f32 %v699, %v699
      %v989 = vmin.f32 16.0, %v988
      %v990 = vmul.f32 %v989, 2.1237322e-06
      %v991 = vadd.f32 %v990, 0.00028619796
      %v992 = vmul.f32 %v989, %v991
      %v993 = vadd.f32 %v992, 0.0036580483
      %v994 = vmul.f32 %v989, %v993
      %v995 = vadd.f32 %v994, 0.05243302
      %v996 = vmul.f32 %v989, %v995
      %v997 = vadd.f32 %v996, 0.18741608
      %v998 = vmul.f32 %v989, %v997
      %v999 = vadd.f32 %v998, 1.1283791
      %v1000 = vmul.f32 %v699, %v999
      %v1001 = vmul.f32 %v989, 3.8918573e-05
      %v1002 = vadd.f32 %v1001, 0.001143296
      %v1003 = vmul.f32 %v989, %v1002
      %v1004 = vadd.f32 %v1003, 0.014752088
      %v1005 = vmul.f32 %v989, %v1004
      %v1006 = vadd.f32 %v1005, 0.112945676
      %v1007 = vmul.f32 %v989, %v1006
      %v1008 = vadd.f32 %v1007, 0.4994258
      %v1009 = vmul.f32 %v989, %v1008
      %v1010 = vadd.f32 %v1009, 1.0
      %v1011 = vrcp.pop %v1010
      %v1012 = vmul.f32 %v1010, %v1011
      %v1013 = vsub.f32 1.0, %v1012
      %v1014 = vmul.f32 %v1011, %v1013
      %v1015 = vadd.f32 %v1011, %v1014
      %vm1016 = vweird.f32 %v1010
      %vm1017 = vweird.f32 %v1011
      %vm1018 = vmor %vm1016, %vm1017
      %v1019 = vsel %vm1018, %v1011, %v1015
      %v1020 = vand.u32 2147483647, %v1010
      %vm1021 = vcmp.eq.f32.partialorder %v1020, 8.507059e+37
      %v1022 = vand.u32 %v1010, 2147483648
      %v1023 = vor.u32 1.1754944e-38, %v1022
      %v1024 = vsel %vm1021, %v1023, %v1019
      %v1025 = vmul.f32 %v1000, %v1024
      %v1026 = vmin.f32 %v1025, 1.0
      %v1027 = vmax.f32 %v1026, -1.0
      %v1028 = vmul.f32 %v700, %v700
      %v1029 = vmin.f32 16.0, %v1028
      %v1030 = vmul.f32 %v1029, 2.1237322e-06
      %v1031 = vadd.f32 %v1030, 0.00028619796
      %v1032 = vmul.f32 %v1029, %v1031
      %v1033 = vadd.f32 %v1032, 0.0036580483
      %v1034 = vmul.f32 %v1029, %v1033
      %v1035 = vadd.f32 %v1034, 0.05243302
      %v1036 = vmul.f32 %v1029, %v1035
      %v1037 = vadd.f32 %v1036, 0.18741608
      %v1038 = vmul.f32 %v1029, %v1037
      %v1039 = vadd.f32 %v1038, 1.1283791
      %v1040 = vmul.f32 %v700, %v1039
      %v1041 = vmul.f32 %v1029, 3.8918573e-05
      %v1042 = vadd.f32 %v1041, 0.001143296
      %v1043 = vmul.f32 %v1029, %v1042
      %v1044 = vadd.f32 %v1043, 0.014752088
      %v1045 = vmul.f32 %v1029, %v1044
      %v1046 = vadd.f32 %v1045, 0.112945676
      %v1047 = vmul.f32 %v1029, %v1046
      %v1048 = vadd.f32 %v1047, 0.4994258
      %v1049 = vmul.f32 %v1029, %v1048
      %v1050 = vadd.f32 %v1049, 1.0
      %v1051 = vrcp.pop %v1050
      %v1052 = vmul.f32 %v1050, %v1051
      %v1053 = vsub.f32 1.0, %v1052
      %v1054 = vmul.f32 %v1051, %v1053
      %v1055 = vadd.f32 %v1051, %v1054
      %vm1056 = vweird.f32 %v1050
      %vm1057 = vweird.f32 %v1051
      %vm1058 = vmor %vm1056, %vm1057
      %v1059 = vsel %vm1058, %v1051, %v1055
      %v1060 = vand.u32 2147483647, %v1050
      %vm1061 = vcmp.eq.f32.partialorder %v1060, 8.507059e+37
      %v1062 = vand.u32 %v1050, 2147483648
      %v1063 = vor.u32 1.1754944e-38, %v1062
      %v1064 = vsel %vm1061, %v1063, %v1059
      %v1065 = vmul.f32 %v1040, %v1064
      %v1066 = vmin.f32 %v1065, 1.0
      %v1067 = vmax.f32 %v1066, -1.0
      %v1068 = vmul.f32 %v701, %v701
      %v1069 = vmin.f32 16.0, %v1068
      %v1070 = vmul.f32 %v1069, 2.1237322e-06
      %v1071 = vadd.f32 %v1070, 0.00028619796
      %v1072 = vmul.f32 %v1069, %v1071
      %v1073 = vadd.f32 %v1072, 0.0036580483
      %v1074 = vmul.f32 %v1069, %v1073
      %v1075 = vadd.f32 %v1074, 0.05243302
      %v1076 = vmul.f32 %v1069, %v1075
      %v1077 = vadd.f32 %v1076, 0.18741608
      %v1078 = vmul.f32 %v1069, %v1077
      %v1079 = vadd.f32 %v1078, 1.1283791
      %v1080 = vmul.f32 %v701, %v1079
      %v1081 = vmul.f32 %v1069, 3.8918573e-05
      %v1082 = vadd.f32 %v1081, 0.001143296
      %v1083 = vmul.f32 %v1069, %v1082
      %v1084 = vadd.f32 %v1083, 0.014752088
      %v1085 = vmul.f32 %v1069, %v1084
      %v1086 = vadd.f32 %v1085, 0.112945676
      %v1087 = vmul.f32 %v1069, %v1086
      %v1088 = vadd.f32 %v1087, 0.4994258
      %v1089 = vmul.f32 %v1069, %v1088
      %v1090 = vadd.f32 %v1089, 1.0
      %v1091 = vrcp.pop %v1090
      %v1092 = vmul.f32 %v1090, %v1091
      %v1093 = vsub.f32 1.0, %v1092
      %v1094 = vmul.f32 %v1091, %v1093
      %v1095 = vadd.f32 %v1091, %v1094
      %vm1096 = vweird.f32 %v1090
      %vm1097 = vweird.f32 %v1091
      %vm1098 = vmor %vm1096, %vm1097
      %v1099 = vsel %vm1098, %v1091, %v1095
      %v1100 = vand.u32 2147483647, %v1090
      %vm1101 = vcmp.eq.f32.partialorder %v1100, 8.507059e+37
      %v1102 = vand.u32 %v1090, 2147483648
      %v1103 = vor.u32 1.1754944e-38, %v1102
      %v1104 = vsel %vm1101, %v1103, %v1099
      %v1105 = vmul.f32 %v1080, %v1104
      %v1106 = vmin.f32 %v1105, 1.0
      %v1107 = vmax.f32 %v1106, -1.0
      %v1108 = vmul.f32 %v702, %v702
      %v1109 = vmin.f32 16.0, %v1108
      %v1110 = vmul.f32 %v1109, 2.1237322e-06
      %v1111 = vadd.f32 %v1110, 0.00028619796
      %v1112 = vmul.f32 %v1109, %v1111
      %v1113 = vadd.f32 %v1112, 0.0036580483
      %v1114 = vmul.f32 %v1109, %v1113
      %v1115 = vadd.f32 %v1114, 0.05243302
      %v1116 = vmul.f32 %v1109, %v1115
      %v1117 = vadd.f32 %v1116, 0.18741608
      %v1118 = vmul.f32 %v1109, %v1117
      %v1119 = vadd.f32 %v1118, 1.1283791
      %v1120 = vmul.f32 %v702, %v1119
      %v1121 = vmul.f32 %v1109, 3.8918573e-05
      %v1122 = vadd.f32 %v1121, 0.001143296
      %v1123 = vmul.f32 %v1109, %v1122
      %v1124 = vadd.f32 %v1123, 0.014752088
      %v1125 = vmul.f32 %v1109, %v1124
      %v1126 = vadd.f32 %v1125, 0.112945676
      %v1127 = vmul.f32 %v1109, %v1126
      %v1128 = vadd.f32 %v1127, 0.4994258
      %v1129 = vmul.f32 %v1109, %v1128
      %v1130 = vadd.f32 %v1129, 1.0
      %v1131 = vrcp.pop %v1130
      %v1132 = vmul.f32 %v1130, %v1131
      %v1133 = vsub.f32 1.0, %v1132
      %v1134 = vmul.f32 %v1131, %v1133
      %v1135 = vadd.f32 %v1131, %v1134
      %vm1136 = vweird.f32 %v1130
      %vm1137 = vweird.f32 %v1131
      %vm1138 = vmor %vm1136, %vm1137
      %v1139 = vsel %vm1138, %v1131, %v1135
      %v1140 = vand.u32 2147483647, %v1130
      %vm1141 = vcmp.eq.f32.partialorder %v1140, 8.507059e+37
      %v1142 = vand.u32 %v1130, 2147483648
      %v1143 = vor.u32 1.1754944e-38, %v1142
      %v1144 = vsel %vm1141, %v1143, %v1139
      %v1145 = vmul.f32 %v1120, %v1144
      %v1146 = vmin.f32 %v1145, 1.0
      %v1147 = vmax.f32 %v1146, -1.0
      %v1148 = vmul.f32 %v703, %v703
      %v1149 = vmin.f32 16.0, %v1148
      %v1150 = vmul.f32 %v1149, 2.1237322e-06
      %v1151 = vadd.f32 %v1150, 0.00028619796
      %v1152 = vmul.f32 %v1149, %v1151
      %v1153 = vadd.f32 %v1152, 0.0036580483
      %v1154 = vmul.f32 %v1149, %v1153
      %v1155 = vadd.f32 %v1154, 0.05243302
      %v1156 = vmul.f32 %v1149, %v1155
      %v1157 = vadd.f32 %v1156, 0.18741608
      %v1158 = vmul.f32 %v1149, %v1157
      %v1159 = vadd.f32 %v1158, 1.1283791
      %v1160 = vmul.f32 %v703, %v1159
      %v1161 = vmul.f32 %v1149, 3.8918573e-05
      %v1162 = vadd.f32 %v1161, 0.001143296
      %v1163 = vmul.f32 %v1149, %v1162
      %v1164 = vadd.f32 %v1163, 0.014752088
      %v1165 = vmul.f32 %v1149, %v1164
      %v1166 = vadd.f32 %v1165, 0.112945676
      %v1167 = vmul.f32 %v1149, %v1166
      %v1168 = vadd.f32 %v1167, 0.4994258
      %v1169 = vmul.f32 %v1149, %v1168
      %v1170 = vadd.f32 %v1169, 1.0
      %v1171 = vrcp.pop %v1170
      %v1172 = vmul.f32 %v1170, %v1171
      %v1173 = vsub.f32 1.0, %v1172
      %v1174 = vmul.f32 %v1171, %v1173
      %v1175 = vadd.f32 %v1171, %v1174
      %vm1176 = vweird.f32 %v1170
      %vm1177 = vweird.f32 %v1171
      %vm1178 = vmor %vm1176, %vm1177
      %v1179 = vsel %vm1178, %v1171, %v1175
      %v1180 = vand.u32 2147483647, %v1170
      %vm1181 = vcmp.eq.f32.partialorder %v1180, 8.507059e+37
      %v1182 = vand.u32 %v1170, 2147483648
      %v1183 = vor.u32 1.1754944e-38, %v1182
      %v1184 = vsel %vm1181, %v1183, %v1179
      %v1185 = vmul.f32 %v1160, %v1184
      %v1186 = vmin.f32 %v1185, 1.0
      %v1187 = vmax.f32 %v1186, -1.0
      %v1188 = vmul.f32 %v704, %v704
      %v1189 = vmin.f32 16.0, %v1188
      %v1190 = vmul.f32 %v1189, 2.1237322e-06
      %v1191 = vadd.f32 %v1190, 0.00028619796
      %v1192 = vmul.f32 %v1189, %v1191
      %v1193 = vadd.f32 %v1192, 0.0036580483
      %v1194 = vmul.f32 %v1189, %v1193
      %v1195 = vadd.f32 %v1194, 0.05243302
      %v1196 = vmul.f32 %v1189, %v1195
      %v1197 = vadd.f32 %v1196, 0.18741608
      %v1198 = vmul.f32 %v1189, %v1197
      %v1199 = vadd.f32 %v1198, 1.1283791
      %v1200 = vmul.f32 %v704, %v1199
      %v1201 = vmul.f32 %v1189, 3.8918573e-05
      %v1202 = vadd.f32 %v1201, 0.001143296
      %v1203 = vmul.f32 %v1189, %v1202
      %v1204 = vadd.f32 %v1203, 0.014752088
      %v1205 = vmul.f32 %v1189, %v1204
      %v1206 = vadd.f32 %v1205, 0.112945676
      %v1207 = vmul.f32 %v1189, %v1206
      %v1208 = vadd.f32 %v1207, 0.4994258
      %v1209 = vmul.f32 %v1189, %v1208
      %v1210 = vadd.f32 %v1209, 1.0
      %v1211 = vrcp.pop %v1210
      %v1212 = vmul.f32 %v1210, %v1211
      %v1213 = vsub.f32 1.0, %v1212
      %v1214 = vmul.f32 %v1211, %v1213
      %v1215 = vadd.f32 %v1211, %v1214
      %vm1216 = vweird.f32 %v1210
      %vm1217 = vweird.f32 %v1211
      %vm1218 = vmor %vm1216, %vm1217
      %v1219 = vsel %vm1218, %v1211, %v1215
      %v1220 = vand.u32 2147483647, %v1210
      %vm1221 = vcmp.eq.f32.partialorder %v1220, 8.507059e+37
      %v1222 = vand.u32 %v1210, 2147483648
      %v1223 = vor.u32 1.1754944e-38, %v1222
      %v1224 = vsel %vm1221, %v1223, %v1219
      %v1225 = vmul.f32 %v1200, %v1224
      %v1226 = vmin.f32 %v1225, 1.0
      %v1227 = vmax.f32 %v1226, -1.0
      %v1228 = vmul.f32 %v705, %v705
      %v1229 = vmin.f32 16.0, %v1228
      %v1230 = vmul.f32 %v1229, 2.1237322e-06
      %v1231 = vadd.f32 %v1230, 0.00028619796
      %v1232 = vmul.f32 %v1229, %v1231
      %v1233 = vadd.f32 %v1232, 0.0036580483
      %v1234 = vmul.f32 %v1229, %v1233
      %v1235 = vadd.f32 %v1234, 0.05243302
      %v1236 = vmul.f32 %v1229, %v1235
      %v1237 = vadd.f32 %v1236, 0.18741608
      %v1238 = vmul.f32 %v1229, %v1237
      %v1239 = vadd.f32 %v1238, 1.1283791
      %v1240 = vmul.f32 %v705, %v1239
      %v1241 = vmul.f32 %v1229, 3.8918573e-05
      %v1242 = vadd.f32 %v1241, 0.001143296
      %v1243 = vmul.f32 %v1229, %v1242
      %v1244 = vadd.f32 %v1243, 0.014752088
      %v1245 = vmul.f32 %v1229, %v1244
      %v1246 = vadd.f32 %v1245, 0.112945676
      %v1247 = vmul.f32 %v1229, %v1246
      %v1248 = vadd.f32 %v1247, 0.4994258
      %v1249 = vmul.f32 %v1229, %v1248
      %v1250 = vadd.f32 %v1249, 1.0
      %v1251 = vrcp.pop %v1250
      %v1252 = vmul.f32 %v1250, %v1251
      %v1253 = vsub.f32 1.0, %v1252
      %v1254 = vmul.f32 %v1251, %v1253
      %v1255 = vadd.f32 %v1251, %v1254
      %vm1256 = vweird.f32 %v1250
      %vm1257 = vweird.f32 %v1251
      %vm1258 = vmor %vm1256, %vm1257
      %v1259 = vsel %vm1258, %v1251, %v1255
      %v1260 = vand.u32 2147483647, %v1250
      %vm1261 = vcmp.eq.f32.partialorder %v1260, 8.507059e+37
      %v1262 = vand.u32 %v1250, 2147483648
      %v1263 = vor.u32 1.1754944e-38, %v1262
      %v1264 = vsel %vm1261, %v1263, %v1259
      %v1265 = vmul.f32 %v1240, %v1264
      %v1266 = vmin.f32 %v1265, 1.0
      %v1267 = vmax.f32 %v1266, -1.0
      %v1268 = vmul.f32 %v706, %v706
      %v1269 = vmin.f32 16.0, %v1268
      %v1270 = vmul.f32 %v1269, 2.1237322e-06
      %v1271 = vadd.f32 %v1270, 0.00028619796
      %v1272 = vmul.f32 %v1269, %v1271
      %v1273 = vadd.f32 %v1272, 0.0036580483
      %v1274 = vmul.f32 %v1269, %v1273
      %v1275 = vadd.f32 %v1274, 0.05243302
      %v1276 = vmul.f32 %v1269, %v1275
      %v1277 = vadd.f32 %v1276, 0.18741608
      %v1278 = vmul.f32 %v1269, %v1277
      %v1279 = vadd.f32 %v1278, 1.1283791
      %v1280 = vmul.f32 %v706, %v1279
      %v1281 = vmul.f32 %v1269, 3.8918573e-05
      %v1282 = vadd.f32 %v1281, 0.001143296
      %v1283 = vmul.f32 %v1269, %v1282
      %v1284 = vadd.f32 %v1283, 0.014752088
      %v1285 = vmul.f32 %v1269, %v1284
      %v1286 = vadd.f32 %v1285, 0.112945676
      %v1287 = vmul.f32 %v1269, %v1286
      %v1288 = vadd.f32 %v1287, 0.4994258
      %v1289 = vmul.f32 %v1269, %v1288
      %v1290 = vadd.f32 %v1289, 1.0
      %v1291 = vrcp.pop %v1290
      %v1292 = vmul.f32 %v1290, %v1291
      %v1293 = vsub.f32 1.0, %v1292
      %v1294 = vmul.f32 %v1291, %v1293
      %v1295 = vadd.f32 %v1291, %v1294
      %vm1296 = vweird.f32 %v1290
      %vm1297 = vweird.f32 %v1291
      %vm1298 = vmor %vm1296, %vm1297
      %v1299 = vsel %vm1298, %v1291, %v1295
      %v1300 = vand.u32 2147483647, %v1290
      %vm1301 = vcmp.eq.f32.partialorder %v1300, 8.507059e+37
      %v1302 = vand.u32 %v1290, 2147483648
      %v1303 = vor.u32 1.1754944e-38, %v1302
      %v1304 = vsel %vm1301, %v1303, %v1299
      %v1305 = vmul.f32 %v1280, %v1304
      %v1306 = vmin.f32 %v1305, 1.0
      %v1307 = vmax.f32 %v1306, -1.0
      %v1308 = vmul.f32 %v707, %v707
      %v1309 = vmin.f32 16.0, %v1308
      %v1310 = vmul.f32 %v1309, 2.1237322e-06
      %v1311 = vadd.f32 %v1310, 0.00028619796
      %v1312 = vmul.f32 %v1309, %v1311
      %v1313 = vadd.f32 %v1312, 0.0036580483
      %v1314 = vmul.f32 %v1309, %v1313
      %v1315 = vadd.f32 %v1314, 0.05243302
      %v1316 = vmul.f32 %v1309, %v1315
      %v1317 = vadd.f32 %v1316, 0.18741608
      %v1318 = vmul.f32 %v1309, %v1317
      %v1319 = vadd.f32 %v1318, 1.1283791
      %v1320 = vmul.f32 %v707, %v1319
      %v1321 = vmul.f32 %v1309, 3.8918573e-05
      %v1322 = vadd.f32 %v1321, 0.001143296
      %v1323 = vmul.f32 %v1309, %v1322
      %v1324 = vadd.f32 %v1323, 0.014752088
      %v1325 = vmul.f32 %v1309, %v1324
      %v1326 = vadd.f32 %v1325, 0.112945676
      %v1327 = vmul.f32 %v1309, %v1326
      %v1328 = vadd.f32 %v1327, 0.4994258
      %v1329 = vmul.f32 %v1309, %v1328
      %v1330 = vadd.f32 %v1329, 1.0
      %v1331 = vrcp.pop %v1330
      %v1332 = vmul.f32 %v1330, %v1331
      %v1333 = vsub.f32 1.0, %v1332
      %v1334 = vmul.f32 %v1331, %v1333
      %v1335 = vadd.f32 %v1331, %v1334
      %vm1336 = vweird.f32 %v1330
      %vm1337 = vweird.f32 %v1331
      %vm1338 = vmor %vm1336, %vm1337
      %v1339 = vsel %vm1338, %v1331, %v1335
      %v1340 = vand.u32 2147483647, %v1330
      %vm1341 = vcmp.eq.f32.partialorder %v1340, 8.507059e+37
      %v1342 = vand.u32 %v1330, 2147483648
      %v1343 = vor.u32 1.1754944e-38, %v1342
      %v1344 = vsel %vm1341, %v1343, %v1339
      %v1345 = vmul.f32 %v1320, %v1344
      %v1346 = vmin.f32 %v1345, 1.0
      %v1347 = vmax.f32 %v1346, -1.0
      %v1348 = vadd.f32 %v747, 1.0
      %v1349 = vadd.f32 %v787, 1.0
      %v1350 = vadd.f32 %v827, 1.0
      %v1351 = vadd.f32 %v867, 1.0
      %v1352 = vadd.f32 %v907, 1.0
      %v1353 = vadd.f32 %v947, 1.0
      %v1354 = vadd.f32 %v987, 1.0
      %v1355 = vadd.f32 %v1027, 1.0
      %v1356 = vadd.f32 %v1067, 1.0
      %v1357 = vadd.f32 %v1107, 1.0
      %v1358 = vadd.f32 %v1147, 1.0
      %v1359 = vadd.f32 %v1187, 1.0
      %v1360 = vadd.f32 %v1227, 1.0
      %v1361 = vadd.f32 %v1267, 1.0
      %v1362 = vadd.f32 %v1307, 1.0
      %v1363 = vadd.f32 %v1347, 1.0
      %v1364 = vmul.f32 %v676, %v1348
      %v1365 = vmul.f32 %v677, %v1349
      %v1366 = vmul.f32 %v678, %v1350
      %v1367 = vmul.f32 %v679, %v1351
      %v1368 = vmul.f32 %v680, %v1352
      %v1369 = vmul.f32 %v681, %v1353
      %v1370 = vmul.f32 %v682, %v1354
      %v1371 = vmul.f32 %v683, %v1355
      %v1372 = vmul.f32 %v684, %v1356
      %v1373 = vmul.f32 %v685, %v1357
      %v1374 = vmul.f32 %v686, %v1358
      %v1375 = vmul.f32 %v687, %v1359
      %v1376 = vmul.f32 %v688, %v1360
      %v1377 = vmul.f32 %v689, %v1361
      %v1378 = vmul.f32 %v690, %v1362
      %v1379 = vmul.f32 %v691, %v1363
      %v1380 = vpack.c.bf16 %v1368, %v1364
      %v1381 = vpack.c.bf16 %v1369, %v1365
      %v1382 = vpack.c.bf16 %v1370, %v1366
      %v1383 = vpack.c.bf16 %v1371, %v1367
      %v1384 = vpack.c.bf16 %v1376, %v1372
      %v1385 = vpack.c.bf16 %v1377, %v1373
      %v1386 = vpack.c.bf16 %v1378, %v1374
      %v1387 = vpack.c.bf16 %v1379, %v1375
      %v1388 = vld [vmem:[%s5] sm:$0xf]
      %v1389 = vld [vmem:[%s5 + $0x4] sm:$0xf]
      %v1390 = vld [vmem:[%s5 + $0x8] sm:$0xf]
      %v1391 = vld [vmem:[%s5 + $0xc] sm:$0xf]
      %v1392 = vld [vmem:[%s5 + $0x10] sm:$0xf]
      %v1393 = vld [vmem:[%s5 + $0x14] sm:$0xf]
      %v1394 = vld [vmem:[%s5 + $0x18] sm:$0xf]
      %v1395 = vld [vmem:[%s5 + $0x1c] sm:$0xf]
      %v1396 = vld [vmem:[%s5 + $0x20] sm:$0xf]
      %v1397 = vld [vmem:[%s5 + $0x24] sm:$0xf]
      %v1398 = vld [vmem:[%s5 + $0x28] sm:$0xf]
      %v1399 = vld [vmem:[%s5 + $0x2c] sm:$0xf]
      %v1400 = vld [vmem:[%s5 + $0x30] sm:$0xf]
      %v1401 = vld [vmem:[%s5 + $0x34] sm:$0xf]
      %v1402 = vld [vmem:[%s5 + $0x38] sm:$0xf]
      %v1403 = vld [vmem:[%s5 + $0x3c] sm:$0xf]
      %v1404 = vld [vmem:[%s5 + $0x40] sm:$0xf]
      %v1405 = vld [vmem:[%s5 + $0x44] sm:$0xf]
      %v1406 = vld [vmem:[%s5 + $0x48] sm:$0xf]
      %v1407 = vld [vmem:[%s5 + $0x4c] sm:$0xf]
      %v1408 = vld [vmem:[%s5 + $0x50] sm:$0xf]
      %v1409 = vld [vmem:[%s5 + $0x54] sm:$0xf]
      %v1410 = vld [vmem:[%s5 + $0x58] sm:$0xf]
      %v1411 = vld [vmem:[%s5 + $0x5c] sm:$0xf]
      %v1412 = vld [vmem:[%s5 + $0x60] sm:$0xf]
      %v1413 = vld [vmem:[%s5 + $0x64] sm:$0xf]
      %v1414 = vld [vmem:[%s5 + $0x68] sm:$0xf]
      %v1415 = vld [vmem:[%s5 + $0x6c] sm:$0xf]
      %v1416 = vld [vmem:[%s5 + $0x70] sm:$0xf]
      %v1417 = vld [vmem:[%s5 + $0x74] sm:$0xf]
      %v1418 = vld [vmem:[%s5 + $0x78] sm:$0xf]
      %v1419 = vld [vmem:[%s5 + $0x7c] sm:$0xf]
      %v1420 = vld [vmem:[%s5 + $0x80] sm:$0xf]
      %v1421 = vld [vmem:[%s5 + $0x84] sm:$0xf]
      %v1422 = vld [vmem:[%s5 + $0x88] sm:$0xf]
      %v1423 = vld [vmem:[%s5 + $0x8c] sm:$0xf]
      %v1424 = vld [vmem:[%s5 + $0x90] sm:$0xf]
      %v1425 = vld [vmem:[%s5 + $0x94] sm:$0xf]
      %v1426 = vld [vmem:[%s5 + $0x98] sm:$0xf]
      %v1427 = vld [vmem:[%s5 + $0x9c] sm:$0xf]
      %v1428 = vld [vmem:[%s5 + $0xa0] sm:$0xf]
      %v1429 = vld [vmem:[%s5 + $0xa4] sm:$0xf]
      %v1430 = vld [vmem:[%s5 + $0xa8] sm:$0xf]
      %v1431 = vld [vmem:[%s5 + $0xac] sm:$0xf]
      %v1432 = vld [vmem:[%s5 + $0xb0] sm:$0xf]
      %v1433 = vld [vmem:[%s5 + $0xb4] sm:$0xf]
      %v1434 = vld [vmem:[%s5 + $0xb8] sm:$0xf]
      %v1435 = vld [vmem:[%s5 + $0xbc] sm:$0xf]
      %v1436 = vld [vmem:[%s5 + $0xc0] sm:$0xf]
      %v1437 = vld [vmem:[%s5 + $0xc4] sm:$0xf]
      %v1438 = vld [vmem:[%s5 + $0xc8] sm:$0xf]
      %v1439 = vld [vmem:[%s5 + $0xcc] sm:$0xf]
      %v1440 = vld [vmem:[%s5 + $0xd0] sm:$0xf]
      %v1441 = vld [vmem:[%s5 + $0xd4] sm:$0xf]
      %v1442 = vld [vmem:[%s5 + $0xd8] sm:$0xf]
      %v1443 = vld [vmem:[%s5 + $0xdc] sm:$0xf]
      %v1444 = vld [vmem:[%s5 + $0xe0] sm:$0xf]
      %v1445 = vld [vmem:[%s5 + $0xe4] sm:$0xf]
      %v1446 = vld [vmem:[%s5 + $0xe8] sm:$0xf]
      %v1447 = vld [vmem:[%s5 + $0xec] sm:$0xf]
      %v1448 = vld [vmem:[%s5 + $0xf0] sm:$0xf]
      %v1449 = vld [vmem:[%s5 + $0xf4] sm:$0xf]
      %v1450 = vld [vmem:[%s5 + $0xf8] sm:$0xf]
      %v1451 = vld [vmem:[%s5 + $0xfc] sm:$0xf]
      %v1452 = vld [vmem:[%s6] sm:$0x1]
      %v1453 = vunpack.c.l.bf16 %v1452
      %v1454 = vperm.slane %v1453, 0
      %v1519 = vunpack.c.l.b16 %v1388
      %v1520 = vunpack.c.l.b16 %v1389
      %v1521 = vunpack.c.l.b16 %v1390
      %v1522 = vunpack.c.l.b16 %v1391
      %v1523 = vunpack.c.l.b16 %v1392
      %v1524 = vunpack.c.l.b16 %v1393
      %v1525 = vunpack.c.l.b16 %v1394
      %v1526 = vunpack.c.l.b16 %v1395
      %v1527 = vunpack.c.l.b16 %v1396
      %v1528 = vunpack.c.l.b16 %v1397
      %v1529 = vunpack.c.l.b16 %v1398
      %v1530 = vunpack.c.l.b16 %v1399
      %v1531 = vunpack.c.l.b16 %v1400
      %v1532 = vunpack.c.l.b16 %v1401
      %v1533 = vunpack.c.l.b16 %v1402
      %v1534 = vunpack.c.l.b16 %v1403
      %v1535 = vunpack.c.l.b16 %v1404
      %v1536 = vunpack.c.l.b16 %v1405
      %v1537 = vunpack.c.l.b16 %v1406
      %v1538 = vunpack.c.l.b16 %v1407
      %v1539 = vunpack.c.l.b16 %v1408
      %v1540 = vunpack.c.l.b16 %v1409
      %v1541 = vunpack.c.l.b16 %v1410
      %v1542 = vunpack.c.l.b16 %v1411
      %v1543 = vunpack.c.l.b16 %v1412
      %v1544 = vunpack.c.l.b16 %v1413
      %v1545 = vunpack.c.l.b16 %v1414
      %v1546 = vunpack.c.l.b16 %v1415
      %v1547 = vunpack.c.l.b16 %v1416
      %v1548 = vunpack.c.l.b16 %v1417
      %v1549 = vunpack.c.l.b16 %v1418
      %v1550 = vunpack.c.l.b16 %v1419
      %v1551 = vunpack.c.l.b16 %v1420
      %v1552 = vunpack.c.l.b16 %v1421
      %v1553 = vunpack.c.l.b16 %v1422
      %v1554 = vunpack.c.l.b16 %v1423
      %v1555 = vunpack.c.l.b16 %v1424
      %v1556 = vunpack.c.l.b16 %v1425
      %v1557 = vunpack.c.l.b16 %v1426
      %v1558 = vunpack.c.l.b16 %v1427
      %v1559 = vunpack.c.l.b16 %v1428
      %v1560 = vunpack.c.l.b16 %v1429
      %v1561 = vunpack.c.l.b16 %v1430
      %v1562 = vunpack.c.l.b16 %v1431
      %v1563 = vunpack.c.l.b16 %v1432
      %v1564 = vunpack.c.l.b16 %v1433
      %v1565 = vunpack.c.l.b16 %v1434
      %v1566 = vunpack.c.l.b16 %v1435
      %v1567 = vunpack.c.l.b16 %v1436
      %v1568 = vunpack.c.l.b16 %v1437
      %v1569 = vunpack.c.l.b16 %v1438
      %v1570 = vunpack.c.l.b16 %v1439
      %v1571 = vunpack.c.l.b16 %v1440
      %v1572 = vunpack.c.l.b16 %v1441
      %v1573 = vunpack.c.l.b16 %v1442
      %v1574 = vunpack.c.l.b16 %v1443
      %v1575 = vunpack.c.l.b16 %v1444
      %v1576 = vunpack.c.l.b16 %v1445
      %v1577 = vunpack.c.l.b16 %v1446
      %v1578 = vunpack.c.l.b16 %v1447
      %v1579 = vunpack.c.l.b16 %v1448
      %v1580 = vunpack.c.l.b16 %v1449
      %v1581 = vunpack.c.l.b16 %v1450
      %v1582 = vunpack.c.l.b16 %v1451
      %v1583 = vpack.c.b16 %v1520, %v1519
      %v1584 = vpack.c.b16 %v1522, %v1521
      %v1585 = vpack.c.b16 %v1524, %v1523
      %v1586 = vpack.c.b16 %v1526, %v1525
      %v1587 = vpack.c.b16 %v1528, %v1527
      %v1588 = vpack.c.b16 %v1530, %v1529
      %v1589 = vpack.c.b16 %v1532, %v1531
      %v1590 = vpack.c.b16 %v1534, %v1533
      %v1591 = vpack.c.b16 %v1536, %v1535
      %v1592 = vpack.c.b16 %v1538, %v1537
      %v1593 = vpack.c.b16 %v1540, %v1539
      %v1594 = vpack.c.b16 %v1542, %v1541
      %v1595 = vpack.c.b16 %v1544, %v1543
      %v1596 = vpack.c.b16 %v1546, %v1545
      %v1597 = vpack.c.b16 %v1548, %v1547
      %v1598 = vpack.c.b16 %v1550, %v1549
      %v1599 = vpack.c.b16 %v1552, %v1551
      %v1600 = vpack.c.b16 %v1554, %v1553
      %v1601 = vpack.c.b16 %v1556, %v1555
      %v1602 = vpack.c.b16 %v1558, %v1557
      %v1603 = vpack.c.b16 %v1560, %v1559
      %v1604 = vpack.c.b16 %v1562, %v1561
      %v1605 = vpack.c.b16 %v1564, %v1563
      %v1606 = vpack.c.b16 %v1566, %v1565
      %v1607 = vpack.c.b16 %v1568, %v1567
      %v1608 = vpack.c.b16 %v1570, %v1569
      %v1609 = vpack.c.b16 %v1572, %v1571
      %v1610 = vpack.c.b16 %v1574, %v1573
      %v1611 = vpack.c.b16 %v1576, %v1575
      %v1612 = vpack.c.b16 %v1578, %v1577
      %v1613 = vpack.c.b16 %v1580, %v1579
      %v1614 = vpack.c.b16 %v1582, %v1581
      %1647 = vmatpush.bf16.msra.mxu0 %v1590
      %1648 = vmatpush.bf16.msra.mxu0 %v1589
      %1649 = vmatpush.bf16.msra.mxu0 %v1588
      %1650 = vmatpush.bf16.msra.mxu0 %v1587
      %1651 = vmatpush.bf16.msra.mxu0 %v1586
      %1652 = vmatpush.bf16.msra.mxu0 %v1585
      %1653 = vmatpush.bf16.msra.mxu0 %v1584
      %1654 = vmatpush.bf16.msra.mxu0 %v1583
      %1655 = vmatmul.bf16.gmra.mxu0 %v1380
      %v1656 = vpop.f32.mrf.mxu0
      %v1657 = vadd.f32 %v1454, %v1656
      %v1658 = vpop.f32.mrf.mxu0
      %v1659 = vadd.f32 %v1454, %v1658
      %1660 = vmatmul.bf16.gmra.mxu0 %v1384
      %v1661 = vpop.f32.mrf.mxu0
      %v1662 = vadd.f32 %v1454, %v1661
      %v1663 = vpop.f32.mrf.mxu0
      %v1664 = vadd.f32 %v1454, %v1663
      %1665 = vdwg.mxu0
      %1666 = vmatpush.bf16.msra.mxu0 %v1598
      %1667 = vmatpush.bf16.msra.mxu0 %v1597
      %1668 = vmatpush.bf16.msra.mxu0 %v1596
      %1669 = vmatpush.bf16.msra.mxu0 %v1595
      %1670 = vmatpush.bf16.msra.mxu0 %v1594
      %1671 = vmatpush.bf16.msra.mxu0 %v1593
      %1672 = vmatpush.bf16.msra.mxu0 %v1592
      %1673 = vmatpush.bf16.msra.mxu0 %v1591
      %1674 = vmatmul.bf16.gmra.mxu0 %v1381
      %v1675 = vpop.f32.mrf.mxu0
      %v1676 = vadd.f32 %v1657, %v1675
      %v1677 = vpop.f32.mrf.mxu0
      %v1678 = vadd.f32 %v1659, %v1677
      %1679 = vmatmul.bf16.gmra.mxu0 %v1385
      %v1680 = vpop.f32.mrf.mxu0
      %v1681 = vadd.f32 %v1662, %v1680
      %v1682 = vpop.f32.mrf.mxu0
      %v1683 = vadd.f32 %v1664, %v1682
      %1684 = vdwg.mxu0
      %1685 = vmatpush.bf16.msra.mxu0 %v1606
      %1686 = vmatpush.bf16.msra.mxu0 %v1605
      %1687 = vmatpush.bf16.msra.mxu0 %v1604
      %1688 = vmatpush.bf16.msra.mxu0 %v1603
      %1689 = vmatpush.bf16.msra.mxu0 %v1602
      %1690 = vmatpush.bf16.msra.mxu0 %v1601
      %1691 = vmatpush.bf16.msra.mxu0 %v1600
      %1692 = vmatpush.bf16.msra.mxu0 %v1599
      %1693 = vmatmul.bf16.gmra.mxu0 %v1382
      %v1694 = vpop.f32.mrf.mxu0
      %v1695 = vadd.f32 %v1676, %v1694
      %v1696 = vpop.f32.mrf.mxu0
      %v1697 = vadd.f32 %v1678, %v1696
      %1698 = vmatmul.bf16.gmra.mxu0 %v1386
      %v1699 = vpop.f32.mrf.mxu0
      %v1700 = vadd.f32 %v1681, %v1699
      %v1701 = vpop.f32.mrf.mxu0
      %v1702 = vadd.f32 %v1683, %v1701
      %1703 = vdwg.mxu0
      %1704 = vmatpush.bf16.msra.mxu0 %v1614
      %1705 = vmatpush.bf16.msra.mxu0 %v1613
      %1706 = vmatpush.bf16.msra.mxu0 %v1612
      %1707 = vmatpush.bf16.msra.mxu0 %v1611
      %1708 = vmatpush.bf16.msra.mxu0 %v1610
      %1709 = vmatpush.bf16.msra.mxu0 %v1609
      %1710 = vmatpush.bf16.msra.mxu0 %v1608
      %1711 = vmatpush.bf16.msra.mxu0 %v1607
      %1712 = vmatmul.bf16.gmra.mxu0 %v1383
      %v1713 = vpop.f32.mrf.mxu0
      %v1714 = vadd.f32 %v1695, %v1713
      %v1715 = vpop.f32.mrf.mxu0
      %v1716 = vadd.f32 %v1697, %v1715
      %1717 = vmatmul.bf16.gmra.mxu0 %v1387
      %v1718 = vpop.f32.mrf.mxu0
      %v1719 = vadd.f32 %v1700, %v1718
      %v1720 = vpop.f32.mrf.mxu0
      %v1721 = vadd.f32 %v1702, %v1720
      %1722 = vdwg.mxu0
      %v1723 = vadd.f32 %v286, %v1714
      %v1724 = vadd.f32 %v287, %v1716
      %v1725 = vadd.f32 %v288, %v1719
      %v1726 = vadd.f32 %v289, %v1721
      %v1727 = vpack.c.bf16 %v1723, %v1723
      %v1728 = vpack.c.bf16 %v1724, %v1724
      %v1729 = vpack.c.bf16 %v1725, %v1725
      %v1730 = vpack.c.bf16 %v1726, %v1726
      %1731 = vst [vmem:[%s280] sm:$0xf] %v1727
      %1732 = vst [vmem:[%s280 + $0x4] sm:$0xf] %v1728
      %1733 = vst [vmem:[%s280 + $0x8] sm:$0xf] %v1729
      %1734 = vst [vmem:[%s280 + $0xc] sm:$0xf] %v1730
      %s1735 = smul.u32 4, %s18
      %p1736 = scmp.lt.s32.totalorder %s1735, 7
      %s1737 = scalar_select %p1736, %s1735, 7
      %s1738 = smul.addr %s1737, 4
      %s1739 = scalar_lea.vmem %s7, %s1738
      // Predicated region
      $region49: #{discriminator_forward.8} parent=47 // pred_check
        %p1740 = pneg %p188
      $region50: #{discriminator_forward.8} parent=47 // pred_check_branch
        %1742 = sbr.rel (%p1740) target = $region52
      $region51: #{discriminator_forward.8} parent=47 // pred_region
        %s1743 = smul.u32 4, %s18
      $region52: #{discriminator_forward.8} parent=47 // pred_fallthru
        _
    $region48: #{discriminator_forward.8} parent=5 // pred_fallthru
      _
    %p1744 = scmp.le.s32.totalorder 2, %s13
    // Predicated region
    $region53: #{discriminator_forward.8} parent=5 // pred_check
      %p1745 = pneg %p1744
    $region54: #{discriminator_forward.8} parent=5 // pred_check_branch
      %1747 = sbr.rel (%p1745) target = $region56
    $region55: #{discriminator_forward.8} parent=5 // pred_region
      %s1748 = ssub.s32 %s13, 2
      // Predicated region
      $region57: #{discriminator_forward.8} parent=55 // pred_check
        %p1749 = pneg %p194
      $region58: #{discriminator_forward.8} parent=55 // pred_check_branch
        %1751 = sbr.rel (%p1749) target = $region60
      $region59: #{discriminator_forward.8} parent=55 // pred_region
        %s1752 = smul.u32 4, %s19
        %p1753 = scmp.lt.s32.totalorder %s1752, 7
        %s1754 = scalar_select %p1753, %s1752, 7
        %s1755 = smul.addr %s1754, 4
        %s1756 = scalar_lea.vmem %s7, %s1755
      $region60: #{discriminator_forward.8} parent=55 // pred_fallthru
        _
    $region56: #{discriminator_forward.8} parent=5 // pred_fallthru
      _
  $region6: #{discriminator_forward.8} parent=0 // loop_footer
    %s17 = sadd.s32 1, %s13
  $region7: #{discriminator_forward.8} parent=0 // loop_footer_branch
    %12 = sbr.rel target = $region3
  $region8: #{discriminator_forward.8} parent=0 // loop_exit
    _

</llo_original>
